<compile_context>
chip_gen: v6e
topology: v6e:2x2x1
jax: 0.10.0
libtpu: 0.0.40
codegen_flags: <defaults>
</compile_context>

<pallas_src>
import functools
import math

import jax
import jax.numpy as jnp
import numpy as np
from jax.experimental import pallas as pl
from jax.experimental.pallas import tpu as pltpu

_HIGHEST = jax.lax.Precision.HIGHEST


def _scene_mlp_kernel(*refs, num_layers, do_pos_enc, ident_cols, mxu_precision):
    it = iter(refs)
    x_ref = next(it)                                   # (tile_n, in_dim)
    if do_pos_enc:
        m_ref = next(it)                               # (in_dim, enc_dim)  diag(a) @ M, resident
        eb_ref = next(it)                              # (1, enc_dim)  s @ M (+ pi/2 on cos cols)
    w_refs, b_refs = [], []
    for _ in range(num_layers):
        w_refs.append(next(it))                        # (d_in, d_out), resident (f32 or bf16)
        b_refs.append(next(it))                        # (1, d_out),   resident (f32)
    o_ref = next(it)                                   # (tile_n, latent_pad)

    h = x_ref[...]                                     # f32

    if do_pos_enc:
        # One tiny MXU push builds every encoding column's sin argument; the affine
        # normalization and the cos -> sin(+pi/2) phase shift were folded into m/eb in the
        # wrapper, so there is no per-tile normalize, no lane concat, and cos is never called.
        e = jnp.dot(h, m_ref[...], preferred_element_type=jnp.float32,
                    precision=_HIGHEST) + eb_ref[...]
        col = jax.lax.broadcasted_iota(jnp.int32, e.shape, 1)
        h = jnp.where(col < ident_cols, e, jnp.sin(e))   # identity cols pass through; sin only

    for layer in range(num_layers):
        w = w_refs[layer][...]
        b = b_refs[layer][...]
        # astype is a no-op in the f32 path; in the bf16 path only the activation is cast
        # (weights were cast once in the wrapper).
        z = jnp.dot(h.astype(w.dtype), w,
                    preferred_element_type=jnp.float32, precision=mxu_precision)
        h = jnp.maximum(z + b, 0.0)                    # bias + ReLU in f32 (VPU)

    o_ref[...] = h.astype(o_ref.dtype)


def _choose_block_n(n, block_n):
    """Row-tile selection: big tiles (low per-step overhead), multiple of 8 when partial,
    and >= 2 grid steps when possible so both v7x TensorCores get work."""
    block_n = int(min(block_n, n))
    if block_n >= n:
        half = (((n + 1) // 2) + 7) // 8 * 8           # ceil(n/2) rounded up to mult of 8
        return half if half < n else n                 # too small to split -> single full block
    block_n = max(8, (block_n // 8) * 8)               # partial blocks need multiple-of-8 rows
    return block_n if block_n < n else n


def scene_mlp_forward(x, torch_weights, torch_biases, *, do_pos_enc=False,
                      pos_enc_freq=10, block_n=1024, use_bf16=False,
                      mxu_precision=None):
    """Scene_MLP forward.

    x:             (n, input_dim) float32 coordinates.
    torch_weights: list of torch-layout Linear weights, each (out_dim, in_dim).
    torch_biases:  list of biases, each (out_dim,).
    mxu_precision: precision for the per-layer matmuls (None = DEFAULT, single MXU pass).
    """
    x = jnp.asarray(x, jnp.float32)
    n, in_dim = x.shape
    num_layers = len(torch_weights)
    assert num_layers == len(torch_biases) and num_layers >= 1

    # Hoisted relayout (done once per call; precompute outside for a hot loop).
    weights = [jnp.asarray(w, jnp.float32).T for w in torch_weights]          # (in, out)
    biases = [jnp.asarray(b, jnp.float32).reshape(1, -1) for b in torch_biases]

    block_n = _choose_block_n(n, block_n)
    grid = (pl.cdiv(n, block_n),)

    inputs = [x]
    in_specs = [pl.BlockSpec((block_n, in_dim), lambda i: (i, 0))]

    ident_cols = in_dim
    if do_pos_enc:
        l = pos_enc_freq
        enc_dim = in_dim * (1 + 2 * l)
        xmin = jnp.min(x, axis=0)
        xmax = jnp.max(x, axis=0)
        rng = jnp.maximum(xmax - xmin, 1e-12)          # guard constant coordinate columns
        a = 2.0 / rng                                  # (in_dim,)
        s = -2.0 * xmin / rng - 1.0                    # (in_dim,)
        # Base frequency matrix M. Column layout matches torch.cat order:
        # [xn | sin(2^p*pi*xn) p=0..l-1 | cos(...)], coordinate-major within each block.
        m = np.zeros((in_dim, enc_dim), np.float32)
        cos_phase = np.zeros((enc_dim,), np.float32)
        for d in range(in_dim):
            m[d, d] = 1.0
            for p in range(l):
                f = float(2.0 ** p) * math.pi
                m[d, in_dim + p * in_dim + d] = f
                m[d, in_dim * (1 + l) + p * in_dim + d] = f
        cos_phase[in_dim * (1 + l):] = math.pi / 2.0   # cos(t) = sin(t + pi/2)
        m = jnp.asarray(m)
        m_folded = a[:, None] * m                      # diag(a) @ M  (fold the normalize)
        eb = (s @ m + jnp.asarray(cos_phase)).reshape(1, enc_dim)
        inputs += [m_folded, eb]
        in_specs += [
            pl.BlockSpec((in_dim, enc_dim), lambda i: (0, 0)),   # resident
            pl.BlockSpec((1, enc_dim), lambda i: (0, 0)),        # resident
        ]
        expected_in = enc_dim
    else:
        expected_in = in_dim
    assert weights[0].shape[0] == expected_in, "layer-0 weight does not match input dim"

    # Lane-dense output: zero-pad the final projection to a multiple of 128 columns so the
    # output store is an unmasked vst; slice the padding back off after the call.
    latent = weights[-1].shape[1]
    latent_pad = ((latent + 127) // 128) * 128
    if latent_pad != latent:
        w_last = jnp.zeros((weights[-1].shape[0], latent_pad), jnp.float32)
        weights[-1] = w_last.at[:, :latent].set(weights[-1])
        b_last = jnp.zeros((1, latent_pad), jnp.float32)
        biases[-1] = b_last.at[:, :latent].set(biases[-1])

    # bf16 MXU operands: cast resident weights ONCE here (halves weight DMA/VMEM, removes the
    # per-step VPU cast). Elementwise math (pos-enc, bias, ReLU) stays f32 -> safe on v5e too.
    mxu_weights = [w.astype(jnp.bfloat16) for w in weights] if use_bf16 else weights

    for w, b in zip(mxu_weights, biases):
        d_in, d_out = w.shape
        inputs += [w, b]
        in_specs += [
            pl.BlockSpec((d_in, d_out), lambda i: (0, 0)),   # resident weight
            pl.BlockSpec((1, d_out), lambda i: (0, 0)),      # resident bias
        ]

    kernel = functools.partial(
        _scene_mlp_kernel,
        num_layers=num_layers, do_pos_enc=do_pos_enc,
        ident_cols=ident_cols, mxu_precision=mxu_precision)

    out = pl.pallas_call(
        kernel,
        grid_spec=pltpu.PrefetchScalarGridSpec(
            num_scalar_prefetch=0,
            grid=grid,
            in_specs=in_specs,
            out_specs=pl.BlockSpec((block_n, latent_pad), lambda i: (i, 0)),
        ),
        out_shape=jax.ShapeDtypeStruct((n, latent_pad), jnp.float32),
        compiler_params=pltpu.CompilerParams(dimension_semantics=("parallel",)),
    )(*inputs)

    return out[:, :latent] if latent_pad != latent else out


def scene_mlp_reference(x, torch_weights, torch_biases, *, do_pos_enc, pos_enc_freq=10):
    """Plain-JAX reference mirroring the PyTorch forward exactly."""
    x = jnp.asarray(x, jnp.float32)
    if do_pos_enc:
        xmin = jnp.min(x, axis=0)
        xmax = jnp.max(x, axis=0)
        xn = 2.0 * (x - xmin) / (xmax - xmin) - 1.0
        sins = [jnp.sin((2.0 ** p) * math.pi * xn) for p in range(pos_enc_freq)]
        coss = [jnp.cos((2.0 ** p) * math.pi * xn) for p in range(pos_enc_freq)]
        x = jnp.concatenate([xn] + sins + coss, axis=1)
    for w, b in zip(torch_weights, torch_biases):
        x = jnp.maximum(jnp.dot(x, jnp.asarray(w, jnp.float32).T, precision=_HIGHEST)
                        + jnp.asarray(b, jnp.float32), 0.0)
    return x


def _make_torch_linear_params(dims, key):
    """torch nn.Linear default init: U(-1/sqrt(fan_in), 1/sqrt(fan_in)), weight (out, in)."""
    ws, bs = [], []
    keys = jax.random.split(key, 2 * (len(dims) - 1))
    for i in range(len(dims) - 1):
        bound = 1.0 / math.sqrt(dims[i])
        ws.append(jax.random.uniform(keys[2 * i], (dims[i + 1], dims[i]),
                                     jnp.float32, -bound, bound))
        bs.append(jax.random.uniform(keys[2 * i + 1], (dims[i + 1],),
                                     jnp.float32, -bound, bound))
    return ws, bs


if __name__ == "__main__":
    key = jax.random.PRNGKey(0)
    k_x, k_w1, k_w2 = jax.random.split(key, 3)

    # Small shapes consistent with the module: n 3-D coordinates -> latent_size features.
    n, input_dim = 256, 3
    hidden_dims = [64, 64]
    latent_size = 32
    pos_enc_freq = 10
    enc_dim = input_dim * (2 * pos_enc_freq + 1)       # 63

    x = jax.random.normal(k_x, (n, input_dim), jnp.float32)

    # --- config A: do_pos_enc=True, default MXU precision (fast path) ---
    dims_pe = [enc_dim] + hidden_dims + [latent_size]
    ws_pe, bs_pe = _make_torch_linear_params(dims_pe, k_w1)

    ref_pe = scene_mlp_reference(x, ws_pe, bs_pe, do_pos_enc=True, pos_enc_freq=pos_enc_freq)

    out_pe = scene_mlp_forward(x, ws_pe, bs_pe, do_pos_enc=True, pos_enc_freq=pos_enc_freq)
    out_pe = jax.block_until_ready(out_pe)
    assert out_pe.shape == (n, latent_size)
    assert jnp.allclose(out_pe, ref_pe, atol=2e-2, rtol=2e-2), "pos-enc default-precision mismatch"

    # --- config A': same, but HIGHEST precision on the layer matmuls (tight check) ---
    out_hi = scene_mlp_forward(x, ws_pe, bs_pe, do_pos_enc=True, pos_enc_freq=pos_enc_freq,
                               mxu_precision=_HIGHEST)
    out_hi = jax.block_until_ready(out_hi)
    assert jnp.allclose(out_hi, ref_pe, atol=2e-3, rtol=2e-3), "pos-enc HIGHEST mismatch"

    # --- config B: do_pos_enc=False (the module default), default precision ---
    dims_np = [input_dim] + hidden_dims + [latent_size]
    ws_np, bs_np = _make_torch_linear_params(dims_np, k_w2)

    ref_np = scene_mlp_reference(x, ws_np, bs_np, do_pos_enc=False)
    out_np = scene_mlp_forward(x, ws_np, bs_np, do_pos_enc=False)
    out_np = jax.block_until_ready(out_np)
    assert jnp.allclose(out_np, ref_np, atol=2e-2, rtol=2e-2), "plain-MLP path mismatch"

    # --- config C: bf16 MXU operands (weights cast once in the wrapper), loose tolerance ---
    out_bf16 = scene_mlp_forward(x, ws_pe, bs_pe, do_pos_enc=True,
                                 pos_enc_freq=pos_enc_freq, use_bf16=True)
    out_bf16 = jax.block_until_ready(out_bf16)
    assert jnp.allclose(out_bf16, ref_pe, atol=1e-1, rtol=1e-1), "bf16 path mismatch"

    print("KERNEL_OK")
</pallas_src>

<mosaic_0001>
module attributes {stable_mosaic.version = 11 : i64} {
  func.func @_scene_mlp_kernel(%arg0: i32, %arg1: memref<128x3xf32, #tpu.memory_space<vmem>>, %arg2: memref<3x63xf32, #tpu.memory_space<vmem>>, %arg3: memref<1x63xf32, #tpu.memory_space<vmem>>, %arg4: memref<63x64xf32, #tpu.memory_space<vmem>>, %arg5: memref<1x64xf32, #tpu.memory_space<vmem>>, %arg6: memref<64x64xf32, #tpu.memory_space<vmem>>, %arg7: memref<1x64xf32, #tpu.memory_space<vmem>>, %arg8: memref<64x128xf32, #tpu.memory_space<vmem>>, %arg9: memref<1x128xf32, #tpu.memory_space<vmem>>, %arg10: memref<128x128xf32, #tpu.memory_space<vmem>>) attributes {dimension_semantics = [#tpu.dimension_semantics<parallel>], iteration_bounds = array<i64: 2>, scalar_prefetch = 0 : i64, scratch_operands = 0 : i64, tpu.core_type = #tpu.core_type<tc>, window_params = [{transform_indices = @transform_0, window_bounds = array<i64: 128, 3>}, {pipeline_mode = #tpu.pipeline_mode<synchronous>, transform_indices = @transform_1, window_bounds = array<i64: 3, 63>}, {pipeline_mode = #tpu.pipeline_mode<synchronous>, transform_indices = @transform_2, window_bounds = array<i64: 1, 63>}, {pipeline_mode = #tpu.pipeline_mode<synchronous>, transform_indices = @transform_3, window_bounds = array<i64: 63, 64>}, {pipeline_mode = #tpu.pipeline_mode<synchronous>, transform_indices = @transform_4, window_bounds = array<i64: 1, 64>}, {pipeline_mode = #tpu.pipeline_mode<synchronous>, transform_indices = @transform_5, window_bounds = array<i64: 64, 64>}, {pipeline_mode = #tpu.pipeline_mode<synchronous>, transform_indices = @transform_6, window_bounds = array<i64: 1, 64>}, {pipeline_mode = #tpu.pipeline_mode<synchronous>, transform_indices = @transform_7, window_bounds = array<i64: 64, 128>}, {pipeline_mode = #tpu.pipeline_mode<synchronous>, transform_indices = @transform_8, window_bounds = array<i64: 1, 128>}, {transform_indices = @transform_9, window_bounds = array<i64: 128, 128>}]} {
    %c0 = arith.constant 0 : index
    %c0_0 = arith.constant 0 : index
    %0 = vector.load %arg1[%c0, %c0_0] : memref<128x3xf32, #tpu.memory_space<vmem>>, vector<128x3xf32>
    %c0_1 = arith.constant 0 : index
    %c0_2 = arith.constant 0 : index
    %1 = vector.load %arg2[%c0_1, %c0_2] : memref<3x63xf32, #tpu.memory_space<vmem>>, vector<3x63xf32>
    %cst = arith.constant dense<0.000000e+00> : vector<128x63xf32>
    %2 = tpu.matmul %0, %1, %cst {dimension_numbers = #tpu.dot_dimension_numbers<[1], [0], [0], [1], [0, 0, 1, 1], [], []>, precision = #tpu.contract_precision<fp32>} : vector<128x3xf32>, vector<3x63xf32>, vector<128x63xf32> -> vector<128x63xf32>
    %c0_3 = arith.constant 0 : index
    %c0_4 = arith.constant 0 : index
    %3 = vector.load %arg3[%c0_3, %c0_4] : memref<1x63xf32, #tpu.memory_space<vmem>>, vector<1x63xf32>
    %4 = vector.broadcast %3 : vector<1x63xf32> to vector<128x63xf32>
    %5 = arith.addf %2, %4 : vector<128x63xf32>
    %6 = tpu.iota {dimensions = array<i32: 1>} : vector<128x63xi32>
    %c3_i32 = arith.constant 3 : i32
    %7 = vector.broadcast %c3_i32 : i32 to vector<128x63xi32>
    %8 = arith.cmpi slt, %6, %7 : vector<128x63xi32>
    %9 = math.sin %5 : vector<128x63xf32>
    %10 = arith.select %8, %5, %9 : vector<128x63xi1>, vector<128x63xf32>
    %c0_5 = arith.constant 0 : index
    %c0_6 = arith.constant 0 : index
    %11 = vector.load %arg4[%c0_5, %c0_6] : memref<63x64xf32, #tpu.memory_space<vmem>>, vector<63x64xf32>
    %c0_7 = arith.constant 0 : index
    %c0_8 = arith.constant 0 : index
    %12 = vector.load %arg5[%c0_7, %c0_8] : memref<1x64xf32, #tpu.memory_space<vmem>>, vector<1x64xf32>
    %cst_9 = arith.constant dense<0.000000e+00> : vector<128x64xf32>
    %13 = tpu.matmul %10, %11, %cst_9 {dimension_numbers = #tpu.dot_dimension_numbers<[1], [0], [0], [1], [0, 0, 1, 1], [], []>} : vector<128x63xf32>, vector<63x64xf32>, vector<128x64xf32> -> vector<128x64xf32>
    %14 = vector.broadcast %12 : vector<1x64xf32> to vector<128x64xf32>
    %15 = arith.addf %13, %14 : vector<128x64xf32>
    %cst_10 = arith.constant 0.000000e+00 : f32
    %16 = vector.broadcast %cst_10 : f32 to vector<128x64xf32>
    %17 = arith.maximumf %15, %16 : vector<128x64xf32>
    %c0_11 = arith.constant 0 : index
    %c0_12 = arith.constant 0 : index
    %18 = vector.load %arg6[%c0_11, %c0_12] : memref<64x64xf32, #tpu.memory_space<vmem>>, vector<64x64xf32>
    %c0_13 = arith.constant 0 : index
    %c0_14 = arith.constant 0 : index
    %19 = vector.load %arg7[%c0_13, %c0_14] : memref<1x64xf32, #tpu.memory_space<vmem>>, vector<1x64xf32>
    %cst_15 = arith.constant dense<0.000000e+00> : vector<128x64xf32>
    %20 = tpu.matmul %17, %18, %cst_15 {dimension_numbers = #tpu.dot_dimension_numbers<[1], [0], [0], [1], [0, 0, 1, 1], [], []>} : vector<128x64xf32>, vector<64x64xf32>, vector<128x64xf32> -> vector<128x64xf32>
    %21 = vector.broadcast %19 : vector<1x64xf32> to vector<128x64xf32>
    %22 = arith.addf %20, %21 : vector<128x64xf32>
    %cst_16 = arith.constant 0.000000e+00 : f32
    %23 = vector.broadcast %cst_16 : f32 to vector<128x64xf32>
    %24 = arith.maximumf %22, %23 : vector<128x64xf32>
    %c0_17 = arith.constant 0 : index
    %c0_18 = arith.constant 0 : index
    %25 = vector.load %arg8[%c0_17, %c0_18] : memref<64x128xf32, #tpu.memory_space<vmem>>, vector<64x128xf32>
    %c0_19 = arith.constant 0 : index
    %c0_20 = arith.constant 0 : index
    %26 = vector.load %arg9[%c0_19, %c0_20] : memref<1x128xf32, #tpu.memory_space<vmem>>, vector<1x128xf32>
    %cst_21 = arith.constant dense<0.000000e+00> : vector<128x128xf32>
    %27 = tpu.matmul %24, %25, %cst_21 {dimension_numbers = #tpu.dot_dimension_numbers<[1], [0], [0], [1], [0, 0, 1, 1], [], []>} : vector<128x64xf32>, vector<64x128xf32>, vector<128x128xf32> -> vector<128x128xf32>
    %28 = vector.broadcast %26 : vector<1x128xf32> to vector<128x128xf32>
    %29 = arith.addf %27, %28 : vector<128x128xf32>
    %cst_22 = arith.constant 0.000000e+00 : f32
    %30 = vector.broadcast %cst_22 : f32 to vector<128x128xf32>
    %31 = arith.maximumf %29, %30 : vector<128x128xf32>
    %c0_23 = arith.constant 0 : index
    %c0_24 = arith.constant 0 : index
    %32 = vector.load %arg10[%c0_23, %c0_24] : memref<128x128xf32, #tpu.memory_space<vmem>>, vector<128x128xf32>
    tpu.vector_store %arg10[%c0_23, %c0_24], %31 {strides = array<i32>} : memref<128x128xf32, #tpu.memory_space<vmem>>, vector<128x128xf32>,
    return
  }
  func.func @transform_0(%arg0: i32) -> (i32, i32) {
    %c0_i32 = arith.constant 0 : i32
    %c0_i32_0 = arith.constant 0 : i32
    return %arg0, %c0_i32 : i32, i32
  }
  func.func @transform_1(%arg0: i32) -> (i32, i32) {
    %c0_i32 = arith.constant 0 : i32
    %c0_i32_0 = arith.constant 0 : i32
    %c0_i32_1 = arith.constant 0 : i32
    return %c0_i32, %c0_i32_0 : i32, i32
  }
  func.func @transform_2(%arg0: i32) -> (i32, i32) {
    %c0_i32 = arith.constant 0 : i32
    %c0_i32_0 = arith.constant 0 : i32
    %c0_i32_1 = arith.constant 0 : i32
    return %c0_i32, %c0_i32_0 : i32, i32
  }
  func.func @transform_3(%arg0: i32) -> (i32, i32) {
    %c0_i32 = arith.constant 0 : i32
    %c0_i32_0 = arith.constant 0 : i32
    %c0_i32_1 = arith.constant 0 : i32
    return %c0_i32, %c0_i32_0 : i32, i32
  }
  func.func @transform_4(%arg0: i32) -> (i32, i32) {
    %c0_i32 = arith.constant 0 : i32
    %c0_i32_0 = arith.constant 0 : i32
    %c0_i32_1 = arith.constant 0 : i32
    return %c0_i32, %c0_i32_0 : i32, i32
  }
  func.func @transform_5(%arg0: i32) -> (i32, i32) {
    %c0_i32 = arith.constant 0 : i32
    %c0_i32_0 = arith.constant 0 : i32
    %c0_i32_1 = arith.constant 0 : i32
    return %c0_i32, %c0_i32_0 : i32, i32
  }
  func.func @transform_6(%arg0: i32) -> (i32, i32) {
    %c0_i32 = arith.constant 0 : i32
    %c0_i32_0 = arith.constant 0 : i32
    %c0_i32_1 = arith.constant 0 : i32
    return %c0_i32, %c0_i32_0 : i32, i32
  }
  func.func @transform_7(%arg0: i32) -> (i32, i32) {
    %c0_i32 = arith.constant 0 : i32
    %c0_i32_0 = arith.constant 0 : i32
    %c0_i32_1 = arith.constant 0 : i32
    return %c0_i32, %c0_i32_0 : i32, i32
  }
  func.func @transform_8(%arg0: i32) -> (i32, i32) {
    %c0_i32 = arith.constant 0 : i32
    %c0_i32_0 = arith.constant 0 : i32
    %c0_i32_1 = arith.constant 0 : i32
    return %c0_i32, %c0_i32_0 : i32, i32
  }
  func.func @transform_9(%arg0: i32) -> (i32, i32) {
    %c0_i32 = arith.constant 0 : i32
    %c0_i32_0 = arith.constant 0 : i32
    return %arg0, %c0_i32 : i32, i32
  }
}

</mosaic_0001>

<llo_original>
// kernel: tpu_custom_call.1
$region0: #{tpu_custom_call.1}
  #allocation0 [shape = 'u32[]', space=smem, size = 0x4, offset = 0x4, fixed_abs, tag = 'smem constant byte address 0x4 - core index']
  #allocation1 [shape = 'u32[144,128]{1,0:T(1,128)}', space=vmem, size = 0x12000, scoped, tag = 'internal scratch']
  %s0 = inlined_call_operand.vmem [shape: f32[256,3], index: 0, kind: input, shape index: {}]
  %s1 = inlined_call_operand.vmem [shape: f32[3,63], index: 1, kind: input, shape index: {}]
  %s2 = inlined_call_operand.vmem [shape: f32[1,63], index: 2, kind: input, shape index: {}]
  %s3 = inlined_call_operand.vmem [shape: f32[63,64], index: 3, kind: input, shape index: {}]
  %s4 = inlined_call_operand.vmem [shape: f32[1,64], index: 4, kind: input, shape index: {}]
  %s5 = inlined_call_operand.vmem [shape: f32[64,64], index: 5, kind: input, shape index: {}]
  %s6 = inlined_call_operand.vmem [shape: f32[1,64], index: 6, kind: input, shape index: {}]
  %s7 = inlined_call_operand.vmem [shape: f32[64,128], index: 7, kind: input, shape index: {}]
  %s8 = inlined_call_operand.vmem [shape: f32[1,128], index: 8, kind: input, shape index: {}]
  %s9 = inlined_call_operand.hbm [shape: f32[256,128], index: 9, kind: output, shape index: {}]
  %s10 = sld [smem:[#allocation0]]
  $region69: #{tpu_custom_call.1} parent=0
    _
  %s12 = ssub.s32 1, %s10
  %s13 = scalar_select 0, %s12, %s10
  $region1: #{tpu_custom_call.1} parent=0
    #allocation2 [shape = 'u8[131072]{0}', space=vmem, size = 0x20000, scoped, tag = 'output window, operand 0']
    #allocation3 [shape = 's32[2]{0}', space=sflag, size = 0x8, scoped, tag = 'scoped memory for tpu_custom_call.1']
    %14 = vsyncpa [#allocation3], 0
    %s15 = scalar_lea.sflag [#allocation3], 1
    %16 = vsyncpa %s15, 0
    loop: start=0, step=1, limit=4
    $region2: #{tpu_custom_call.1} parent=1 // loop_pre_header
      _
    $region3: #{tpu_custom_call.1} parent=1 // loop_header
      %s18 = sphi 0, %s22
      %p19 = scmp.ge.s32.totalorder %s18, 4
      %s28 = sphi 0, %s30
      %s31 = sphi 0, %s28
      %s32 = sphi 0, %s31
      %s48 = sphi 0, %s32
      %s52 = sphi 0, %s52
      %s54 = sphi 0, %s52
      %s55 = sphi 0, %s54
      %s69 = sphi 0, %s55
      %s73 = sphi 0, %s73
      %s75 = sphi 0, %s73
      %s76 = sphi 0, %s75
      %s90 = sphi 0, %s76
      %s94 = sphi 0, %s94
      %s96 = sphi 0, %s94
      %s97 = sphi 0, %s96
      %s111 = sphi 0, %s97
      %s115 = sphi 0, %s115
      %s117 = sphi 0, %s115
      %s118 = sphi 0, %s117
      %s132 = sphi 0, %s118
      %s136 = sphi 0, %s136
      %s138 = sphi 0, %s136
      %s139 = sphi 0, %s138
      %s153 = sphi 0, %s139
      %s157 = sphi 0, %s157
      %s159 = sphi 0, %s157
      %s160 = sphi 0, %s159
      %s174 = sphi 0, %s160
      %s178 = sphi 0, %s178
      %s180 = sphi 0, %s178
      %s181 = sphi 0, %s180
      %s195 = sphi 0, %s181
      %s199 = sphi 0, %s199
      %s201 = sphi 0, %s199
      %s202 = sphi 0, %s201
      %s216 = sphi 0, %s202
      %s222 = sphi 0, %s224
      %s225 = sphi 0, %s222
      %s226 = sphi 0, %s225
      %s242 = sphi 0, %s226
    $region4: #{tpu_custom_call.1} parent=1 // loop_header_branch
      %21 = sbr.rel (%p19) target = $region8
    $region5: #{tpu_custom_call.1} parent=1 // loop_body
      %s23 = ssub.s32 %s18, 1
      %s24 = ssub.s32 %s18, 2
      %s25 = sadd.s32 %s18, 1
      %s26 = ssub.s32 %s18, %s25
      %p27 = scmp.eq.s32.totalorder %s26, 0
      %s29 = sadd.s32 %s28, 1
      %s30 = scalar_select %p27, %s28, %s29
      %p33 = pneg %p27
      %p34 = scmp.eq.s32.totalorder %s18, 1
      %p35 = por %p33, %p34
      %p36 = scmp.ne.s32.totalorder %s28, %s31
      %p37 = scmp.eq.s32.totalorder %s18, 0
      %p38 = por %p36, %p37
      %p39 = scmp.ne.s32.totalorder %s28, %s31
      %p40 = scmp.eq.s32.totalorder %s23, 1
      %p41 = por %p39, %p40
      %p42 = scmp.ne.s32.totalorder %s31, %s32
      %p43 = scmp.eq.s32.totalorder %s23, 0
      %p44 = por %p42, %p43
      %p45 = scmp.ne.s32.totalorder %s31, %s32
      %p46 = scmp.eq.s32.totalorder %s24, 1
      %p47 = por %p45, %p46
      %p49 = scmp.ne.s32.totalorder %s32, %s48
      %p50 = scmp.eq.s32.totalorder %s24, 0
      %p51 = por %p49, %p50
      %s53 = sadd.s32 %s52, 1
      %p56 = scmp.eq.s32.totalorder %s18, 1
      %p57 = scmp.ne.s32.totalorder %s52, %s54
      %p58 = scmp.eq.s32.totalorder %s18, 0
      %p59 = por %p57, %p58
      %p60 = scmp.ne.s32.totalorder %s52, %s54
      %p61 = scmp.eq.s32.totalorder %s23, 1
      %p62 = por %p60, %p61
      %p63 = scmp.ne.s32.totalorder %s54, %s55
      %p64 = scmp.eq.s32.totalorder %s23, 0
      %p65 = por %p63, %p64
      %p66 = scmp.ne.s32.totalorder %s54, %s55
      %p67 = scmp.eq.s32.totalorder %s24, 1
      %p68 = por %p66, %p67
      %p70 = scmp.ne.s32.totalorder %s55, %s69
      %p71 = scmp.eq.s32.totalorder %s24, 0
      %p72 = por %p70, %p71
      %s74 = sadd.s32 %s73, 1
      %p77 = scmp.eq.s32.totalorder %s18, 1
      %p78 = scmp.ne.s32.totalorder %s73, %s75
      %p79 = scmp.eq.s32.totalorder %s18, 0
      %p80 = por %p78, %p79
      %p81 = scmp.ne.s32.totalorder %s73, %s75
      %p82 = scmp.eq.s32.totalorder %s23, 1
      %p83 = por %p81, %p82
      %p84 = scmp.ne.s32.totalorder %s75, %s76
      %p85 = scmp.eq.s32.totalorder %s23, 0
      %p86 = por %p84, %p85
      %p87 = scmp.ne.s32.totalorder %s75, %s76
      %p88 = scmp.eq.s32.totalorder %s24, 1
      %p89 = por %p87, %p88
      %p91 = scmp.ne.s32.totalorder %s76, %s90
      %p92 = scmp.eq.s32.totalorder %s24, 0
      %p93 = por %p91, %p92
      %s95 = sadd.s32 %s94, 1
      %p98 = scmp.eq.s32.totalorder %s18, 1
      %p99 = scmp.ne.s32.totalorder %s94, %s96
      %p100 = scmp.eq.s32.totalorder %s18, 0
      %p101 = por %p99, %p100
      %p102 = scmp.ne.s32.totalorder %s94, %s96
      %p103 = scmp.eq.s32.totalorder %s23, 1
      %p104 = por %p102, %p103
      %p105 = scmp.ne.s32.totalorder %s96, %s97
      %p106 = scmp.eq.s32.totalorder %s23, 0
      %p107 = por %p105, %p106
      %p108 = scmp.ne.s32.totalorder %s96, %s97
      %p109 = scmp.eq.s32.totalorder %s24, 1
      %p110 = por %p108, %p109
      %p112 = scmp.ne.s32.totalorder %s97, %s111
      %p113 = scmp.eq.s32.totalorder %s24, 0
      %p114 = por %p112, %p113
      %s116 = sadd.s32 %s115, 1
      %p119 = scmp.eq.s32.totalorder %s18, 1
      %p120 = scmp.ne.s32.totalorder %s115, %s117
      %p121 = scmp.eq.s32.totalorder %s18, 0
      %p122 = por %p120, %p121
      %p123 = scmp.ne.s32.totalorder %s115, %s117
      %p124 = scmp.eq.s32.totalorder %s23, 1
      %p125 = por %p123, %p124
      %p126 = scmp.ne.s32.totalorder %s117, %s118
      %p127 = scmp.eq.s32.totalorder %s23, 0
      %p128 = por %p126, %p127
      %p129 = scmp.ne.s32.totalorder %s117, %s118
      %p130 = scmp.eq.s32.totalorder %s24, 1
      %p131 = por %p129, %p130
      %p133 = scmp.ne.s32.totalorder %s118, %s132
      %p134 = scmp.eq.s32.totalorder %s24, 0
      %p135 = por %p133, %p134
      %s137 = sadd.s32 %s136, 1
      %p140 = scmp.eq.s32.totalorder %s18, 1
      %p141 = scmp.ne.s32.totalorder %s136, %s138
      %p142 = scmp.eq.s32.totalorder %s18, 0
      %p143 = por %p141, %p142
      %p144 = scmp.ne.s32.totalorder %s136, %s138
      %p145 = scmp.eq.s32.totalorder %s23, 1
      %p146 = por %p144, %p145
      %p147 = scmp.ne.s32.totalorder %s138, %s139
      %p148 = scmp.eq.s32.totalorder %s23, 0
      %p149 = por %p147, %p148
      %p150 = scmp.ne.s32.totalorder %s138, %s139
      %p151 = scmp.eq.s32.totalorder %s24, 1
      %p152 = por %p150, %p151
      %p154 = scmp.ne.s32.totalorder %s139, %s153
      %p155 = scmp.eq.s32.totalorder %s24, 0
      %p156 = por %p154, %p155
      %s158 = sadd.s32 %s157, 1
      %p161 = scmp.eq.s32.totalorder %s18, 1
      %p162 = scmp.ne.s32.totalorder %s157, %s159
      %p163 = scmp.eq.s32.totalorder %s18, 0
      %p164 = por %p162, %p163
      %p165 = scmp.ne.s32.totalorder %s157, %s159
      %p166 = scmp.eq.s32.totalorder %s23, 1
      %p167 = por %p165, %p166
      %p168 = scmp.ne.s32.totalorder %s159, %s160
      %p169 = scmp.eq.s32.totalorder %s23, 0
      %p170 = por %p168, %p169
      %p171 = scmp.ne.s32.totalorder %s159, %s160
      %p172 = scmp.eq.s32.totalorder %s24, 1
      %p173 = por %p171, %p172
      %p175 = scmp.ne.s32.totalorder %s160, %s174
      %p176 = scmp.eq.s32.totalorder %s24, 0
      %p177 = por %p175, %p176
      %s179 = sadd.s32 %s178, 1
      %p182 = scmp.eq.s32.totalorder %s18, 1
      %p183 = scmp.ne.s32.totalorder %s178, %s180
      %p184 = scmp.eq.s32.totalorder %s18, 0
      %p185 = por %p183, %p184
      %p186 = scmp.ne.s32.totalorder %s178, %s180
      %p187 = scmp.eq.s32.totalorder %s23, 1
      %p188 = por %p186, %p187
      %p189 = scmp.ne.s32.totalorder %s180, %s181
      %p190 = scmp.eq.s32.totalorder %s23, 0
      %p191 = por %p189, %p190
      %p192 = scmp.ne.s32.totalorder %s180, %s181
      %p193 = scmp.eq.s32.totalorder %s24, 1
      %p194 = por %p192, %p193
      %p196 = scmp.ne.s32.totalorder %s181, %s195
      %p197 = scmp.eq.s32.totalorder %s24, 0
      %p198 = por %p196, %p197
      %s200 = sadd.s32 %s199, 1
      %p203 = scmp.eq.s32.totalorder %s18, 1
      %p204 = scmp.ne.s32.totalorder %s199, %s201
      %p205 = scmp.eq.s32.totalorder %s18, 0
      %p206 = por %p204, %p205
      %p207 = scmp.ne.s32.totalorder %s199, %s201
      %p208 = scmp.eq.s32.totalorder %s23, 1
      %p209 = por %p207, %p208
      %p210 = scmp.ne.s32.totalorder %s201, %s202
      %p211 = scmp.eq.s32.totalorder %s23, 0
      %p212 = por %p210, %p211
      %p213 = scmp.ne.s32.totalorder %s201, %s202
      %p214 = scmp.eq.s32.totalorder %s24, 1
      %p215 = por %p213, %p214
      %p217 = scmp.ne.s32.totalorder %s202, %s216
      %p218 = scmp.eq.s32.totalorder %s24, 0
      %p219 = por %p217, %p218
      %s220 = ssub.s32 %s18, %s25
      %p221 = scmp.eq.s32.totalorder %s220, 0
      %s223 = sadd.s32 %s222, 1
      %s224 = scalar_select %p221, %s222, %s223
      %p227 = pneg %p221
      %p228 = scmp.eq.s32.totalorder %s18, 1
      %p229 = por %p227, %p228
      %p230 = scmp.ne.s32.totalorder %s222, %s225
      %p231 = scmp.eq.s32.totalorder %s18, 0
      %p232 = por %p230, %p231
      %p233 = scmp.ne.s32.totalorder %s222, %s225
      %p234 = scmp.eq.s32.totalorder %s23, 1
      %p235 = por %p233, %p234
      %p236 = scmp.ne.s32.totalorder %s225, %s226
      %p237 = scmp.eq.s32.totalorder %s23, 0
      %p238 = por %p236, %p237
      %p239 = scmp.ne.s32.totalorder %s225, %s226
      %p240 = scmp.eq.s32.totalorder %s24, 1
      %p241 = por %p239, %p240
      %p243 = scmp.ne.s32.totalorder %s226, %s242
      %p244 = scmp.eq.s32.totalorder %s24, 0
      %p245 = por %p243, %p244
      %p246 = scmp.le.s32.totalorder 1, %s18
      %p247 = scmp.lt.s32.totalorder %s18, 3
      %p248 = pnand %p246, %p247
      %p249 = pneg %p248
      // Predicated region
      $region9: #{tpu_custom_call.1} parent=5 // pred_check
        _
      $region10: #{tpu_custom_call.1} parent=5 // pred_check_branch
        %251 = sbr.rel (%p248) target = $region12
      $region11: #{tpu_custom_call.1} parent=5 // pred_region
        %s252 = ssub.s32 %s18, 1
        // Predicated region
        $region13: #{tpu_custom_call.1} parent=11 // pred_check
          %p253 = pneg %p65
        $region14: #{tpu_custom_call.1} parent=11 // pred_check_branch
          %255 = sbr.rel (%p253) target = $region16
        $region15: #{tpu_custom_call.1} parent=11 // pred_region
          _
        $region16: #{tpu_custom_call.1} parent=11 // pred_fallthru
          _
        // Predicated region
        $region17: #{tpu_custom_call.1} parent=11 // pred_check
          %p256 = pneg %p86
        $region18: #{tpu_custom_call.1} parent=11 // pred_check_branch
          %258 = sbr.rel (%p256) target = $region20
        $region19: #{tpu_custom_call.1} parent=11 // pred_region
          _
        $region20: #{tpu_custom_call.1} parent=11 // pred_fallthru
          _
        // Predicated region
        $region21: #{tpu_custom_call.1} parent=11 // pred_check
          %p259 = pneg %p107
        $region22: #{tpu_custom_call.1} parent=11 // pred_check_branch
          %261 = sbr.rel (%p259) target = $region24
        $region23: #{tpu_custom_call.1} parent=11 // pred_region
          _
        $region24: #{tpu_custom_call.1} parent=11 // pred_fallthru
          _
        // Predicated region
        $region25: #{tpu_custom_call.1} parent=11 // pred_check
          %p262 = pneg %p128
        $region26: #{tpu_custom_call.1} parent=11 // pred_check_branch
          %264 = sbr.rel (%p262) target = $region28
        $region27: #{tpu_custom_call.1} parent=11 // pred_region
          _
        $region28: #{tpu_custom_call.1} parent=11 // pred_fallthru
          _
        // Predicated region
        $region29: #{tpu_custom_call.1} parent=11 // pred_check
          %p265 = pneg %p149
        $region30: #{tpu_custom_call.1} parent=11 // pred_check_branch
          %267 = sbr.rel (%p265) target = $region32
        $region31: #{tpu_custom_call.1} parent=11 // pred_region
          _
        $region32: #{tpu_custom_call.1} parent=11 // pred_fallthru
          _
        // Predicated region
        $region33: #{tpu_custom_call.1} parent=11 // pred_check
          %p268 = pneg %p170
        $region34: #{tpu_custom_call.1} parent=11 // pred_check_branch
          %270 = sbr.rel (%p268) target = $region36
        $region35: #{tpu_custom_call.1} parent=11 // pred_region
          _
        $region36: #{tpu_custom_call.1} parent=11 // pred_fallthru
          _
        // Predicated region
        $region37: #{tpu_custom_call.1} parent=11 // pred_check
          %p271 = pneg %p191
        $region38: #{tpu_custom_call.1} parent=11 // pred_check_branch
          %273 = sbr.rel (%p271) target = $region40
        $region39: #{tpu_custom_call.1} parent=11 // pred_region
          _
        $region40: #{tpu_custom_call.1} parent=11 // pred_fallthru
          _
        // Predicated region
        $region41: #{tpu_custom_call.1} parent=11 // pred_check
          %p274 = pneg %p212
        $region42: #{tpu_custom_call.1} parent=11 // pred_check_branch
          %276 = sbr.rel (%p274) target = $region44
        $region43: #{tpu_custom_call.1} parent=11 // pred_region
          _
        $region44: #{tpu_custom_call.1} parent=11 // pred_fallthru
          _
      $region12: #{tpu_custom_call.1} parent=5 // pred_fallthru
        _
      %p277 = scmp.lt.s32.totalorder %s18, 2
      // Predicated region
      $region45: #{tpu_custom_call.1} parent=5 // pred_check
        %p278 = pneg %p277
      $region46: #{tpu_custom_call.1} parent=5 // pred_check_branch
        %280 = sbr.rel (%p278) target = $region48
      $region47: #{tpu_custom_call.1} parent=5 // pred_region
        // Predicated region
        $region49: #{tpu_custom_call.1} parent=47 // pred_check
          %p281 = pneg %p38
        $region50: #{tpu_custom_call.1} parent=47 // pred_check_branch
          %283 = sbr.rel (%p281) target = $region52
        $region51: #{tpu_custom_call.1} parent=47 // pred_region
          %s284 = smul.u32 16, %s18
          %p285 = scmp.lt.s32.totalorder %s284, 31
          %s286 = scalar_select %p285, %s284, 31
          %s287 = smul.addr %s286, 8
          %s288 = scalar_lea.vmem %s0, %s287
          %s289 = smul.u32 16, %s18
        $region52: #{tpu_custom_call.1} parent=47 // pred_fallthru
          _
      $region48: #{tpu_custom_call.1} parent=5 // pred_fallthru
        _
      %p290 = scmp.le.s32.totalorder 1, %s18
      %p291 = scmp.lt.s32.totalorder %s18, 3
      %p292 = pnand %p290, %p291
      %p293 = pneg %p292
      // Predicated region
      $region53: #{tpu_custom_call.1} parent=5 // pred_check
        _
      $region54: #{tpu_custom_call.1} parent=5 // pred_check_branch
        %295 = sbr.rel (%p292) target = $region56
      $region55: #{tpu_custom_call.1} parent=5 // pred_region
        %s296 = ssub.s32 %s18, 1
        %s297 = smul.u32 16, %s23
        %p298 = scmp.lt.s32.totalorder %s297, 31
        %s299 = scalar_select %p298, %s297, 31
        %s300 = smul.addr %s299, 8
        %s301 = scalar_lea.vmem %s0, %s300
        %p302 = pneg %p44
        %p303 = pneg %p41
        %p304 = pneg %p65
        %p305 = pneg %p62
        %p306 = pneg %p86
        %p307 = pneg %p83
        %p308 = pneg %p107
        %p309 = pneg %p104
        %p310 = pneg %p128
        %p311 = pneg %p125
        %p312 = pneg %p149
        %p313 = pneg %p146
        %p314 = pneg %p170
        %p315 = pneg %p167
        %p316 = pneg %p191
        %p317 = pneg %p188
        %p318 = pneg %p212
        %p319 = pneg %p209
        %p320 = pneg %p238
        %p321 = pneg %p235
        %s322 = sand.u32 %s225, 1
        %s323 = scalar_lea.sflag [#allocation3], %s322
        %s324 = sand.u32 %s225, 1
        %s325 = smul.addr %s324, 128
        %s326 = scalar_lea.vmem [#allocation2], %s325
        %s327 = smul.u32 16, %s23
        %p328 = scmp.lt.s32.totalorder %s327, 31
        %s329 = scalar_select %p328, %s327, 31
        %s330 = smul.addr %s329, 8
        %s331 = scalar_lea.vmem %s0, %s330
        %s332 = smul.u32 16, %s23
        %s333 = smul.u32 16, %s23
        %v334 = vld [vmem:[%s331] sm:$0xff]
        %v335 = vld [vmem:[%s331 + $0x8] sm:$0xff]
        %v336 = vld [vmem:[%s331 + $0x10] sm:$0xff]
        %v337 = vld [vmem:[%s331 + $0x18] sm:$0xff]
        %v338 = vld [vmem:[%s331 + $0x20] sm:$0xff]
        %v339 = vld [vmem:[%s331 + $0x28] sm:$0xff]
        %v340 = vld [vmem:[%s331 + $0x30] sm:$0xff]
        %v341 = vld [vmem:[%s331 + $0x38] sm:$0xff]
        %v342 = vld [vmem:[%s331 + $0x40] sm:$0xff]
        %v343 = vld [vmem:[%s331 + $0x48] sm:$0xff]
        %v344 = vld [vmem:[%s331 + $0x50] sm:$0xff]
        %v345 = vld [vmem:[%s331 + $0x58] sm:$0xff]
        %v346 = vld [vmem:[%s331 + $0x60] sm:$0xff]
        %v347 = vld [vmem:[%s331 + $0x68] sm:$0xff]
        %v348 = vld [vmem:[%s331 + $0x70] sm:$0xff]
        %v349 = vld [vmem:[%s331 + $0x78] sm:$0xff]
        %v350 = vld [vmem:[%s1] sm:$0x7]
        %v351 = vld [vmem:[%s2] sm:$0x1]
        %v353 = vlaneseq
        %v354 = vshrl.u32 %v353, 7
        %v355 = vsub.s32 0, %v354
        %v356 = vrot.slane %v351, %v355
        %vm358 = vcmask 23552
        %v360 = vsel %vm358, %v334, 0
        %v363 = vsel %vm358, %v335, 0
        %v366 = vsel %vm358, %v336, 0
        %v369 = vsel %vm358, %v337, 0
        %v372 = vsel %vm358, %v338, 0
        %v375 = vsel %vm358, %v339, 0
        %v378 = vsel %vm358, %v340, 0
        %v381 = vsel %vm358, %v341, 0
        %v384 = vsel %vm358, %v342, 0
        %v387 = vsel %vm358, %v343, 0
        %v390 = vsel %vm358, %v344, 0
        %v393 = vsel %vm358, %v345, 0
        %v396 = vsel %vm358, %v346, 0
        %v399 = vsel %vm358, %v347, 0
        %v402 = vsel %vm358, %v348, 0
        %v405 = vsel %vm358, %v349, 0
        %vm407 = vcmask 1042432
        %v409 = vsel %vm407, %v350, 0
        %411 = vmatprep.subr.mxu0 0.0
        %412 = vmatpush1.msra.mxu0 0.0
        %413 = vmatprep.subr.mxu0 0.0
        %414 = vmatpush1.msra.mxu0 0.0
        %415 = vmatprep.subr.mxu0 0.0
        %416 = vmatpush1.msra.mxu0 0.0
        %417 = vmatprep.subr.mxu0 0.0
        %418 = vmatpush1.msra.mxu0 0.0
        %419 = vmatprep.subr.mxu0 0.0
        %420 = vmatpush1.msra.mxu0 0.0
        %421 = vmatprep.subr.mxu0 0.0
        %422 = vmatpush1.msra.mxu0 0.0
        %423 = vmatprep.subr.mxu0 0.0
        %424 = vmatpush1.msra.mxu0 0.0
        %425 = vmatprep.subr.mxu0 0.0
        %426 = vmatpush1.msra.mxu0 0.0
        %427 = vmatprep.subr.mxu0 0.0
        %428 = vmatpush1.msra.mxu0 0.0
        %429 = vmatprep.subr.mxu0 0.0
        %430 = vmatpush1.msra.mxu0 0.0
        %431 = vmatprep.subr.mxu0 0.0
        %432 = vmatpush1.msra.mxu0 0.0
        %433 = vmatprep.subr.mxu0 0.0
        %434 = vmatpush1.msra.mxu0 0.0
        %435 = vmatprep.subr.mxu0 0.0
        %436 = vmatpush1.msra.mxu0 0.0
        %437 = vmatprep.subr.mxu0 0.0
        %438 = vmatpush1.msra.mxu0 0.0
        %439 = vmatprep.subr.mxu0 0.0
        %440 = vmatpush1.msra.mxu0 0.0
        %441 = vmatprep.subr.mxu0 0.0
        %v442 = vand.u32 %v409, 4294901760
        %443 = vmatpush1.msra.mxu0 %v442
        %444 = vmatprep.subr.mxu0 0.0
        %445 = vmatpush2.msra.mxu0 0.0
        %446 = vmatprep.subr.mxu0 0.0
        %447 = vmatpush2.msra.mxu0 0.0
        %448 = vmatprep.subr.mxu0 0.0
        %449 = vmatpush2.msra.mxu0 0.0
        %450 = vmatprep.subr.mxu0 0.0
        %451 = vmatpush2.msra.mxu0 0.0
        %452 = vmatprep.subr.mxu0 0.0
        %453 = vmatpush2.msra.mxu0 0.0
        %454 = vmatprep.subr.mxu0 0.0
        %455 = vmatpush2.msra.mxu0 0.0
        %456 = vmatprep.subr.mxu0 0.0
        %457 = vmatpush2.msra.mxu0 0.0
        %458 = vmatprep.subr.mxu0 0.0
        %459 = vmatpush2.msra.mxu0 0.0
        %460 = vmatprep.subr.mxu0 0.0
        %461 = vmatpush2.msra.mxu0 0.0
        %462 = vmatprep.subr.mxu0 0.0
        %463 = vmatpush2.msra.mxu0 0.0
        %464 = vmatprep.subr.mxu0 0.0
        %465 = vmatpush2.msra.mxu0 0.0
        %466 = vmatprep.subr.mxu0 0.0
        %467 = vmatpush2.msra.mxu0 0.0
        %468 = vmatprep.subr.mxu0 0.0
        %469 = vmatpush2.msra.mxu0 0.0
        %470 = vmatprep.subr.mxu0 0.0
        %471 = vmatpush2.msra.mxu0 0.0
        %472 = vmatprep.subr.mxu0 0.0
        %473 = vmatpush2.msra.mxu0 0.0
        %474 = vmatprep.subr.mxu0 0.0
        %475 = vmatpush2.msra.mxu0 0.0
        %476 = vmatprep.mubr.f32.mxu0 0.0
        %v477 = vand.u32 %v360, 4294901760
        %v478 = vsub.f32 %v360, %v477
        %v479 = vand.u32 %v478, 4294901760
        %v480 = vsub.f32 %v478, %v479
        %v481 = vand.u32 %v480, 4294901760
        %482 = vmatmul.mubr.f32.gmra.mxu0 %v481
        %v483 = vpop.f32.mrf.mxu0
        %v484 = vadd.f32 %v356, %v483
        %v485 = vpop.f32.mrf.mxu0
        %486 = vmatprep.mubr.f32.mxu0 0.0
        %v487 = vand.u32 %v363, 4294901760
        %v488 = vsub.f32 %v363, %v487
        %v489 = vand.u32 %v488, 4294901760
        %v490 = vsub.f32 %v488, %v489
        %v491 = vand.u32 %v490, 4294901760
        %492 = vmatmul.mubr.f32.gmra.mxu0 %v491
        %v493 = vpop.f32.mrf.mxu0
        %v494 = vadd.f32 %v356, %v493
        %v495 = vpop.f32.mrf.mxu0
        %496 = vmatprep.mubr.f32.mxu0 0.0
        %v497 = vand.u32 %v366, 4294901760
        %v498 = vsub.f32 %v366, %v497
        %v499 = vand.u32 %v498, 4294901760
        %v500 = vsub.f32 %v498, %v499
        %v501 = vand.u32 %v500, 4294901760
        %502 = vmatmul.mubr.f32.gmra.mxu0 %v501
        %v503 = vpop.f32.mrf.mxu0
        %v504 = vadd.f32 %v356, %v503
        %v505 = vpop.f32.mrf.mxu0
        %506 = vmatprep.mubr.f32.mxu0 0.0
        %v507 = vand.u32 %v369, 4294901760
        %v508 = vsub.f32 %v369, %v507
        %v509 = vand.u32 %v508, 4294901760
        %v510 = vsub.f32 %v508, %v509
        %v511 = vand.u32 %v510, 4294901760
        %512 = vmatmul.mubr.f32.gmra.mxu0 %v511
        %v513 = vpop.f32.mrf.mxu0
        %v514 = vadd.f32 %v356, %v513
        %v515 = vpop.f32.mrf.mxu0
        %516 = vmatprep.mubr.f32.mxu0 0.0
        %v517 = vand.u32 %v372, 4294901760
        %v518 = vsub.f32 %v372, %v517
        %v519 = vand.u32 %v518, 4294901760
        %v520 = vsub.f32 %v518, %v519
        %v521 = vand.u32 %v520, 4294901760
        %522 = vmatmul.mubr.f32.gmra.mxu0 %v521
        %v523 = vpop.f32.mrf.mxu0
        %v524 = vadd.f32 %v356, %v523
        %v525 = vpop.f32.mrf.mxu0
        %526 = vmatprep.mubr.f32.mxu0 0.0
        %v527 = vand.u32 %v375, 4294901760
        %v528 = vsub.f32 %v375, %v527
        %v529 = vand.u32 %v528, 4294901760
        %v530 = vsub.f32 %v528, %v529
        %v531 = vand.u32 %v530, 4294901760
        %532 = vmatmul.mubr.f32.gmra.mxu0 %v531
        %v533 = vpop.f32.mrf.mxu0
        %v534 = vadd.f32 %v356, %v533
        %v535 = vpop.f32.mrf.mxu0
        %536 = vmatprep.mubr.f32.mxu0 0.0
        %v537 = vand.u32 %v378, 4294901760
        %v538 = vsub.f32 %v378, %v537
        %v539 = vand.u32 %v538, 4294901760
        %v540 = vsub.f32 %v538, %v539
        %v541 = vand.u32 %v540, 4294901760
        %542 = vmatmul.mubr.f32.gmra.mxu0 %v541
        %v543 = vpop.f32.mrf.mxu0
        %v544 = vadd.f32 %v356, %v543
        %v545 = vpop.f32.mrf.mxu0
        %546 = vmatprep.mubr.f32.mxu0 0.0
        %v547 = vand.u32 %v381, 4294901760
        %v548 = vsub.f32 %v381, %v547
        %v549 = vand.u32 %v548, 4294901760
        %v550 = vsub.f32 %v548, %v549
        %v551 = vand.u32 %v550, 4294901760
        %552 = vmatmul.mubr.f32.gmra.mxu0 %v551
        %v553 = vpop.f32.mrf.mxu0
        %v554 = vadd.f32 %v356, %v553
        %v555 = vpop.f32.mrf.mxu0
        %556 = vmatprep.mubr.f32.mxu0 0.0
        %v557 = vand.u32 %v384, 4294901760
        %v558 = vsub.f32 %v384, %v557
        %v559 = vand.u32 %v558, 4294901760
        %v560 = vsub.f32 %v558, %v559
        %v561 = vand.u32 %v560, 4294901760
        %562 = vmatmul.mubr.f32.gmra.mxu0 %v561
        %v563 = vpop.f32.mrf.mxu0
        %v564 = vadd.f32 %v356, %v563
        %v565 = vpop.f32.mrf.mxu0
        %566 = vmatprep.mubr.f32.mxu0 0.0
        %v567 = vand.u32 %v387, 4294901760
        %v568 = vsub.f32 %v387, %v567
        %v569 = vand.u32 %v568, 4294901760
        %v570 = vsub.f32 %v568, %v569
        %v571 = vand.u32 %v570, 4294901760
        %572 = vmatmul.mubr.f32.gmra.mxu0 %v571
        %v573 = vpop.f32.mrf.mxu0
        %v574 = vadd.f32 %v356, %v573
        %v575 = vpop.f32.mrf.mxu0
        %576 = vmatprep.mubr.f32.mxu0 0.0
        %v577 = vand.u32 %v390, 4294901760
        %v578 = vsub.f32 %v390, %v577
        %v579 = vand.u32 %v578, 4294901760
        %v580 = vsub.f32 %v578, %v579
        %v581 = vand.u32 %v580, 4294901760
        %582 = vmatmul.mubr.f32.gmra.mxu0 %v581
        %v583 = vpop.f32.mrf.mxu0
        %v584 = vadd.f32 %v356, %v583
        %v585 = vpop.f32.mrf.mxu0
        %586 = vmatprep.mubr.f32.mxu0 0.0
        %v587 = vand.u32 %v393, 4294901760
        %v588 = vsub.f32 %v393, %v587
        %v589 = vand.u32 %v588, 4294901760
        %v590 = vsub.f32 %v588, %v589
        %v591 = vand.u32 %v590, 4294901760
        %592 = vmatmul.mubr.f32.gmra.mxu0 %v591
        %v593 = vpop.f32.mrf.mxu0
        %v594 = vadd.f32 %v356, %v593
        %v595 = vpop.f32.mrf.mxu0
        %596 = vmatprep.mubr.f32.mxu0 0.0
        %v597 = vand.u32 %v396, 4294901760
        %v598 = vsub.f32 %v396, %v597
        %v599 = vand.u32 %v598, 4294901760
        %v600 = vsub.f32 %v598, %v599
        %v601 = vand.u32 %v600, 4294901760
        %602 = vmatmul.mubr.f32.gmra.mxu0 %v601
        %v603 = vpop.f32.mrf.mxu0
        %v604 = vadd.f32 %v356, %v603
        %v605 = vpop.f32.mrf.mxu0
        %606 = vmatprep.mubr.f32.mxu0 0.0
        %v607 = vand.u32 %v399, 4294901760
        %v608 = vsub.f32 %v399, %v607
        %v609 = vand.u32 %v608, 4294901760
        %v610 = vsub.f32 %v608, %v609
        %v611 = vand.u32 %v610, 4294901760
        %612 = vmatmul.mubr.f32.gmra.mxu0 %v611
        %v613 = vpop.f32.mrf.mxu0
        %v614 = vadd.f32 %v356, %v613
        %v615 = vpop.f32.mrf.mxu0
        %616 = vmatprep.mubr.f32.mxu0 0.0
        %v617 = vand.u32 %v402, 4294901760
        %v618 = vsub.f32 %v402, %v617
        %v619 = vand.u32 %v618, 4294901760
        %v620 = vsub.f32 %v618, %v619
        %v621 = vand.u32 %v620, 4294901760
        %622 = vmatmul.mubr.f32.gmra.mxu0 %v621
        %v623 = vpop.f32.mrf.mxu0
        %v624 = vadd.f32 %v356, %v623
        %v625 = vpop.f32.mrf.mxu0
        %626 = vmatprep.mubr.f32.mxu0 0.0
        %v627 = vand.u32 %v405, 4294901760
        %v628 = vsub.f32 %v405, %v627
        %v629 = vand.u32 %v628, 4294901760
        %v630 = vsub.f32 %v628, %v629
        %v631 = vand.u32 %v630, 4294901760
        %632 = vmatmul.mubr.f32.gmra.mxu0 %v631
        %v633 = vpop.f32.mrf.mxu0
        %v634 = vadd.f32 %v356, %v633
        %v635 = vpop.f32.mrf.mxu0
        %636 = vdwg.mxu0
        %637 = vmatprep.subr.mxu0 0.0
        %638 = vmatpush1.msra.mxu0 0.0
        %639 = vmatprep.subr.mxu0 0.0
        %640 = vmatpush1.msra.mxu0 0.0
        %641 = vmatprep.subr.mxu0 0.0
        %642 = vmatpush1.msra.mxu0 0.0
        %643 = vmatprep.subr.mxu0 0.0
        %644 = vmatpush1.msra.mxu0 0.0
        %645 = vmatprep.subr.mxu0 0.0
        %646 = vmatpush1.msra.mxu0 0.0
        %647 = vmatprep.subr.mxu0 0.0
        %648 = vmatpush1.msra.mxu0 0.0
        %649 = vmatprep.subr.mxu0 0.0
        %650 = vmatpush1.msra.mxu0 0.0
        %651 = vmatprep.subr.mxu0 0.0
        %652 = vmatpush1.msra.mxu0 0.0
        %653 = vmatprep.subr.mxu0 0.0
        %654 = vmatpush1.msra.mxu0 0.0
        %655 = vmatprep.subr.mxu0 0.0
        %656 = vmatpush1.msra.mxu0 0.0
        %657 = vmatprep.subr.mxu0 0.0
        %658 = vmatpush1.msra.mxu0 0.0
        %659 = vmatprep.subr.mxu0 0.0
        %660 = vmatpush1.msra.mxu0 0.0
        %661 = vmatprep.subr.mxu0 0.0
        %662 = vmatpush1.msra.mxu0 0.0
        %663 = vmatprep.subr.mxu0 0.0
        %664 = vmatpush1.msra.mxu0 0.0
        %665 = vmatprep.subr.mxu0 0.0
        %666 = vmatpush1.msra.mxu0 0.0
        %667 = vmatprep.subr.mxu0 0.0
        %v668 = vand.u32 %v409, 4294901760
        %v669 = vsub.f32 %v409, %v668
        %v670 = vand.u32 %v669, 4294901760
        %v671 = vsub.f32 %v669, %v670
        %v672 = vand.u32 %v671, 4294901760
        %673 = vmatpush1.msra.mxu0 %v672
        %674 = vmatprep.subr.mxu0 0.0
        %675 = vmatpush2.msra.mxu0 0.0
        %676 = vmatprep.subr.mxu0 0.0
        %677 = vmatpush2.msra.mxu0 0.0
        %678 = vmatprep.subr.mxu0 0.0
        %679 = vmatpush2.msra.mxu0 0.0
        %680 = vmatprep.subr.mxu0 0.0
        %681 = vmatpush2.msra.mxu0 0.0
        %682 = vmatprep.subr.mxu0 0.0
        %683 = vmatpush2.msra.mxu0 0.0
        %684 = vmatprep.subr.mxu0 0.0
        %685 = vmatpush2.msra.mxu0 0.0
        %686 = vmatprep.subr.mxu0 0.0
        %687 = vmatpush2.msra.mxu0 0.0
        %688 = vmatprep.subr.mxu0 0.0
        %689 = vmatpush2.msra.mxu0 0.0
        %690 = vmatprep.subr.mxu0 0.0
        %691 = vmatpush2.msra.mxu0 0.0
        %692 = vmatprep.subr.mxu0 0.0
        %693 = vmatpush2.msra.mxu0 0.0
        %694 = vmatprep.subr.mxu0 0.0
        %695 = vmatpush2.msra.mxu0 0.0
        %696 = vmatprep.subr.mxu0 0.0
        %697 = vmatpush2.msra.mxu0 0.0
        %698 = vmatprep.subr.mxu0 0.0
        %699 = vmatpush2.msra.mxu0 0.0
        %700 = vmatprep.subr.mxu0 0.0
        %701 = vmatpush2.msra.mxu0 0.0
        %702 = vmatprep.subr.mxu0 0.0
        %703 = vmatpush2.msra.mxu0 0.0
        %704 = vmatprep.subr.mxu0 0.0
        %705 = vmatpush2.msra.mxu0 0.0
        %706 = vmatprep.mubr.f32.mxu0 0.0
        %v707 = vand.u32 %v360, 4294901760
        %708 = vmatmul.mubr.f32.gmra.mxu0 %v707
        %v709 = vpop.f32.mrf.mxu0
        %v710 = vadd.f32 %v484, %v709
        %v711 = vpop.f32.mrf.mxu0
        %712 = vmatprep.mubr.f32.mxu0 0.0
        %v713 = vand.u32 %v363, 4294901760
        %714 = vmatmul.mubr.f32.gmra.mxu0 %v713
        %v715 = vpop.f32.mrf.mxu0
        %v716 = vadd.f32 %v494, %v715
        %v717 = vpop.f32.mrf.mxu0
        %718 = vmatprep.mubr.f32.mxu0 0.0
        %v719 = vand.u32 %v366, 4294901760
        %720 = vmatmul.mubr.f32.gmra.mxu0 %v719
        %v721 = vpop.f32.mrf.mxu0
        %v722 = vadd.f32 %v504, %v721
        %v723 = vpop.f32.mrf.mxu0
        %724 = vmatprep.mubr.f32.mxu0 0.0
        %v725 = vand.u32 %v369, 4294901760
        %726 = vmatmul.mubr.f32.gmra.mxu0 %v725
        %v727 = vpop.f32.mrf.mxu0
        %v728 = vadd.f32 %v514, %v727
        %v729 = vpop.f32.mrf.mxu0
        %730 = vmatprep.mubr.f32.mxu0 0.0
        %v731 = vand.u32 %v372, 4294901760
        %732 = vmatmul.mubr.f32.gmra.mxu0 %v731
        %v733 = vpop.f32.mrf.mxu0
        %v734 = vadd.f32 %v524, %v733
        %v735 = vpop.f32.mrf.mxu0
        %736 = vmatprep.mubr.f32.mxu0 0.0
        %v737 = vand.u32 %v375, 4294901760
        %738 = vmatmul.mubr.f32.gmra.mxu0 %v737
        %v739 = vpop.f32.mrf.mxu0
        %v740 = vadd.f32 %v534, %v739
        %v741 = vpop.f32.mrf.mxu0
        %742 = vmatprep.mubr.f32.mxu0 0.0
        %v743 = vand.u32 %v378, 4294901760
        %744 = vmatmul.mubr.f32.gmra.mxu0 %v743
        %v745 = vpop.f32.mrf.mxu0
        %v746 = vadd.f32 %v544, %v745
        %v747 = vpop.f32.mrf.mxu0
        %748 = vmatprep.mubr.f32.mxu0 0.0
        %v749 = vand.u32 %v381, 4294901760
        %750 = vmatmul.mubr.f32.gmra.mxu0 %v749
        %v751 = vpop.f32.mrf.mxu0
        %v752 = vadd.f32 %v554, %v751
        %v753 = vpop.f32.mrf.mxu0
        %754 = vmatprep.mubr.f32.mxu0 0.0
        %v755 = vand.u32 %v384, 4294901760
        %756 = vmatmul.mubr.f32.gmra.mxu0 %v755
        %v757 = vpop.f32.mrf.mxu0
        %v758 = vadd.f32 %v564, %v757
        %v759 = vpop.f32.mrf.mxu0
        %760 = vmatprep.mubr.f32.mxu0 0.0
        %v761 = vand.u32 %v387, 4294901760
        %762 = vmatmul.mubr.f32.gmra.mxu0 %v761
        %v763 = vpop.f32.mrf.mxu0
        %v764 = vadd.f32 %v574, %v763
        %v765 = vpop.f32.mrf.mxu0
        %766 = vmatprep.mubr.f32.mxu0 0.0
        %v767 = vand.u32 %v390, 4294901760
        %768 = vmatmul.mubr.f32.gmra.mxu0 %v767
        %v769 = vpop.f32.mrf.mxu0
        %v770 = vadd.f32 %v584, %v769
        %v771 = vpop.f32.mrf.mxu0
        %772 = vmatprep.mubr.f32.mxu0 0.0
        %v773 = vand.u32 %v393, 4294901760
        %774 = vmatmul.mubr.f32.gmra.mxu0 %v773
        %v775 = vpop.f32.mrf.mxu0
        %v776 = vadd.f32 %v594, %v775
        %v777 = vpop.f32.mrf.mxu0
        %778 = vmatprep.mubr.f32.mxu0 0.0
        %v779 = vand.u32 %v396, 4294901760
        %780 = vmatmul.mubr.f32.gmra.mxu0 %v779
        %v781 = vpop.f32.mrf.mxu0
        %v782 = vadd.f32 %v604, %v781
        %v783 = vpop.f32.mrf.mxu0
        %784 = vmatprep.mubr.f32.mxu0 0.0
        %v785 = vand.u32 %v399, 4294901760
        %786 = vmatmul.mubr.f32.gmra.mxu0 %v785
        %v787 = vpop.f32.mrf.mxu0
        %v788 = vadd.f32 %v614, %v787
        %v789 = vpop.f32.mrf.mxu0
        %790 = vmatprep.mubr.f32.mxu0 0.0
        %v791 = vand.u32 %v402, 4294901760
        %792 = vmatmul.mubr.f32.gmra.mxu0 %v791
        %v793 = vpop.f32.mrf.mxu0
        %v794 = vadd.f32 %v624, %v793
        %v795 = vpop.f32.mrf.mxu0
        %796 = vmatprep.mubr.f32.mxu0 0.0
        %v797 = vand.u32 %v405, 4294901760
        %798 = vmatmul.mubr.f32.gmra.mxu0 %v797
        %v799 = vpop.f32.mrf.mxu0
        %v800 = vadd.f32 %v634, %v799
        %v801 = vpop.f32.mrf.mxu0
        %802 = vdwg.mxu0
        %803 = vmatprep.subr.mxu0 0.0
        %804 = vmatpush1.msra.mxu0 0.0
        %805 = vmatprep.subr.mxu0 0.0
        %806 = vmatpush1.msra.mxu0 0.0
        %807 = vmatprep.subr.mxu0 0.0
        %808 = vmatpush1.msra.mxu0 0.0
        %809 = vmatprep.subr.mxu0 0.0
        %810 = vmatpush1.msra.mxu0 0.0
        %811 = vmatprep.subr.mxu0 0.0
        %812 = vmatpush1.msra.mxu0 0.0
        %813 = vmatprep.subr.mxu0 0.0
        %814 = vmatpush1.msra.mxu0 0.0
        %815 = vmatprep.subr.mxu0 0.0
        %816 = vmatpush1.msra.mxu0 0.0
        %817 = vmatprep.subr.mxu0 0.0
        %818 = vmatpush1.msra.mxu0 0.0
        %819 = vmatprep.subr.mxu0 0.0
        %820 = vmatpush1.msra.mxu0 0.0
        %821 = vmatprep.subr.mxu0 0.0
        %822 = vmatpush1.msra.mxu0 0.0
        %823 = vmatprep.subr.mxu0 0.0
        %824 = vmatpush1.msra.mxu0 0.0
        %825 = vmatprep.subr.mxu0 0.0
        %826 = vmatpush1.msra.mxu0 0.0
        %827 = vmatprep.subr.mxu0 0.0
        %828 = vmatpush1.msra.mxu0 0.0
        %829 = vmatprep.subr.mxu0 0.0
        %830 = vmatpush1.msra.mxu0 0.0
        %831 = vmatprep.subr.mxu0 0.0
        %832 = vmatpush1.msra.mxu0 0.0
        %833 = vmatprep.subr.mxu0 0.0
        %v834 = vand.u32 %v409, 4294901760
        %v835 = vsub.f32 %v409, %v834
        %836 = vmatpush1.msra.mxu0 %v835
        %837 = vmatprep.subr.mxu0 0.0
        %838 = vmatpush2.msra.mxu0 0.0
        %839 = vmatprep.subr.mxu0 0.0
        %840 = vmatpush2.msra.mxu0 0.0
        %841 = vmatprep.subr.mxu0 0.0
        %842 = vmatpush2.msra.mxu0 0.0
        %843 = vmatprep.subr.mxu0 0.0
        %844 = vmatpush2.msra.mxu0 0.0
        %845 = vmatprep.subr.mxu0 0.0
        %846 = vmatpush2.msra.mxu0 0.0
        %847 = vmatprep.subr.mxu0 0.0
        %848 = vmatpush2.msra.mxu0 0.0
        %849 = vmatprep.subr.mxu0 0.0
        %850 = vmatpush2.msra.mxu0 0.0
        %851 = vmatprep.subr.mxu0 0.0
        %852 = vmatpush2.msra.mxu0 0.0
        %853 = vmatprep.subr.mxu0 0.0
        %854 = vmatpush2.msra.mxu0 0.0
        %855 = vmatprep.subr.mxu0 0.0
        %856 = vmatpush2.msra.mxu0 0.0
        %857 = vmatprep.subr.mxu0 0.0
        %858 = vmatpush2.msra.mxu0 0.0
        %859 = vmatprep.subr.mxu0 0.0
        %860 = vmatpush2.msra.mxu0 0.0
        %861 = vmatprep.subr.mxu0 0.0
        %862 = vmatpush2.msra.mxu0 0.0
        %863 = vmatprep.subr.mxu0 0.0
        %864 = vmatpush2.msra.mxu0 0.0
        %865 = vmatprep.subr.mxu0 0.0
        %866 = vmatpush2.msra.mxu0 0.0
        %867 = vmatprep.subr.mxu0 0.0
        %868 = vmatpush2.msra.mxu0 0.0
        %869 = vmatprep.mubr.f32.mxu0 0.0
        %v870 = vand.u32 %v360, 4294901760
        %v871 = vsub.f32 %v360, %v870
        %872 = vmatmul.mubr.f32.gmra.mxu0 %v871
        %v873 = vpop.f32.mrf.mxu0
        %v874 = vadd.f32 %v710, %v873
        %v875 = vpop.f32.mrf.mxu0
        %876 = vmatprep.mubr.f32.mxu0 0.0
        %v877 = vand.u32 %v363, 4294901760
        %v878 = vsub.f32 %v363, %v877
        %879 = vmatmul.mubr.f32.gmra.mxu0 %v878
        %v880 = vpop.f32.mrf.mxu0
        %v881 = vadd.f32 %v716, %v880
        %v882 = vpop.f32.mrf.mxu0
        %883 = vmatprep.mubr.f32.mxu0 0.0
        %v884 = vand.u32 %v366, 4294901760
        %v885 = vsub.f32 %v366, %v884
        %886 = vmatmul.mubr.f32.gmra.mxu0 %v885
        %v887 = vpop.f32.mrf.mxu0
        %v888 = vadd.f32 %v722, %v887
        %v889 = vpop.f32.mrf.mxu0
        %890 = vmatprep.mubr.f32.mxu0 0.0
        %v891 = vand.u32 %v369, 4294901760
        %v892 = vsub.f32 %v369, %v891
        %893 = vmatmul.mubr.f32.gmra.mxu0 %v892
        %v894 = vpop.f32.mrf.mxu0
        %v895 = vadd.f32 %v728, %v894
        %v896 = vpop.f32.mrf.mxu0
        %897 = vmatprep.mubr.f32.mxu0 0.0
        %v898 = vand.u32 %v372, 4294901760
        %v899 = vsub.f32 %v372, %v898
        %900 = vmatmul.mubr.f32.gmra.mxu0 %v899
        %v901 = vpop.f32.mrf.mxu0
        %v902 = vadd.f32 %v734, %v901
        %v903 = vpop.f32.mrf.mxu0
        %904 = vmatprep.mubr.f32.mxu0 0.0
        %v905 = vand.u32 %v375, 4294901760
        %v906 = vsub.f32 %v375, %v905
        %907 = vmatmul.mubr.f32.gmra.mxu0 %v906
        %v908 = vpop.f32.mrf.mxu0
        %v909 = vadd.f32 %v740, %v908
        %v910 = vpop.f32.mrf.mxu0
        %911 = vmatprep.mubr.f32.mxu0 0.0
        %v912 = vand.u32 %v378, 4294901760
        %v913 = vsub.f32 %v378, %v912
        %914 = vmatmul.mubr.f32.gmra.mxu0 %v913
        %v915 = vpop.f32.mrf.mxu0
        %v916 = vadd.f32 %v746, %v915
        %v917 = vpop.f32.mrf.mxu0
        %918 = vmatprep.mubr.f32.mxu0 0.0
        %v919 = vand.u32 %v381, 4294901760
        %v920 = vsub.f32 %v381, %v919
        %921 = vmatmul.mubr.f32.gmra.mxu0 %v920
        %v922 = vpop.f32.mrf.mxu0
        %v923 = vadd.f32 %v752, %v922
        %v924 = vpop.f32.mrf.mxu0
        %925 = vmatprep.mubr.f32.mxu0 0.0
        %v926 = vand.u32 %v384, 4294901760
        %v927 = vsub.f32 %v384, %v926
        %928 = vmatmul.mubr.f32.gmra.mxu0 %v927
        %v929 = vpop.f32.mrf.mxu0
        %v930 = vadd.f32 %v758, %v929
        %v931 = vpop.f32.mrf.mxu0
        %932 = vmatprep.mubr.f32.mxu0 0.0
        %v933 = vand.u32 %v387, 4294901760
        %v934 = vsub.f32 %v387, %v933
        %935 = vmatmul.mubr.f32.gmra.mxu0 %v934
        %v936 = vpop.f32.mrf.mxu0
        %v937 = vadd.f32 %v764, %v936
        %v938 = vpop.f32.mrf.mxu0
        %939 = vmatprep.mubr.f32.mxu0 0.0
        %v940 = vand.u32 %v390, 4294901760
        %v941 = vsub.f32 %v390, %v940
        %942 = vmatmul.mubr.f32.gmra.mxu0 %v941
        %v943 = vpop.f32.mrf.mxu0
        %v944 = vadd.f32 %v770, %v943
        %v945 = vpop.f32.mrf.mxu0
        %946 = vmatprep.mubr.f32.mxu0 0.0
        %v947 = vand.u32 %v393, 4294901760
        %v948 = vsub.f32 %v393, %v947
        %949 = vmatmul.mubr.f32.gmra.mxu0 %v948
        %v950 = vpop.f32.mrf.mxu0
        %v951 = vadd.f32 %v776, %v950
        %v952 = vpop.f32.mrf.mxu0
        %953 = vmatprep.mubr.f32.mxu0 0.0
        %v954 = vand.u32 %v396, 4294901760
        %v955 = vsub.f32 %v396, %v954
        %956 = vmatmul.mubr.f32.gmra.mxu0 %v955
        %v957 = vpop.f32.mrf.mxu0
        %v958 = vadd.f32 %v782, %v957
        %v959 = vpop.f32.mrf.mxu0
        %960 = vmatprep.mubr.f32.mxu0 0.0
        %v961 = vand.u32 %v399, 4294901760
        %v962 = vsub.f32 %v399, %v961
        %963 = vmatmul.mubr.f32.gmra.mxu0 %v962
        %v964 = vpop.f32.mrf.mxu0
        %v965 = vadd.f32 %v788, %v964
        %v966 = vpop.f32.mrf.mxu0
        %967 = vmatprep.mubr.f32.mxu0 0.0
        %v968 = vand.u32 %v402, 4294901760
        %v969 = vsub.f32 %v402, %v968
        %970 = vmatmul.mubr.f32.gmra.mxu0 %v969
        %v971 = vpop.f32.mrf.mxu0
        %v972 = vadd.f32 %v794, %v971
        %v973 = vpop.f32.mrf.mxu0
        %974 = vmatprep.mubr.f32.mxu0 0.0
        %v975 = vand.u32 %v405, 4294901760
        %v976 = vsub.f32 %v405, %v975
        %977 = vmatmul.mubr.f32.gmra.mxu0 %v976
        %v978 = vpop.f32.mrf.mxu0
        %v979 = vadd.f32 %v800, %v978
        %v980 = vpop.f32.mrf.mxu0
        %981 = vdwg.mxu0
        %982 = vmatprep.subr.mxu0 0.0
        %983 = vmatpush1.msra.mxu0 0.0
        %984 = vmatprep.subr.mxu0 0.0
        %985 = vmatpush1.msra.mxu0 0.0
        %986 = vmatprep.subr.mxu0 0.0
        %987 = vmatpush1.msra.mxu0 0.0
        %988 = vmatprep.subr.mxu0 0.0
        %989 = vmatpush1.msra.mxu0 0.0
        %990 = vmatprep.subr.mxu0 0.0
        %991 = vmatpush1.msra.mxu0 0.0
        %992 = vmatprep.subr.mxu0 0.0
        %993 = vmatpush1.msra.mxu0 0.0
        %994 = vmatprep.subr.mxu0 0.0
        %995 = vmatpush1.msra.mxu0 0.0
        %996 = vmatprep.subr.mxu0 0.0
        %997 = vmatpush1.msra.mxu0 0.0
        %998 = vmatprep.subr.mxu0 0.0
        %999 = vmatpush1.msra.mxu0 0.0
        %1000 = vmatprep.subr.mxu0 0.0
        %1001 = vmatpush1.msra.mxu0 0.0
        %1002 = vmatprep.subr.mxu0 0.0
        %1003 = vmatpush1.msra.mxu0 0.0
        %1004 = vmatprep.subr.mxu0 0.0
        %1005 = vmatpush1.msra.mxu0 0.0
        %1006 = vmatprep.subr.mxu0 0.0
        %1007 = vmatpush1.msra.mxu0 0.0
        %1008 = vmatprep.subr.mxu0 0.0
        %1009 = vmatpush1.msra.mxu0 0.0
        %1010 = vmatprep.subr.mxu0 0.0
        %1011 = vmatpush1.msra.mxu0 0.0
        %1012 = vmatprep.subr.mxu0 0.0
        %v1013 = vand.u32 %v409, 4294901760
        %1014 = vmatpush1.msra.mxu0 %v1013
        %1015 = vmatprep.subr.mxu0 0.0
        %1016 = vmatpush2.msra.mxu0 0.0
        %1017 = vmatprep.subr.mxu0 0.0
        %1018 = vmatpush2.msra.mxu0 0.0
        %1019 = vmatprep.subr.mxu0 0.0
        %1020 = vmatpush2.msra.mxu0 0.0
        %1021 = vmatprep.subr.mxu0 0.0
        %1022 = vmatpush2.msra.mxu0 0.0
        %1023 = vmatprep.subr.mxu0 0.0
        %1024 = vmatpush2.msra.mxu0 0.0
        %1025 = vmatprep.subr.mxu0 0.0
        %1026 = vmatpush2.msra.mxu0 0.0
        %1027 = vmatprep.subr.mxu0 0.0
        %1028 = vmatpush2.msra.mxu0 0.0
        %1029 = vmatprep.subr.mxu0 0.0
        %1030 = vmatpush2.msra.mxu0 0.0
        %1031 = vmatprep.subr.mxu0 0.0
        %1032 = vmatpush2.msra.mxu0 0.0
        %1033 = vmatprep.subr.mxu0 0.0
        %1034 = vmatpush2.msra.mxu0 0.0
        %1035 = vmatprep.subr.mxu0 0.0
        %1036 = vmatpush2.msra.mxu0 0.0
        %1037 = vmatprep.subr.mxu0 0.0
        %1038 = vmatpush2.msra.mxu0 0.0
        %1039 = vmatprep.subr.mxu0 0.0
        %1040 = vmatpush2.msra.mxu0 0.0
        %1041 = vmatprep.subr.mxu0 0.0
        %1042 = vmatpush2.msra.mxu0 0.0
        %1043 = vmatprep.subr.mxu0 0.0
        %1044 = vmatpush2.msra.mxu0 0.0
        %1045 = vmatprep.subr.mxu0 0.0
        %1046 = vmatpush2.msra.mxu0 0.0
        %1047 = vmatprep.mubr.f32.mxu0 0.0
        %v1048 = vand.u32 %v360, 4294901760
        %v1049 = vsub.f32 %v360, %v1048
        %v1050 = vand.u32 %v1049, 4294901760
        %1051 = vmatmul.mubr.f32.gmra.mxu0 %v1050
        %v1052 = vpop.f32.mrf.mxu0
        %v1053 = vadd.f32 %v874, %v1052
        %v1054 = vpop.f32.mrf.mxu0
        %1055 = vmatprep.mubr.f32.mxu0 0.0
        %v1056 = vand.u32 %v363, 4294901760
        %v1057 = vsub.f32 %v363, %v1056
        %v1058 = vand.u32 %v1057, 4294901760
        %1059 = vmatmul.mubr.f32.gmra.mxu0 %v1058
        %v1060 = vpop.f32.mrf.mxu0
        %v1061 = vadd.f32 %v881, %v1060
        %v1062 = vpop.f32.mrf.mxu0
        %1063 = vmatprep.mubr.f32.mxu0 0.0
        %v1064 = vand.u32 %v366, 4294901760
        %v1065 = vsub.f32 %v366, %v1064
        %v1066 = vand.u32 %v1065, 4294901760
        %1067 = vmatmul.mubr.f32.gmra.mxu0 %v1066
        %v1068 = vpop.f32.mrf.mxu0
        %v1069 = vadd.f32 %v888, %v1068
        %v1070 = vpop.f32.mrf.mxu0
        %1071 = vmatprep.mubr.f32.mxu0 0.0
        %v1072 = vand.u32 %v369, 4294901760
        %v1073 = vsub.f32 %v369, %v1072
        %v1074 = vand.u32 %v1073, 4294901760
        %1075 = vmatmul.mubr.f32.gmra.mxu0 %v1074
        %v1076 = vpop.f32.mrf.mxu0
        %v1077 = vadd.f32 %v895, %v1076
        %v1078 = vpop.f32.mrf.mxu0
        %1079 = vmatprep.mubr.f32.mxu0 0.0
        %v1080 = vand.u32 %v372, 4294901760
        %v1081 = vsub.f32 %v372, %v1080
        %v1082 = vand.u32 %v1081, 4294901760
        %1083 = vmatmul.mubr.f32.gmra.mxu0 %v1082
        %v1084 = vpop.f32.mrf.mxu0
        %v1085 = vadd.f32 %v902, %v1084
        %v1086 = vpop.f32.mrf.mxu0
        %1087 = vmatprep.mubr.f32.mxu0 0.0
        %v1088 = vand.u32 %v375, 4294901760
        %v1089 = vsub.f32 %v375, %v1088
        %v1090 = vand.u32 %v1089, 4294901760
        %1091 = vmatmul.mubr.f32.gmra.mxu0 %v1090
        %v1092 = vpop.f32.mrf.mxu0
        %v1093 = vadd.f32 %v909, %v1092
        %v1094 = vpop.f32.mrf.mxu0
        %1095 = vmatprep.mubr.f32.mxu0 0.0
        %v1096 = vand.u32 %v378, 4294901760
        %v1097 = vsub.f32 %v378, %v1096
        %v1098 = vand.u32 %v1097, 4294901760
        %1099 = vmatmul.mubr.f32.gmra.mxu0 %v1098
        %v1100 = vpop.f32.mrf.mxu0
        %v1101 = vadd.f32 %v916, %v1100
        %v1102 = vpop.f32.mrf.mxu0
        %1103 = vmatprep.mubr.f32.mxu0 0.0
        %v1104 = vand.u32 %v381, 4294901760
        %v1105 = vsub.f32 %v381, %v1104
        %v1106 = vand.u32 %v1105, 4294901760
        %1107 = vmatmul.mubr.f32.gmra.mxu0 %v1106
        %v1108 = vpop.f32.mrf.mxu0
        %v1109 = vadd.f32 %v923, %v1108
        %v1110 = vpop.f32.mrf.mxu0
        %1111 = vmatprep.mubr.f32.mxu0 0.0
        %v1112 = vand.u32 %v384, 4294901760
        %v1113 = vsub.f32 %v384, %v1112
        %v1114 = vand.u32 %v1113, 4294901760
        %1115 = vmatmul.mubr.f32.gmra.mxu0 %v1114
        %v1116 = vpop.f32.mrf.mxu0
        %v1117 = vadd.f32 %v930, %v1116
        %v1118 = vpop.f32.mrf.mxu0
        %1119 = vmatprep.mubr.f32.mxu0 0.0
        %v1120 = vand.u32 %v387, 4294901760
        %v1121 = vsub.f32 %v387, %v1120
        %v1122 = vand.u32 %v1121, 4294901760
        %1123 = vmatmul.mubr.f32.gmra.mxu0 %v1122
        %v1124 = vpop.f32.mrf.mxu0
        %v1125 = vadd.f32 %v937, %v1124
        %v1126 = vpop.f32.mrf.mxu0
        %1127 = vmatprep.mubr.f32.mxu0 0.0
        %v1128 = vand.u32 %v390, 4294901760
        %v1129 = vsub.f32 %v390, %v1128
        %v1130 = vand.u32 %v1129, 4294901760
        %1131 = vmatmul.mubr.f32.gmra.mxu0 %v1130
        %v1132 = vpop.f32.mrf.mxu0
        %v1133 = vadd.f32 %v944, %v1132
        %v1134 = vpop.f32.mrf.mxu0
        %1135 = vmatprep.mubr.f32.mxu0 0.0
        %v1136 = vand.u32 %v393, 4294901760
        %v1137 = vsub.f32 %v393, %v1136
        %v1138 = vand.u32 %v1137, 4294901760
        %1139 = vmatmul.mubr.f32.gmra.mxu0 %v1138
        %v1140 = vpop.f32.mrf.mxu0
        %v1141 = vadd.f32 %v951, %v1140
        %v1142 = vpop.f32.mrf.mxu0
        %1143 = vmatprep.mubr.f32.mxu0 0.0
        %v1144 = vand.u32 %v396, 4294901760
        %v1145 = vsub.f32 %v396, %v1144
        %v1146 = vand.u32 %v1145, 4294901760
        %1147 = vmatmul.mubr.f32.gmra.mxu0 %v1146
        %v1148 = vpop.f32.mrf.mxu0
        %v1149 = vadd.f32 %v958, %v1148
        %v1150 = vpop.f32.mrf.mxu0
        %1151 = vmatprep.mubr.f32.mxu0 0.0
        %v1152 = vand.u32 %v399, 4294901760
        %v1153 = vsub.f32 %v399, %v1152
        %v1154 = vand.u32 %v1153, 4294901760
        %1155 = vmatmul.mubr.f32.gmra.mxu0 %v1154
        %v1156 = vpop.f32.mrf.mxu0
        %v1157 = vadd.f32 %v965, %v1156
        %v1158 = vpop.f32.mrf.mxu0
        %1159 = vmatprep.mubr.f32.mxu0 0.0
        %v1160 = vand.u32 %v402, 4294901760
        %v1161 = vsub.f32 %v402, %v1160
        %v1162 = vand.u32 %v1161, 4294901760
        %1163 = vmatmul.mubr.f32.gmra.mxu0 %v1162
        %v1164 = vpop.f32.mrf.mxu0
        %v1165 = vadd.f32 %v972, %v1164
        %v1166 = vpop.f32.mrf.mxu0
        %1167 = vmatprep.mubr.f32.mxu0 0.0
        %v1168 = vand.u32 %v405, 4294901760
        %v1169 = vsub.f32 %v405, %v1168
        %v1170 = vand.u32 %v1169, 4294901760
        %1171 = vmatmul.mubr.f32.gmra.mxu0 %v1170
        %v1172 = vpop.f32.mrf.mxu0
        %v1173 = vadd.f32 %v979, %v1172
        %v1174 = vpop.f32.mrf.mxu0
        %1175 = vdwg.mxu0
        %1176 = vmatprep.subr.mxu0 0.0
        %1177 = vmatpush1.msra.mxu0 0.0
        %1178 = vmatprep.subr.mxu0 0.0
        %1179 = vmatpush1.msra.mxu0 0.0
        %1180 = vmatprep.subr.mxu0 0.0
        %1181 = vmatpush1.msra.mxu0 0.0
        %1182 = vmatprep.subr.mxu0 0.0
        %1183 = vmatpush1.msra.mxu0 0.0
        %1184 = vmatprep.subr.mxu0 0.0
        %1185 = vmatpush1.msra.mxu0 0.0
        %1186 = vmatprep.subr.mxu0 0.0
        %1187 = vmatpush1.msra.mxu0 0.0
        %1188 = vmatprep.subr.mxu0 0.0
        %1189 = vmatpush1.msra.mxu0 0.0
        %1190 = vmatprep.subr.mxu0 0.0
        %1191 = vmatpush1.msra.mxu0 0.0
        %1192 = vmatprep.subr.mxu0 0.0
        %1193 = vmatpush1.msra.mxu0 0.0
        %1194 = vmatprep.subr.mxu0 0.0
        %1195 = vmatpush1.msra.mxu0 0.0
        %1196 = vmatprep.subr.mxu0 0.0
        %1197 = vmatpush1.msra.mxu0 0.0
        %1198 = vmatprep.subr.mxu0 0.0
        %1199 = vmatpush1.msra.mxu0 0.0
        %1200 = vmatprep.subr.mxu0 0.0
        %1201 = vmatpush1.msra.mxu0 0.0
        %1202 = vmatprep.subr.mxu0 0.0
        %1203 = vmatpush1.msra.mxu0 0.0
        %1204 = vmatprep.subr.mxu0 0.0
        %1205 = vmatpush1.msra.mxu0 0.0
        %1206 = vmatprep.subr.mxu0 0.0
        %v1207 = vand.u32 %v409, 4294901760
        %v1208 = vsub.f32 %v409, %v1207
        %v1209 = vand.u32 %v1208, 4294901760
        %1210 = vmatpush1.msra.mxu0 %v1209
        %1211 = vmatprep.subr.mxu0 0.0
        %1212 = vmatpush2.msra.mxu0 0.0
        %1213 = vmatprep.subr.mxu0 0.0
        %1214 = vmatpush2.msra.mxu0 0.0
        %1215 = vmatprep.subr.mxu0 0.0
        %1216 = vmatpush2.msra.mxu0 0.0
        %1217 = vmatprep.subr.mxu0 0.0
        %1218 = vmatpush2.msra.mxu0 0.0
        %1219 = vmatprep.subr.mxu0 0.0
        %1220 = vmatpush2.msra.mxu0 0.0
        %1221 = vmatprep.subr.mxu0 0.0
        %1222 = vmatpush2.msra.mxu0 0.0
        %1223 = vmatprep.subr.mxu0 0.0
        %1224 = vmatpush2.msra.mxu0 0.0
        %1225 = vmatprep.subr.mxu0 0.0
        %1226 = vmatpush2.msra.mxu0 0.0
        %1227 = vmatprep.subr.mxu0 0.0
        %1228 = vmatpush2.msra.mxu0 0.0
        %1229 = vmatprep.subr.mxu0 0.0
        %1230 = vmatpush2.msra.mxu0 0.0
        %1231 = vmatprep.subr.mxu0 0.0
        %1232 = vmatpush2.msra.mxu0 0.0
        %1233 = vmatprep.subr.mxu0 0.0
        %1234 = vmatpush2.msra.mxu0 0.0
        %1235 = vmatprep.subr.mxu0 0.0
        %1236 = vmatpush2.msra.mxu0 0.0
        %1237 = vmatprep.subr.mxu0 0.0
        %1238 = vmatpush2.msra.mxu0 0.0
        %1239 = vmatprep.subr.mxu0 0.0
        %1240 = vmatpush2.msra.mxu0 0.0
        %1241 = vmatprep.subr.mxu0 0.0
        %1242 = vmatpush2.msra.mxu0 0.0
        %1243 = vmatprep.mubr.f32.mxu0 0.0
        %v1244 = vand.u32 %v360, 4294901760
        %1245 = vmatmul.mubr.f32.gmra.mxu0 %v1244
        %v1246 = vpop.f32.mrf.mxu0
        %v1247 = vadd.f32 %v1053, %v1246
        %v1248 = vpop.f32.mrf.mxu0
        %1249 = vmatprep.mubr.f32.mxu0 0.0
        %v1250 = vand.u32 %v363, 4294901760
        %1251 = vmatmul.mubr.f32.gmra.mxu0 %v1250
        %v1252 = vpop.f32.mrf.mxu0
        %v1253 = vadd.f32 %v1061, %v1252
        %v1254 = vpop.f32.mrf.mxu0
        %1255 = vmatprep.mubr.f32.mxu0 0.0
        %v1256 = vand.u32 %v366, 4294901760
        %1257 = vmatmul.mubr.f32.gmra.mxu0 %v1256
        %v1258 = vpop.f32.mrf.mxu0
        %v1259 = vadd.f32 %v1069, %v1258
        %v1260 = vpop.f32.mrf.mxu0
        %1261 = vmatprep.mubr.f32.mxu0 0.0
        %v1262 = vand.u32 %v369, 4294901760
        %1263 = vmatmul.mubr.f32.gmra.mxu0 %v1262
        %v1264 = vpop.f32.mrf.mxu0
        %v1265 = vadd.f32 %v1077, %v1264
        %v1266 = vpop.f32.mrf.mxu0
        %1267 = vmatprep.mubr.f32.mxu0 0.0
        %v1268 = vand.u32 %v372, 4294901760
        %1269 = vmatmul.mubr.f32.gmra.mxu0 %v1268
        %v1270 = vpop.f32.mrf.mxu0
        %v1271 = vadd.f32 %v1085, %v1270
        %v1272 = vpop.f32.mrf.mxu0
        %1273 = vmatprep.mubr.f32.mxu0 0.0
        %v1274 = vand.u32 %v375, 4294901760
        %1275 = vmatmul.mubr.f32.gmra.mxu0 %v1274
        %v1276 = vpop.f32.mrf.mxu0
        %v1277 = vadd.f32 %v1093, %v1276
        %v1278 = vpop.f32.mrf.mxu0
        %1279 = vmatprep.mubr.f32.mxu0 0.0
        %v1280 = vand.u32 %v378, 4294901760
        %1281 = vmatmul.mubr.f32.gmra.mxu0 %v1280
        %v1282 = vpop.f32.mrf.mxu0
        %v1283 = vadd.f32 %v1101, %v1282
        %v1284 = vpop.f32.mrf.mxu0
        %1285 = vmatprep.mubr.f32.mxu0 0.0
        %v1286 = vand.u32 %v381, 4294901760
        %1287 = vmatmul.mubr.f32.gmra.mxu0 %v1286
        %v1288 = vpop.f32.mrf.mxu0
        %v1289 = vadd.f32 %v1109, %v1288
        %v1290 = vpop.f32.mrf.mxu0
        %1291 = vmatprep.mubr.f32.mxu0 0.0
        %v1292 = vand.u32 %v384, 4294901760
        %1293 = vmatmul.mubr.f32.gmra.mxu0 %v1292
        %v1294 = vpop.f32.mrf.mxu0
        %v1295 = vadd.f32 %v1117, %v1294
        %v1296 = vpop.f32.mrf.mxu0
        %1297 = vmatprep.mubr.f32.mxu0 0.0
        %v1298 = vand.u32 %v387, 4294901760
        %1299 = vmatmul.mubr.f32.gmra.mxu0 %v1298
        %v1300 = vpop.f32.mrf.mxu0
        %v1301 = vadd.f32 %v1125, %v1300
        %v1302 = vpop.f32.mrf.mxu0
        %1303 = vmatprep.mubr.f32.mxu0 0.0
        %v1304 = vand.u32 %v390, 4294901760
        %1305 = vmatmul.mubr.f32.gmra.mxu0 %v1304
        %v1306 = vpop.f32.mrf.mxu0
        %v1307 = vadd.f32 %v1133, %v1306
        %v1308 = vpop.f32.mrf.mxu0
        %1309 = vmatprep.mubr.f32.mxu0 0.0
        %v1310 = vand.u32 %v393, 4294901760
        %1311 = vmatmul.mubr.f32.gmra.mxu0 %v1310
        %v1312 = vpop.f32.mrf.mxu0
        %v1313 = vadd.f32 %v1141, %v1312
        %v1314 = vpop.f32.mrf.mxu0
        %1315 = vmatprep.mubr.f32.mxu0 0.0
        %v1316 = vand.u32 %v396, 4294901760
        %1317 = vmatmul.mubr.f32.gmra.mxu0 %v1316
        %v1318 = vpop.f32.mrf.mxu0
        %v1319 = vadd.f32 %v1149, %v1318
        %v1320 = vpop.f32.mrf.mxu0
        %1321 = vmatprep.mubr.f32.mxu0 0.0
        %v1322 = vand.u32 %v399, 4294901760
        %1323 = vmatmul.mubr.f32.gmra.mxu0 %v1322
        %v1324 = vpop.f32.mrf.mxu0
        %v1325 = vadd.f32 %v1157, %v1324
        %v1326 = vpop.f32.mrf.mxu0
        %1327 = vmatprep.mubr.f32.mxu0 0.0
        %v1328 = vand.u32 %v402, 4294901760
        %1329 = vmatmul.mubr.f32.gmra.mxu0 %v1328
        %v1330 = vpop.f32.mrf.mxu0
        %v1331 = vadd.f32 %v1165, %v1330
        %v1332 = vpop.f32.mrf.mxu0
        %1333 = vmatprep.mubr.f32.mxu0 0.0
        %v1334 = vand.u32 %v405, 4294901760
        %1335 = vmatmul.mubr.f32.gmra.mxu0 %v1334
        %v1336 = vpop.f32.mrf.mxu0
        %v1337 = vadd.f32 %v1173, %v1336
        %v1338 = vpop.f32.mrf.mxu0
        %1339 = vdwg.mxu0
        %1340 = vmatprep.subr.mxu0 0.0
        %1341 = vmatpush1.msra.mxu0 0.0
        %1342 = vmatprep.subr.mxu0 0.0
        %1343 = vmatpush1.msra.mxu0 0.0
        %1344 = vmatprep.subr.mxu0 0.0
        %1345 = vmatpush1.msra.mxu0 0.0
        %1346 = vmatprep.subr.mxu0 0.0
        %1347 = vmatpush1.msra.mxu0 0.0
        %1348 = vmatprep.subr.mxu0 0.0
        %1349 = vmatpush1.msra.mxu0 0.0
        %1350 = vmatprep.subr.mxu0 0.0
        %1351 = vmatpush1.msra.mxu0 0.0
        %1352 = vmatprep.subr.mxu0 0.0
        %1353 = vmatpush1.msra.mxu0 0.0
        %1354 = vmatprep.subr.mxu0 0.0
        %1355 = vmatpush1.msra.mxu0 0.0
        %1356 = vmatprep.subr.mxu0 0.0
        %1357 = vmatpush1.msra.mxu0 0.0
        %1358 = vmatprep.subr.mxu0 0.0
        %1359 = vmatpush1.msra.mxu0 0.0
        %1360 = vmatprep.subr.mxu0 0.0
        %1361 = vmatpush1.msra.mxu0 0.0
        %1362 = vmatprep.subr.mxu0 0.0
        %1363 = vmatpush1.msra.mxu0 0.0
        %1364 = vmatprep.subr.mxu0 0.0
        %1365 = vmatpush1.msra.mxu0 0.0
        %1366 = vmatprep.subr.mxu0 0.0
        %1367 = vmatpush1.msra.mxu0 0.0
        %1368 = vmatprep.subr.mxu0 0.0
        %1369 = vmatpush1.msra.mxu0 0.0
        %1370 = vmatprep.subr.mxu0 0.0
        %v1371 = vand.u32 %v409, 4294901760
        %1372 = vmatpush1.msra.mxu0 %v1371
        %1373 = vmatprep.subr.mxu0 0.0
        %1374 = vmatpush2.msra.mxu0 0.0
        %1375 = vmatprep.subr.mxu0 0.0
        %1376 = vmatpush2.msra.mxu0 0.0
        %1377 = vmatprep.subr.mxu0 0.0
        %1378 = vmatpush2.msra.mxu0 0.0
        %1379 = vmatprep.subr.mxu0 0.0
        %1380 = vmatpush2.msra.mxu0 0.0
        %1381 = vmatprep.subr.mxu0 0.0
        %1382 = vmatpush2.msra.mxu0 0.0
        %1383 = vmatprep.subr.mxu0 0.0
        %1384 = vmatpush2.msra.mxu0 0.0
        %1385 = vmatprep.subr.mxu0 0.0
        %1386 = vmatpush2.msra.mxu0 0.0
        %1387 = vmatprep.subr.mxu0 0.0
        %1388 = vmatpush2.msra.mxu0 0.0
        %1389 = vmatprep.subr.mxu0 0.0
        %1390 = vmatpush2.msra.mxu0 0.0
        %1391 = vmatprep.subr.mxu0 0.0
        %1392 = vmatpush2.msra.mxu0 0.0
        %1393 = vmatprep.subr.mxu0 0.0
        %1394 = vmatpush2.msra.mxu0 0.0
        %1395 = vmatprep.subr.mxu0 0.0
        %1396 = vmatpush2.msra.mxu0 0.0
        %1397 = vmatprep.subr.mxu0 0.0
        %1398 = vmatpush2.msra.mxu0 0.0
        %1399 = vmatprep.subr.mxu0 0.0
        %1400 = vmatpush2.msra.mxu0 0.0
        %1401 = vmatprep.subr.mxu0 0.0
        %1402 = vmatpush2.msra.mxu0 0.0
        %1403 = vmatprep.subr.mxu0 0.0
        %1404 = vmatpush2.msra.mxu0 0.0
        %1405 = vmatprep.mubr.f32.mxu0 0.0
        %v1406 = vand.u32 %v360, 4294901760
        %1407 = vmatmul.mubr.f32.gmra.mxu0 %v1406
        %v1408 = vpop.f32.mrf.mxu0
        %v1409 = vadd.f32 %v1247, %v1408
        %v1410 = vpop.f32.mrf.mxu0
        %1411 = vmatprep.mubr.f32.mxu0 0.0
        %v1412 = vand.u32 %v363, 4294901760
        %1413 = vmatmul.mubr.f32.gmra.mxu0 %v1412
        %v1414 = vpop.f32.mrf.mxu0
        %v1415 = vadd.f32 %v1253, %v1414
        %v1416 = vpop.f32.mrf.mxu0
        %1417 = vmatprep.mubr.f32.mxu0 0.0
        %v1418 = vand.u32 %v366, 4294901760
        %1419 = vmatmul.mubr.f32.gmra.mxu0 %v1418
        %v1420 = vpop.f32.mrf.mxu0
        %v1421 = vadd.f32 %v1259, %v1420
        %v1422 = vpop.f32.mrf.mxu0
        %1423 = vmatprep.mubr.f32.mxu0 0.0
        %v1424 = vand.u32 %v369, 4294901760
        %1425 = vmatmul.mubr.f32.gmra.mxu0 %v1424
        %v1426 = vpop.f32.mrf.mxu0
        %v1427 = vadd.f32 %v1265, %v1426
        %v1428 = vpop.f32.mrf.mxu0
        %1429 = vmatprep.mubr.f32.mxu0 0.0
        %v1430 = vand.u32 %v372, 4294901760
        %1431 = vmatmul.mubr.f32.gmra.mxu0 %v1430
        %v1432 = vpop.f32.mrf.mxu0
        %v1433 = vadd.f32 %v1271, %v1432
        %v1434 = vpop.f32.mrf.mxu0
        %1435 = vmatprep.mubr.f32.mxu0 0.0
        %v1436 = vand.u32 %v375, 4294901760
        %1437 = vmatmul.mubr.f32.gmra.mxu0 %v1436
        %v1438 = vpop.f32.mrf.mxu0
        %v1439 = vadd.f32 %v1277, %v1438
        %v1440 = vpop.f32.mrf.mxu0
        %1441 = vmatprep.mubr.f32.mxu0 0.0
        %v1442 = vand.u32 %v378, 4294901760
        %1443 = vmatmul.mubr.f32.gmra.mxu0 %v1442
        %v1444 = vpop.f32.mrf.mxu0
        %v1445 = vadd.f32 %v1283, %v1444
        %v1446 = vpop.f32.mrf.mxu0
        %1447 = vmatprep.mubr.f32.mxu0 0.0
        %v1448 = vand.u32 %v381, 4294901760
        %1449 = vmatmul.mubr.f32.gmra.mxu0 %v1448
        %v1450 = vpop.f32.mrf.mxu0
        %v1451 = vadd.f32 %v1289, %v1450
        %v1452 = vpop.f32.mrf.mxu0
        %1453 = vmatprep.mubr.f32.mxu0 0.0
        %v1454 = vand.u32 %v384, 4294901760
        %1455 = vmatmul.mubr.f32.gmra.mxu0 %v1454
        %v1456 = vpop.f32.mrf.mxu0
        %v1457 = vadd.f32 %v1295, %v1456
        %v1458 = vpop.f32.mrf.mxu0
        %1459 = vmatprep.mubr.f32.mxu0 0.0
        %v1460 = vand.u32 %v387, 4294901760
        %1461 = vmatmul.mubr.f32.gmra.mxu0 %v1460
        %v1462 = vpop.f32.mrf.mxu0
        %v1463 = vadd.f32 %v1301, %v1462
        %v1464 = vpop.f32.mrf.mxu0
        %1465 = vmatprep.mubr.f32.mxu0 0.0
        %v1466 = vand.u32 %v390, 4294901760
        %1467 = vmatmul.mubr.f32.gmra.mxu0 %v1466
        %v1468 = vpop.f32.mrf.mxu0
        %v1469 = vadd.f32 %v1307, %v1468
        %v1470 = vpop.f32.mrf.mxu0
        %1471 = vmatprep.mubr.f32.mxu0 0.0
        %v1472 = vand.u32 %v393, 4294901760
        %1473 = vmatmul.mubr.f32.gmra.mxu0 %v1472
        %v1474 = vpop.f32.mrf.mxu0
        %v1475 = vadd.f32 %v1313, %v1474
        %v1476 = vpop.f32.mrf.mxu0
        %1477 = vmatprep.mubr.f32.mxu0 0.0
        %v1478 = vand.u32 %v396, 4294901760
        %1479 = vmatmul.mubr.f32.gmra.mxu0 %v1478
        %v1480 = vpop.f32.mrf.mxu0
        %v1481 = vadd.f32 %v1319, %v1480
        %v1482 = vpop.f32.mrf.mxu0
        %1483 = vmatprep.mubr.f32.mxu0 0.0
        %v1484 = vand.u32 %v399, 4294901760
        %1485 = vmatmul.mubr.f32.gmra.mxu0 %v1484
        %v1486 = vpop.f32.mrf.mxu0
        %v1487 = vadd.f32 %v1325, %v1486
        %v1488 = vpop.f32.mrf.mxu0
        %1489 = vmatprep.mubr.f32.mxu0 0.0
        %v1490 = vand.u32 %v402, 4294901760
        %1491 = vmatmul.mubr.f32.gmra.mxu0 %v1490
        %v1492 = vpop.f32.mrf.mxu0
        %v1493 = vadd.f32 %v1331, %v1492
        %v1494 = vpop.f32.mrf.mxu0
        %1495 = vmatprep.mubr.f32.mxu0 0.0
        %v1496 = vand.u32 %v405, 4294901760
        %1497 = vmatmul.mubr.f32.gmra.mxu0 %v1496
        %v1498 = vpop.f32.mrf.mxu0
        %v1499 = vadd.f32 %v1337, %v1498
        %v1500 = vpop.f32.mrf.mxu0
        %1501 = vdwg.mxu0
        %v1502 = vlaneseq
        %v1503 = vand.u32 %v1502, 127
        %vm1504 = vcmp.lt.s32.totalorder %v1503, 3
        %v1505 = vand.u32 2147483647, %v1409
        %vm1506 = vcmp.le.f32.partialorder %v1505, 0.7853982
        %vm1507 = vcmp.lt.s32.totalorder %v1409, 0
        %v1508 = vand.u32 %v1409, 2139095040
        %v1509 = vshrl.u32 %v1508, 23
        %v1510 = vsub.s32 %v1509, 127
        %v1511 = vand.u32 2147483647, %v1409
        %v1512 = vand.u32 %v1511, 8388607
        %v1513 = vor.u32 %v1512, 8388608
        %v1514 = vsub.s32 0, %v1513
        %v1515 = vadd.s32 %v1510, 1
        %vm1516 = vcmp.gt.s32.totalorder %v1515, 0
        %v1517 = vsel %vm1516, %v1515, 0
        %v1518 = vshrl.u32 %v1517, 5
        %v1519 = vand.u32 %v1517, 31
        %v1520 = vsub.s32 32, %v1519
        %v1521 = vshrl.u32 683565275, %v1520
        %v1522 = vshll.u32 683565275, %v1519
        %v1523 = vshrl.u32 2475754826, %v1520
        %v1524 = vor.u32 %v1522, %v1523
        %v1525 = vshll.u32 2475754826, %v1519
        %v1526 = vshrl.u32 2131351028, %v1520
        %v1527 = vor.u32 %v1525, %v1526
        %v1528 = vshll.u32 2131351028, %v1519
        %v1529 = vshrl.u32 2102212464, %v1520
        %v1530 = vor.u32 %v1528, %v1529
        %v1531 = vshll.u32 2102212464, %v1519
        %v1532 = vshrl.u32 920167782, %v1520
        %v1533 = vor.u32 %v1531, %v1532
        %v1534 = vshll.u32 920167782, %v1519
        %v1535 = vshrl.u32 1326507024, %v1520
        %v1536 = vor.u32 %v1534, %v1535
        %vm1537 = vcmp.lt.s32.totalorder %v1518, 1
        %vm1538 = vcmp.lt.s32.totalorder %v1518, 2
        %vm1539 = vcmp.lt.s32.totalorder %v1518, 3
        %vm1540 = vcmp.lt.s32.totalorder %v1518, 4
        %v1541 = vsel %vm1537, %v1521, %v1524
        %v1542 = vsel %vm1540, %v1530, 2102212464
        %v1543 = vsel %vm1539, %v1527, %v1542
        %v1544 = vsel %vm1538, %v1541, %v1543
        %v1545 = vsel %vm1537, %v1524, %v1527
        %v1546 = vsel %vm1540, %v1533, 920167782
        %v1547 = vsel %vm1539, %v1530, %v1546
        %v1548 = vsel %vm1538, %v1545, %v1547
        %v1549 = vsel %vm1537, %v1527, %v1530
        %v1550 = vsel %vm1540, %v1536, 1326507024
        %v1551 = vsel %vm1539, %v1533, %v1550
        %v1552 = vsel %vm1538, %v1549, %v1551
        %v1553 = vshll.u32 %v1513, 8
        %v1554 = vmul.u32.u64.compose %v1553, %v1552
        %v1555 = vextract.low.u32 %v1554
        %v1556 = vextract.high.u32 %v1554
        %v1557 = vmul.u32.u64.compose %v1553, %v1548
        %v1558 = vextract.low.u32 %v1557
        %v1559 = vextract.high.u32 %v1557
        %v1560 = vmul.u32 %v1553, %v1544
        %v1561 = vadd.s32 %v1556, %v1558
        %vm1562 = vc.u32 %v1556, %v1558
        %v1563 = vadd.s32 %v1559, 1
        %v1564 = vsel %vm1562, %v1563, %v1559
        %v1565 = vadd.s32 %v1560, %v1564
        %v1566 = vadd.s32 %v1565, 536870912
        %v1567 = vshrl.u32 %v1566, 30
        %v1568 = vshll.u32 %v1567, 30
        %v1569 = vsub.s32 %v1565, %v1568
        %vm1570 = vcmp.lt.s32.totalorder %v1569, 0
        %v1571 = vsub.s32 0, %v1569
        %v1572 = vsel %vm1570, %v1571, %v1569
        %v1573 = vclz %v1572
        %v1574 = vsub.s32 %v1573, 2
        %vm1575 = vcmp.gt.s32.totalorder 0, %v1574
        %v1576 = vsel %vm1575, 0, %v1574
        %v1577 = vsub.s32 32, %v1576
        %v1578 = vshll.u32 %v1569, %v1576
        %v1579 = vshrl.u32 %v1561, %v1577
        %v1580 = vor.u32 %v1578, %v1579
        %v1581 = vsub.s32 4294967266, %v1576
        %v1582 = vadd.s32 %v1581, 127
        %v1583 = vshll.u32 %v1582, 23
        %v1584 = vor.u32 4788187, %v1583
        %v1585 = vand.u32 2147483647, %v1584
        %v1587 = vcvt.s32.f32 %v1580
        %v1588 = vmul.f32 %v1587, %v1585
        %v1589 = vxor.u32 %v1588, 2147483648
        %v1590 = vsel %vm1507, %v1589, %v1588
        %v1591 = vsub.s32 4, %v1567
        %v1592 = vsel %vm1507, %v1591, %v1567
        %v1593 = vsel %vm1506, %v1409, %v1590
        %v1594 = vsel %vm1506, 0, %v1592
        %v1595 = vcosq.f32.pop %v1593
        %v1596 = vsinq.f32.pop %v1593
        %vm1597 = vweird.f32 %v1409
        %v1598 = vadd.s32 %v1594, 3
        %v1599 = vand.u32 %v1598, 3
        %vm1600 = vcmp.lt.s32.totalorder %v1599, 2
        %vm1601 = vcmp.eq.s32.totalorder %v1599, 0
        %v1602 = vxor.u32 %v1596, 2147483648
        %v1603 = vsel %vm1601, %v1595, %v1602
        %vm1604 = vcmp.eq.s32.totalorder %v1599, 2
        %v1605 = vxor.u32 %v1595, 2147483648
        %v1606 = vsel %vm1604, %v1605, %v1596
        %v1607 = vsel %vm1600, %v1603, %v1606
        %v1608 = vsel %vm1597, nan, %v1607
        %v1609 = vand.u32 2147483647, %v1415
        %vm1610 = vcmp.le.f32.partialorder %v1609, 0.7853982
        %vm1611 = vcmp.lt.s32.totalorder %v1415, 0
        %v1612 = vand.u32 %v1415, 2139095040
        %v1613 = vshrl.u32 %v1612, 23
        %v1614 = vsub.s32 %v1613, 127
        %v1615 = vand.u32 2147483647, %v1415
        %v1616 = vand.u32 %v1615, 8388607
        %v1617 = vor.u32 %v1616, 8388608
        %v1618 = vsub.s32 0, %v1617
        %v1619 = vadd.s32 %v1614, 1
        %vm1620 = vcmp.gt.s32.totalorder %v1619, 0
        %v1621 = vsel %vm1620, %v1619, 0
        %v1622 = vshrl.u32 %v1621, 5
        %v1623 = vand.u32 %v1621, 31
        %v1624 = vsub.s32 32, %v1623
        %v1625 = vshrl.u32 683565275, %v1624
        %v1626 = vshll.u32 683565275, %v1623
        %v1627 = vshrl.u32 2475754826, %v1624
        %v1628 = vor.u32 %v1626, %v1627
        %v1629 = vshll.u32 2475754826, %v1623
        %v1630 = vshrl.u32 2131351028, %v1624
        %v1631 = vor.u32 %v1629, %v1630
        %v1632 = vshll.u32 2131351028, %v1623
        %v1633 = vshrl.u32 2102212464, %v1624
        %v1634 = vor.u32 %v1632, %v1633
        %v1635 = vshll.u32 2102212464, %v1623
        %v1636 = vshrl.u32 920167782, %v1624
        %v1637 = vor.u32 %v1635, %v1636
        %v1638 = vshll.u32 920167782, %v1623
        %v1639 = vshrl.u32 1326507024, %v1624
        %v1640 = vor.u32 %v1638, %v1639
        %vm1641 = vcmp.lt.s32.totalorder %v1622, 1
        %vm1642 = vcmp.lt.s32.totalorder %v1622, 2
        %vm1643 = vcmp.lt.s32.totalorder %v1622, 3
        %vm1644 = vcmp.lt.s32.totalorder %v1622, 4
        %v1645 = vsel %vm1641, %v1625, %v1628
        %v1646 = vsel %vm1644, %v1634, 2102212464
        %v1647 = vsel %vm1643, %v1631, %v1646
        %v1648 = vsel %vm1642, %v1645, %v1647
        %v1649 = vsel %vm1641, %v1628, %v1631
        %v1650 = vsel %vm1644, %v1637, 920167782
        %v1651 = vsel %vm1643, %v1634, %v1650
        %v1652 = vsel %vm1642, %v1649, %v1651
        %v1653 = vsel %vm1641, %v1631, %v1634
        %v1654 = vsel %vm1644, %v1640, 1326507024
        %v1655 = vsel %vm1643, %v1637, %v1654
        %v1656 = vsel %vm1642, %v1653, %v1655
        %v1657 = vshll.u32 %v1617, 8
        %v1658 = vmul.u32.u64.compose %v1657, %v1656
        %v1659 = vextract.low.u32 %v1658
        %v1660 = vextract.high.u32 %v1658
        %v1661 = vmul.u32.u64.compose %v1657, %v1652
        %v1662 = vextract.low.u32 %v1661
        %v1663 = vextract.high.u32 %v1661
        %v1664 = vmul.u32 %v1657, %v1648
        %v1665 = vadd.s32 %v1660, %v1662
        %vm1666 = vc.u32 %v1660, %v1662
        %v1667 = vadd.s32 %v1663, 1
        %v1668 = vsel %vm1666, %v1667, %v1663
        %v1669 = vadd.s32 %v1664, %v1668
        %v1670 = vadd.s32 %v1669, 536870912
        %v1671 = vshrl.u32 %v1670, 30
        %v1672 = vshll.u32 %v1671, 30
        %v1673 = vsub.s32 %v1669, %v1672
        %vm1674 = vcmp.lt.s32.totalorder %v1673, 0
        %v1675 = vsub.s32 0, %v1673
        %v1676 = vsel %vm1674, %v1675, %v1673
        %v1677 = vclz %v1676
        %v1678 = vsub.s32 %v1677, 2
        %vm1679 = vcmp.gt.s32.totalorder 0, %v1678
        %v1680 = vsel %vm1679, 0, %v1678
        %v1681 = vsub.s32 32, %v1680
        %v1682 = vshll.u32 %v1673, %v1680
        %v1683 = vshrl.u32 %v1665, %v1681
        %v1684 = vor.u32 %v1682, %v1683
        %v1685 = vsub.s32 4294967266, %v1680
        %v1686 = vadd.s32 %v1685, 127
        %v1687 = vshll.u32 %v1686, 23
        %v1688 = vor.u32 4788187, %v1687
        %v1689 = vand.u32 2147483647, %v1688
        %v1691 = vcvt.s32.f32 %v1684
        %v1692 = vmul.f32 %v1691, %v1689
        %v1693 = vxor.u32 %v1692, 2147483648
        %v1694 = vsel %vm1611, %v1693, %v1692
        %v1695 = vsub.s32 4, %v1671
        %v1696 = vsel %vm1611, %v1695, %v1671
        %v1697 = vsel %vm1610, %v1415, %v1694
        %v1698 = vsel %vm1610, 0, %v1696
        %v1699 = vcosq.f32.pop %v1697
        %v1700 = vsinq.f32.pop %v1697
        %vm1701 = vweird.f32 %v1415
        %v1702 = vadd.s32 %v1698, 3
        %v1703 = vand.u32 %v1702, 3
        %vm1704 = vcmp.lt.s32.totalorder %v1703, 2
        %vm1705 = vcmp.eq.s32.totalorder %v1703, 0
        %v1706 = vxor.u32 %v1700, 2147483648
        %v1707 = vsel %vm1705, %v1699, %v1706
        %vm1708 = vcmp.eq.s32.totalorder %v1703, 2
        %v1709 = vxor.u32 %v1699, 2147483648
        %v1710 = vsel %vm1708, %v1709, %v1700
        %v1711 = vsel %vm1704, %v1707, %v1710
        %v1712 = vsel %vm1701, nan, %v1711
        %v1713 = vand.u32 2147483647, %v1421
        %vm1714 = vcmp.le.f32.partialorder %v1713, 0.7853982
        %vm1715 = vcmp.lt.s32.totalorder %v1421, 0
        %v1716 = vand.u32 %v1421, 2139095040
        %v1717 = vshrl.u32 %v1716, 23
        %v1718 = vsub.s32 %v1717, 127
        %v1719 = vand.u32 2147483647, %v1421
        %v1720 = vand.u32 %v1719, 8388607
        %v1721 = vor.u32 %v1720, 8388608
        %v1722 = vsub.s32 0, %v1721
        %v1723 = vadd.s32 %v1718, 1
        %vm1724 = vcmp.gt.s32.totalorder %v1723, 0
        %v1725 = vsel %vm1724, %v1723, 0
        %v1726 = vshrl.u32 %v1725, 5
        %v1727 = vand.u32 %v1725, 31
        %v1728 = vsub.s32 32, %v1727
        %v1729 = vshrl.u32 683565275, %v1728
        %v1730 = vshll.u32 683565275, %v1727
        %v1731 = vshrl.u32 2475754826, %v1728
        %v1732 = vor.u32 %v1730, %v1731
        %v1733 = vshll.u32 2475754826, %v1727
        %v1734 = vshrl.u32 2131351028, %v1728
        %v1735 = vor.u32 %v1733, %v1734
        %v1736 = vshll.u32 2131351028, %v1727
        %v1737 = vshrl.u32 2102212464, %v1728
        %v1738 = vor.u32 %v1736, %v1737
        %v1739 = vshll.u32 2102212464, %v1727
        %v1740 = vshrl.u32 920167782, %v1728
        %v1741 = vor.u32 %v1739, %v1740
        %v1742 = vshll.u32 920167782, %v1727
        %v1743 = vshrl.u32 1326507024, %v1728
        %v1744 = vor.u32 %v1742, %v1743
        %vm1745 = vcmp.lt.s32.totalorder %v1726, 1
        %vm1746 = vcmp.lt.s32.totalorder %v1726, 2
        %vm1747 = vcmp.lt.s32.totalorder %v1726, 3
        %vm1748 = vcmp.lt.s32.totalorder %v1726, 4
        %v1749 = vsel %vm1745, %v1729, %v1732
        %v1750 = vsel %vm1748, %v1738, 2102212464
        %v1751 = vsel %vm1747, %v1735, %v1750
        %v1752 = vsel %vm1746, %v1749, %v1751
        %v1753 = vsel %vm1745, %v1732, %v1735
        %v1754 = vsel %vm1748, %v1741, 920167782
        %v1755 = vsel %vm1747, %v1738, %v1754
        %v1756 = vsel %vm1746, %v1753, %v1755
        %v1757 = vsel %vm1745, %v1735, %v1738
        %v1758 = vsel %vm1748, %v1744, 1326507024
        %v1759 = vsel %vm1747, %v1741, %v1758
        %v1760 = vsel %vm1746, %v1757, %v1759
        %v1761 = vshll.u32 %v1721, 8
        %v1762 = vmul.u32.u64.compose %v1761, %v1760
        %v1763 = vextract.low.u32 %v1762
        %v1764 = vextract.high.u32 %v1762
        %v1765 = vmul.u32.u64.compose %v1761, %v1756
        %v1766 = vextract.low.u32 %v1765
        %v1767 = vextract.high.u32 %v1765
        %v1768 = vmul.u32 %v1761, %v1752
        %v1769 = vadd.s32 %v1764, %v1766
        %vm1770 = vc.u32 %v1764, %v1766
        %v1771 = vadd.s32 %v1767, 1
        %v1772 = vsel %vm1770, %v1771, %v1767
        %v1773 = vadd.s32 %v1768, %v1772
        %v1774 = vadd.s32 %v1773, 536870912
        %v1775 = vshrl.u32 %v1774, 30
        %v1776 = vshll.u32 %v1775, 30
        %v1777 = vsub.s32 %v1773, %v1776
        %vm1778 = vcmp.lt.s32.totalorder %v1777, 0
        %v1779 = vsub.s32 0, %v1777
        %v1780 = vsel %vm1778, %v1779, %v1777
        %v1781 = vclz %v1780
        %v1782 = vsub.s32 %v1781, 2
        %vm1783 = vcmp.gt.s32.totalorder 0, %v1782
        %v1784 = vsel %vm1783, 0, %v1782
        %v1785 = vsub.s32 32, %v1784
        %v1786 = vshll.u32 %v1777, %v1784
        %v1787 = vshrl.u32 %v1769, %v1785
        %v1788 = vor.u32 %v1786, %v1787
        %v1789 = vsub.s32 4294967266, %v1784
        %v1790 = vadd.s32 %v1789, 127
        %v1791 = vshll.u32 %v1790, 23
        %v1792 = vor.u32 4788187, %v1791
        %v1793 = vand.u32 2147483647, %v1792
        %v1795 = vcvt.s32.f32 %v1788
        %v1796 = vmul.f32 %v1795, %v1793
        %v1797 = vxor.u32 %v1796, 2147483648
        %v1798 = vsel %vm1715, %v1797, %v1796
        %v1799 = vsub.s32 4, %v1775
        %v1800 = vsel %vm1715, %v1799, %v1775
        %v1801 = vsel %vm1714, %v1421, %v1798
        %v1802 = vsel %vm1714, 0, %v1800
        %v1803 = vcosq.f32.pop %v1801
        %v1804 = vsinq.f32.pop %v1801
        %vm1805 = vweird.f32 %v1421
        %v1806 = vadd.s32 %v1802, 3
        %v1807 = vand.u32 %v1806, 3
        %vm1808 = vcmp.lt.s32.totalorder %v1807, 2
        %vm1809 = vcmp.eq.s32.totalorder %v1807, 0
        %v1810 = vxor.u32 %v1804, 2147483648
        %v1811 = vsel %vm1809, %v1803, %v1810
        %vm1812 = vcmp.eq.s32.totalorder %v1807, 2
        %v1813 = vxor.u32 %v1803, 2147483648
        %v1814 = vsel %vm1812, %v1813, %v1804
        %v1815 = vsel %vm1808, %v1811, %v1814
        %v1816 = vsel %vm1805, nan, %v1815
        %v1817 = vand.u32 2147483647, %v1427
        %vm1818 = vcmp.le.f32.partialorder %v1817, 0.7853982
        %vm1819 = vcmp.lt.s32.totalorder %v1427, 0
        %v1820 = vand.u32 %v1427, 2139095040
        %v1821 = vshrl.u32 %v1820, 23
        %v1822 = vsub.s32 %v1821, 127
        %v1823 = vand.u32 2147483647, %v1427
        %v1824 = vand.u32 %v1823, 8388607
        %v1825 = vor.u32 %v1824, 8388608
        %v1826 = vsub.s32 0, %v1825
        %v1827 = vadd.s32 %v1822, 1
        %vm1828 = vcmp.gt.s32.totalorder %v1827, 0
        %v1829 = vsel %vm1828, %v1827, 0
        %v1830 = vshrl.u32 %v1829, 5
        %v1831 = vand.u32 %v1829, 31
        %v1832 = vsub.s32 32, %v1831
        %v1833 = vshrl.u32 683565275, %v1832
        %v1834 = vshll.u32 683565275, %v1831
        %v1835 = vshrl.u32 2475754826, %v1832
        %v1836 = vor.u32 %v1834, %v1835
        %v1837 = vshll.u32 2475754826, %v1831
        %v1838 = vshrl.u32 2131351028, %v1832
        %v1839 = vor.u32 %v1837, %v1838
        %v1840 = vshll.u32 2131351028, %v1831
        %v1841 = vshrl.u32 2102212464, %v1832
        %v1842 = vor.u32 %v1840, %v1841
        %v1843 = vshll.u32 2102212464, %v1831
        %v1844 = vshrl.u32 920167782, %v1832
        %v1845 = vor.u32 %v1843, %v1844
        %v1846 = vshll.u32 920167782, %v1831
        %v1847 = vshrl.u32 1326507024, %v1832
        %v1848 = vor.u32 %v1846, %v1847
        %vm1849 = vcmp.lt.s32.totalorder %v1830, 1
        %vm1850 = vcmp.lt.s32.totalorder %v1830, 2
        %vm1851 = vcmp.lt.s32.totalorder %v1830, 3
        %vm1852 = vcmp.lt.s32.totalorder %v1830, 4
        %v1853 = vsel %vm1849, %v1833, %v1836
        %v1854 = vsel %vm1852, %v1842, 2102212464
        %v1855 = vsel %vm1851, %v1839, %v1854
        %v1856 = vsel %vm1850, %v1853, %v1855
        %v1857 = vsel %vm1849, %v1836, %v1839
        %v1858 = vsel %vm1852, %v1845, 920167782
        %v1859 = vsel %vm1851, %v1842, %v1858
        %v1860 = vsel %vm1850, %v1857, %v1859
        %v1861 = vsel %vm1849, %v1839, %v1842
        %v1862 = vsel %vm1852, %v1848, 1326507024
        %v1863 = vsel %vm1851, %v1845, %v1862
        %v1864 = vsel %vm1850, %v1861, %v1863
        %v1865 = vshll.u32 %v1825, 8
        %v1866 = vmul.u32.u64.compose %v1865, %v1864
        %v1867 = vextract.low.u32 %v1866
        %v1868 = vextract.high.u32 %v1866
        %v1869 = vmul.u32.u64.compose %v1865, %v1860
        %v1870 = vextract.low.u32 %v1869
        %v1871 = vextract.high.u32 %v1869
        %v1872 = vmul.u32 %v1865, %v1856
        %v1873 = vadd.s32 %v1868, %v1870
        %vm1874 = vc.u32 %v1868, %v1870
        %v1875 = vadd.s32 %v1871, 1
        %v1876 = vsel %vm1874, %v1875, %v1871
        %v1877 = vadd.s32 %v1872, %v1876
        %v1878 = vadd.s32 %v1877, 536870912
        %v1879 = vshrl.u32 %v1878, 30
        %v1880 = vshll.u32 %v1879, 30
        %v1881 = vsub.s32 %v1877, %v1880
        %vm1882 = vcmp.lt.s32.totalorder %v1881, 0
        %v1883 = vsub.s32 0, %v1881
        %v1884 = vsel %vm1882, %v1883, %v1881
        %v1885 = vclz %v1884
        %v1886 = vsub.s32 %v1885, 2
        %vm1887 = vcmp.gt.s32.totalorder 0, %v1886
        %v1888 = vsel %vm1887, 0, %v1886
        %v1889 = vsub.s32 32, %v1888
        %v1890 = vshll.u32 %v1881, %v1888
        %v1891 = vshrl.u32 %v1873, %v1889
        %v1892 = vor.u32 %v1890, %v1891
        %v1893 = vsub.s32 4294967266, %v1888
        %v1894 = vadd.s32 %v1893, 127
        %v1895 = vshll.u32 %v1894, 23
        %v1896 = vor.u32 4788187, %v1895
        %v1897 = vand.u32 2147483647, %v1896
        %v1899 = vcvt.s32.f32 %v1892
        %v1900 = vmul.f32 %v1899, %v1897
        %v1901 = vxor.u32 %v1900, 2147483648
        %v1902 = vsel %vm1819, %v1901, %v1900
        %v1903 = vsub.s32 4, %v1879
        %v1904 = vsel %vm1819, %v1903, %v1879
        %v1905 = vsel %vm1818, %v1427, %v1902
        %v1906 = vsel %vm1818, 0, %v1904
        %v1907 = vcosq.f32.pop %v1905
        %v1908 = vsinq.f32.pop %v1905
        %vm1909 = vweird.f32 %v1427
        %v1910 = vadd.s32 %v1906, 3
        %v1911 = vand.u32 %v1910, 3
        %vm1912 = vcmp.lt.s32.totalorder %v1911, 2
        %vm1913 = vcmp.eq.s32.totalorder %v1911, 0
        %v1914 = vxor.u32 %v1908, 2147483648
        %v1915 = vsel %vm1913, %v1907, %v1914
        %vm1916 = vcmp.eq.s32.totalorder %v1911, 2
        %v1917 = vxor.u32 %v1907, 2147483648
        %v1918 = vsel %vm1916, %v1917, %v1908
        %v1919 = vsel %vm1912, %v1915, %v1918
        %v1920 = vsel %vm1909, nan, %v1919
        %v1921 = vand.u32 2147483647, %v1433
        %vm1922 = vcmp.le.f32.partialorder %v1921, 0.7853982
        %vm1923 = vcmp.lt.s32.totalorder %v1433, 0
        %v1924 = vand.u32 %v1433, 2139095040
        %v1925 = vshrl.u32 %v1924, 23
        %v1926 = vsub.s32 %v1925, 127
        %v1927 = vand.u32 2147483647, %v1433
        %v1928 = vand.u32 %v1927, 8388607
        %v1929 = vor.u32 %v1928, 8388608
        %v1930 = vsub.s32 0, %v1929
        %v1931 = vadd.s32 %v1926, 1
        %vm1932 = vcmp.gt.s32.totalorder %v1931, 0
        %v1933 = vsel %vm1932, %v1931, 0
        %v1934 = vshrl.u32 %v1933, 5
        %v1935 = vand.u32 %v1933, 31
        %v1936 = vsub.s32 32, %v1935
        %v1937 = vshrl.u32 683565275, %v1936
        %v1938 = vshll.u32 683565275, %v1935
        %v1939 = vshrl.u32 2475754826, %v1936
        %v1940 = vor.u32 %v1938, %v1939
        %v1941 = vshll.u32 2475754826, %v1935
        %v1942 = vshrl.u32 2131351028, %v1936
        %v1943 = vor.u32 %v1941, %v1942
        %v1944 = vshll.u32 2131351028, %v1935
        %v1945 = vshrl.u32 2102212464, %v1936
        %v1946 = vor.u32 %v1944, %v1945
        %v1947 = vshll.u32 2102212464, %v1935
        %v1948 = vshrl.u32 920167782, %v1936
        %v1949 = vor.u32 %v1947, %v1948
        %v1950 = vshll.u32 920167782, %v1935
        %v1951 = vshrl.u32 1326507024, %v1936
        %v1952 = vor.u32 %v1950, %v1951
        %vm1953 = vcmp.lt.s32.totalorder %v1934, 1
        %vm1954 = vcmp.lt.s32.totalorder %v1934, 2
        %vm1955 = vcmp.lt.s32.totalorder %v1934, 3
        %vm1956 = vcmp.lt.s32.totalorder %v1934, 4
        %v1957 = vsel %vm1953, %v1937, %v1940
        %v1958 = vsel %vm1956, %v1946, 2102212464
        %v1959 = vsel %vm1955, %v1943, %v1958
        %v1960 = vsel %vm1954, %v1957, %v1959
        %v1961 = vsel %vm1953, %v1940, %v1943
        %v1962 = vsel %vm1956, %v1949, 920167782
        %v1963 = vsel %vm1955, %v1946, %v1962
        %v1964 = vsel %vm1954, %v1961, %v1963
        %v1965 = vsel %vm1953, %v1943, %v1946
        %v1966 = vsel %vm1956, %v1952, 1326507024
        %v1967 = vsel %vm1955, %v1949, %v1966
        %v1968 = vsel %vm1954, %v1965, %v1967
        %v1969 = vshll.u32 %v1929, 8
        %v1970 = vmul.u32.u64.compose %v1969, %v1968
        %v1971 = vextract.low.u32 %v1970
        %v1972 = vextract.high.u32 %v1970
        %v1973 = vmul.u32.u64.compose %v1969, %v1964
        %v1974 = vextract.low.u32 %v1973
        %v1975 = vextract.high.u32 %v1973
        %v1976 = vmul.u32 %v1969, %v1960
        %v1977 = vadd.s32 %v1972, %v1974
        %vm1978 = vc.u32 %v1972, %v1974
        %v1979 = vadd.s32 %v1975, 1
        %v1980 = vsel %vm1978, %v1979, %v1975
        %v1981 = vadd.s32 %v1976, %v1980
        %v1982 = vadd.s32 %v1981, 536870912
        %v1983 = vshrl.u32 %v1982, 30
        %v1984 = vshll.u32 %v1983, 30
        %v1985 = vsub.s32 %v1981, %v1984
        %vm1986 = vcmp.lt.s32.totalorder %v1985, 0
        %v1987 = vsub.s32 0, %v1985
        %v1988 = vsel %vm1986, %v1987, %v1985
        %v1989 = vclz %v1988
        %v1990 = vsub.s32 %v1989, 2
        %vm1991 = vcmp.gt.s32.totalorder 0, %v1990
        %v1992 = vsel %vm1991, 0, %v1990
        %v1993 = vsub.s32 32, %v1992
        %v1994 = vshll.u32 %v1985, %v1992
        %v1995 = vshrl.u32 %v1977, %v1993
        %v1996 = vor.u32 %v1994, %v1995
        %v1997 = vsub.s32 4294967266, %v1992
        %v1998 = vadd.s32 %v1997, 127
        %v1999 = vshll.u32 %v1998, 23
        %v2000 = vor.u32 4788187, %v1999
        %v2001 = vand.u32 2147483647, %v2000
        %v2003 = vcvt.s32.f32 %v1996
        %v2004 = vmul.f32 %v2003, %v2001
        %v2005 = vxor.u32 %v2004, 2147483648
        %v2006 = vsel %vm1923, %v2005, %v2004
        %v2007 = vsub.s32 4, %v1983
        %v2008 = vsel %vm1923, %v2007, %v1983
        %v2009 = vsel %vm1922, %v1433, %v2006
        %v2010 = vsel %vm1922, 0, %v2008
        %v2011 = vcosq.f32.pop %v2009
        %v2012 = vsinq.f32.pop %v2009
        %vm2013 = vweird.f32 %v1433
        %v2014 = vadd.s32 %v2010, 3
        %v2015 = vand.u32 %v2014, 3
        %vm2016 = vcmp.lt.s32.totalorder %v2015, 2
        %vm2017 = vcmp.eq.s32.totalorder %v2015, 0
        %v2018 = vxor.u32 %v2012, 2147483648
        %v2019 = vsel %vm2017, %v2011, %v2018
        %vm2020 = vcmp.eq.s32.totalorder %v2015, 2
        %v2021 = vxor.u32 %v2011, 2147483648
        %v2022 = vsel %vm2020, %v2021, %v2012
        %v2023 = vsel %vm2016, %v2019, %v2022
        %v2024 = vsel %vm2013, nan, %v2023
        %v2025 = vand.u32 2147483647, %v1439
        %vm2026 = vcmp.le.f32.partialorder %v2025, 0.7853982
        %vm2027 = vcmp.lt.s32.totalorder %v1439, 0
        %v2028 = vand.u32 %v1439, 2139095040
        %v2029 = vshrl.u32 %v2028, 23
        %v2030 = vsub.s32 %v2029, 127
        %v2031 = vand.u32 2147483647, %v1439
        %v2032 = vand.u32 %v2031, 8388607
        %v2033 = vor.u32 %v2032, 8388608
        %v2034 = vsub.s32 0, %v2033
        %v2035 = vadd.s32 %v2030, 1
        %vm2036 = vcmp.gt.s32.totalorder %v2035, 0
        %v2037 = vsel %vm2036, %v2035, 0
        %v2038 = vshrl.u32 %v2037, 5
        %v2039 = vand.u32 %v2037, 31
        %v2040 = vsub.s32 32, %v2039
        %v2041 = vshrl.u32 683565275, %v2040
        %v2042 = vshll.u32 683565275, %v2039
        %v2043 = vshrl.u32 2475754826, %v2040
        %v2044 = vor.u32 %v2042, %v2043
        %v2045 = vshll.u32 2475754826, %v2039
        %v2046 = vshrl.u32 2131351028, %v2040
        %v2047 = vor.u32 %v2045, %v2046
        %v2048 = vshll.u32 2131351028, %v2039
        %v2049 = vshrl.u32 2102212464, %v2040
        %v2050 = vor.u32 %v2048, %v2049
        %v2051 = vshll.u32 2102212464, %v2039
        %v2052 = vshrl.u32 920167782, %v2040
        %v2053 = vor.u32 %v2051, %v2052
        %v2054 = vshll.u32 920167782, %v2039
        %v2055 = vshrl.u32 1326507024, %v2040
        %v2056 = vor.u32 %v2054, %v2055
        %vm2057 = vcmp.lt.s32.totalorder %v2038, 1
        %vm2058 = vcmp.lt.s32.totalorder %v2038, 2
        %vm2059 = vcmp.lt.s32.totalorder %v2038, 3
        %vm2060 = vcmp.lt.s32.totalorder %v2038, 4
        %v2061 = vsel %vm2057, %v2041, %v2044
        %v2062 = vsel %vm2060, %v2050, 2102212464
        %v2063 = vsel %vm2059, %v2047, %v2062
        %v2064 = vsel %vm2058, %v2061, %v2063
        %v2065 = vsel %vm2057, %v2044, %v2047
        %v2066 = vsel %vm2060, %v2053, 920167782
        %v2067 = vsel %vm2059, %v2050, %v2066
        %v2068 = vsel %vm2058, %v2065, %v2067
        %v2069 = vsel %vm2057, %v2047, %v2050
        %v2070 = vsel %vm2060, %v2056, 1326507024
        %v2071 = vsel %vm2059, %v2053, %v2070
        %v2072 = vsel %vm2058, %v2069, %v2071
        %v2073 = vshll.u32 %v2033, 8
        %v2074 = vmul.u32.u64.compose %v2073, %v2072
        %v2075 = vextract.low.u32 %v2074
        %v2076 = vextract.high.u32 %v2074
        %v2077 = vmul.u32.u64.compose %v2073, %v2068
        %v2078 = vextract.low.u32 %v2077
        %v2079 = vextract.high.u32 %v2077
        %v2080 = vmul.u32 %v2073, %v2064
        %v2081 = vadd.s32 %v2076, %v2078
        %vm2082 = vc.u32 %v2076, %v2078
        %v2083 = vadd.s32 %v2079, 1
        %v2084 = vsel %vm2082, %v2083, %v2079
        %v2085 = vadd.s32 %v2080, %v2084
        %v2086 = vadd.s32 %v2085, 536870912
        %v2087 = vshrl.u32 %v2086, 30
        %v2088 = vshll.u32 %v2087, 30
        %v2089 = vsub.s32 %v2085, %v2088
        %vm2090 = vcmp.lt.s32.totalorder %v2089, 0
        %v2091 = vsub.s32 0, %v2089
        %v2092 = vsel %vm2090, %v2091, %v2089
        %v2093 = vclz %v2092
        %v2094 = vsub.s32 %v2093, 2
        %vm2095 = vcmp.gt.s32.totalorder 0, %v2094
        %v2096 = vsel %vm2095, 0, %v2094
        %v2097 = vsub.s32 32, %v2096
        %v2098 = vshll.u32 %v2089, %v2096
        %v2099 = vshrl.u32 %v2081, %v2097
        %v2100 = vor.u32 %v2098, %v2099
        %v2101 = vsub.s32 4294967266, %v2096
        %v2102 = vadd.s32 %v2101, 127
        %v2103 = vshll.u32 %v2102, 23
        %v2104 = vor.u32 4788187, %v2103
        %v2105 = vand.u32 2147483647, %v2104
        %v2107 = vcvt.s32.f32 %v2100
        %v2108 = vmul.f32 %v2107, %v2105
        %v2109 = vxor.u32 %v2108, 2147483648
        %v2110 = vsel %vm2027, %v2109, %v2108
        %v2111 = vsub.s32 4, %v2087
        %v2112 = vsel %vm2027, %v2111, %v2087
        %v2113 = vsel %vm2026, %v1439, %v2110
        %v2114 = vsel %vm2026, 0, %v2112
        %v2115 = vcosq.f32.pop %v2113
        %v2116 = vsinq.f32.pop %v2113
        %vm2117 = vweird.f32 %v1439
        %v2118 = vadd.s32 %v2114, 3
        %v2119 = vand.u32 %v2118, 3
        %vm2120 = vcmp.lt.s32.totalorder %v2119, 2
        %vm2121 = vcmp.eq.s32.totalorder %v2119, 0
        %v2122 = vxor.u32 %v2116, 2147483648
        %v2123 = vsel %vm2121, %v2115, %v2122
        %vm2124 = vcmp.eq.s32.totalorder %v2119, 2
        %v2125 = vxor.u32 %v2115, 2147483648
        %v2126 = vsel %vm2124, %v2125, %v2116
        %v2127 = vsel %vm2120, %v2123, %v2126
        %v2128 = vsel %vm2117, nan, %v2127
        %v2129 = vand.u32 2147483647, %v1445
        %vm2130 = vcmp.le.f32.partialorder %v2129, 0.7853982
        %vm2131 = vcmp.lt.s32.totalorder %v1445, 0
        %v2132 = vand.u32 %v1445, 2139095040
        %v2133 = vshrl.u32 %v2132, 23
        %v2134 = vsub.s32 %v2133, 127
        %v2135 = vand.u32 2147483647, %v1445
        %v2136 = vand.u32 %v2135, 8388607
        %v2137 = vor.u32 %v2136, 8388608
        %v2138 = vsub.s32 0, %v2137
        %v2139 = vadd.s32 %v2134, 1
        %vm2140 = vcmp.gt.s32.totalorder %v2139, 0
        %v2141 = vsel %vm2140, %v2139, 0
        %v2142 = vshrl.u32 %v2141, 5
        %v2143 = vand.u32 %v2141, 31
        %v2144 = vsub.s32 32, %v2143
        %v2145 = vshrl.u32 683565275, %v2144
        %v2146 = vshll.u32 683565275, %v2143
        %v2147 = vshrl.u32 2475754826, %v2144
        %v2148 = vor.u32 %v2146, %v2147
        %v2149 = vshll.u32 2475754826, %v2143
        %v2150 = vshrl.u32 2131351028, %v2144
        %v2151 = vor.u32 %v2149, %v2150
        %v2152 = vshll.u32 2131351028, %v2143
        %v2153 = vshrl.u32 2102212464, %v2144
        %v2154 = vor.u32 %v2152, %v2153
        %v2155 = vshll.u32 2102212464, %v2143
        %v2156 = vshrl.u32 920167782, %v2144
        %v2157 = vor.u32 %v2155, %v2156
        %v2158 = vshll.u32 920167782, %v2143
        %v2159 = vshrl.u32 1326507024, %v2144
        %v2160 = vor.u32 %v2158, %v2159
        %vm2161 = vcmp.lt.s32.totalorder %v2142, 1
        %vm2162 = vcmp.lt.s32.totalorder %v2142, 2
        %vm2163 = vcmp.lt.s32.totalorder %v2142, 3
        %vm2164 = vcmp.lt.s32.totalorder %v2142, 4
        %v2165 = vsel %vm2161, %v2145, %v2148
        %v2166 = vsel %vm2164, %v2154, 2102212464
        %v2167 = vsel %vm2163, %v2151, %v2166
        %v2168 = vsel %vm2162, %v2165, %v2167
        %v2169 = vsel %vm2161, %v2148, %v2151
        %v2170 = vsel %vm2164, %v2157, 920167782
        %v2171 = vsel %vm2163, %v2154, %v2170
        %v2172 = vsel %vm2162, %v2169, %v2171
        %v2173 = vsel %vm2161, %v2151, %v2154
        %v2174 = vsel %vm2164, %v2160, 1326507024
        %v2175 = vsel %vm2163, %v2157, %v2174
        %v2176 = vsel %vm2162, %v2173, %v2175
        %v2177 = vshll.u32 %v2137, 8
        %v2178 = vmul.u32.u64.compose %v2177, %v2176
        %v2179 = vextract.low.u32 %v2178
        %v2180 = vextract.high.u32 %v2178
        %v2181 = vmul.u32.u64.compose %v2177, %v2172
        %v2182 = vextract.low.u32 %v2181
        %v2183 = vextract.high.u32 %v2181
        %v2184 = vmul.u32 %v2177, %v2168
        %v2185 = vadd.s32 %v2180, %v2182
        %vm2186 = vc.u32 %v2180, %v2182
        %v2187 = vadd.s32 %v2183, 1
        %v2188 = vsel %vm2186, %v2187, %v2183
        %v2189 = vadd.s32 %v2184, %v2188
        %v2190 = vadd.s32 %v2189, 536870912
        %v2191 = vshrl.u32 %v2190, 30
        %v2192 = vshll.u32 %v2191, 30
        %v2193 = vsub.s32 %v2189, %v2192
        %vm2194 = vcmp.lt.s32.totalorder %v2193, 0
        %v2195 = vsub.s32 0, %v2193
        %v2196 = vsel %vm2194, %v2195, %v2193
        %v2197 = vclz %v2196
        %v2198 = vsub.s32 %v2197, 2
        %vm2199 = vcmp.gt.s32.totalorder 0, %v2198
        %v2200 = vsel %vm2199, 0, %v2198
        %v2201 = vsub.s32 32, %v2200
        %v2202 = vshll.u32 %v2193, %v2200
        %v2203 = vshrl.u32 %v2185, %v2201
        %v2204 = vor.u32 %v2202, %v2203
        %v2205 = vsub.s32 4294967266, %v2200
        %v2206 = vadd.s32 %v2205, 127
        %v2207 = vshll.u32 %v2206, 23
        %v2208 = vor.u32 4788187, %v2207
        %v2209 = vand.u32 2147483647, %v2208
        %v2211 = vcvt.s32.f32 %v2204
        %v2212 = vmul.f32 %v2211, %v2209
        %v2213 = vxor.u32 %v2212, 2147483648
        %v2214 = vsel %vm2131, %v2213, %v2212
        %v2215 = vsub.s32 4, %v2191
        %v2216 = vsel %vm2131, %v2215, %v2191
        %v2217 = vsel %vm2130, %v1445, %v2214
        %v2218 = vsel %vm2130, 0, %v2216
        %v2219 = vcosq.f32.pop %v2217
        %v2220 = vsinq.f32.pop %v2217
        %vm2221 = vweird.f32 %v1445
        %v2222 = vadd.s32 %v2218, 3
        %v2223 = vand.u32 %v2222, 3
        %vm2224 = vcmp.lt.s32.totalorder %v2223, 2
        %vm2225 = vcmp.eq.s32.totalorder %v2223, 0
        %v2226 = vxor.u32 %v2220, 2147483648
        %v2227 = vsel %vm2225, %v2219, %v2226
        %vm2228 = vcmp.eq.s32.totalorder %v2223, 2
        %v2229 = vxor.u32 %v2219, 2147483648
        %v2230 = vsel %vm2228, %v2229, %v2220
        %v2231 = vsel %vm2224, %v2227, %v2230
        %v2232 = vsel %vm2221, nan, %v2231
        %v2233 = vand.u32 2147483647, %v1451
        %vm2234 = vcmp.le.f32.partialorder %v2233, 0.7853982
        %vm2235 = vcmp.lt.s32.totalorder %v1451, 0
        %v2236 = vand.u32 %v1451, 2139095040
        %v2237 = vshrl.u32 %v2236, 23
        %v2238 = vsub.s32 %v2237, 127
        %v2239 = vand.u32 2147483647, %v1451
        %v2240 = vand.u32 %v2239, 8388607
        %v2241 = vor.u32 %v2240, 8388608
        %v2242 = vsub.s32 0, %v2241
        %v2243 = vadd.s32 %v2238, 1
        %vm2244 = vcmp.gt.s32.totalorder %v2243, 0
        %v2245 = vsel %vm2244, %v2243, 0
        %v2246 = vshrl.u32 %v2245, 5
        %v2247 = vand.u32 %v2245, 31
        %v2248 = vsub.s32 32, %v2247
        %v2249 = vshrl.u32 683565275, %v2248
        %v2250 = vshll.u32 683565275, %v2247
        %v2251 = vshrl.u32 2475754826, %v2248
        %v2252 = vor.u32 %v2250, %v2251
        %v2253 = vshll.u32 2475754826, %v2247
        %v2254 = vshrl.u32 2131351028, %v2248
        %v2255 = vor.u32 %v2253, %v2254
        %v2256 = vshll.u32 2131351028, %v2247
        %v2257 = vshrl.u32 2102212464, %v2248
        %v2258 = vor.u32 %v2256, %v2257
        %v2259 = vshll.u32 2102212464, %v2247
        %v2260 = vshrl.u32 920167782, %v2248
        %v2261 = vor.u32 %v2259, %v2260
        %v2262 = vshll.u32 920167782, %v2247
        %v2263 = vshrl.u32 1326507024, %v2248
        %v2264 = vor.u32 %v2262, %v2263
        %vm2265 = vcmp.lt.s32.totalorder %v2246, 1
        %vm2266 = vcmp.lt.s32.totalorder %v2246, 2
        %vm2267 = vcmp.lt.s32.totalorder %v2246, 3
        %vm2268 = vcmp.lt.s32.totalorder %v2246, 4
        %v2269 = vsel %vm2265, %v2249, %v2252
        %v2270 = vsel %vm2268, %v2258, 2102212464
        %v2271 = vsel %vm2267, %v2255, %v2270
        %v2272 = vsel %vm2266, %v2269, %v2271
        %v2273 = vsel %vm2265, %v2252, %v2255
        %v2274 = vsel %vm2268, %v2261, 920167782
        %v2275 = vsel %vm2267, %v2258, %v2274
        %v2276 = vsel %vm2266, %v2273, %v2275
        %v2277 = vsel %vm2265, %v2255, %v2258
        %v2278 = vsel %vm2268, %v2264, 1326507024
        %v2279 = vsel %vm2267, %v2261, %v2278
        %v2280 = vsel %vm2266, %v2277, %v2279
        %v2281 = vshll.u32 %v2241, 8
        %v2282 = vmul.u32.u64.compose %v2281, %v2280
        %v2283 = vextract.low.u32 %v2282
        %v2284 = vextract.high.u32 %v2282
        %v2285 = vmul.u32.u64.compose %v2281, %v2276
        %v2286 = vextract.low.u32 %v2285
        %v2287 = vextract.high.u32 %v2285
        %v2288 = vmul.u32 %v2281, %v2272
        %v2289 = vadd.s32 %v2284, %v2286
        %vm2290 = vc.u32 %v2284, %v2286
        %v2291 = vadd.s32 %v2287, 1
        %v2292 = vsel %vm2290, %v2291, %v2287
        %v2293 = vadd.s32 %v2288, %v2292
        %v2294 = vadd.s32 %v2293, 536870912
        %v2295 = vshrl.u32 %v2294, 30
        %v2296 = vshll.u32 %v2295, 30
        %v2297 = vsub.s32 %v2293, %v2296
        %vm2298 = vcmp.lt.s32.totalorder %v2297, 0
        %v2299 = vsub.s32 0, %v2297
        %v2300 = vsel %vm2298, %v2299, %v2297
        %v2301 = vclz %v2300
        %v2302 = vsub.s32 %v2301, 2
        %vm2303 = vcmp.gt.s32.totalorder 0, %v2302
        %v2304 = vsel %vm2303, 0, %v2302
        %v2305 = vsub.s32 32, %v2304
        %v2306 = vshll.u32 %v2297, %v2304
        %v2307 = vshrl.u32 %v2289, %v2305
        %v2308 = vor.u32 %v2306, %v2307
        %v2309 = vsub.s32 4294967266, %v2304
        %v2310 = vadd.s32 %v2309, 127
        %v2311 = vshll.u32 %v2310, 23
        %v2312 = vor.u32 4788187, %v2311
        %v2313 = vand.u32 2147483647, %v2312
        %v2315 = vcvt.s32.f32 %v2308
        %v2316 = vmul.f32 %v2315, %v2313
        %v2317 = vxor.u32 %v2316, 2147483648
        %v2318 = vsel %vm2235, %v2317, %v2316
        %v2319 = vsub.s32 4, %v2295
        %v2320 = vsel %vm2235, %v2319, %v2295
        %v2321 = vsel %vm2234, %v1451, %v2318
        %v2322 = vsel %vm2234, 0, %v2320
        %v2323 = vcosq.f32.pop %v2321
        %v2324 = vsinq.f32.pop %v2321
        %vm2325 = vweird.f32 %v1451
        %v2326 = vadd.s32 %v2322, 3
        %v2327 = vand.u32 %v2326, 3
        %vm2328 = vcmp.lt.s32.totalorder %v2327, 2
        %vm2329 = vcmp.eq.s32.totalorder %v2327, 0
        %v2330 = vxor.u32 %v2324, 2147483648
        %v2331 = vsel %vm2329, %v2323, %v2330
        %vm2332 = vcmp.eq.s32.totalorder %v2327, 2
        %v2333 = vxor.u32 %v2323, 2147483648
        %v2334 = vsel %vm2332, %v2333, %v2324
        %v2335 = vsel %vm2328, %v2331, %v2334
        %v2336 = vsel %vm2325, nan, %v2335
        %v2337 = vand.u32 2147483647, %v1457
        %vm2338 = vcmp.le.f32.partialorder %v2337, 0.7853982
        %vm2339 = vcmp.lt.s32.totalorder %v1457, 0
        %v2340 = vand.u32 %v1457, 2139095040
        %v2341 = vshrl.u32 %v2340, 23
        %v2342 = vsub.s32 %v2341, 127
        %v2343 = vand.u32 2147483647, %v1457
        %v2344 = vand.u32 %v2343, 8388607
        %v2345 = vor.u32 %v2344, 8388608
        %v2346 = vsub.s32 0, %v2345
        %v2347 = vadd.s32 %v2342, 1
        %vm2348 = vcmp.gt.s32.totalorder %v2347, 0
        %v2349 = vsel %vm2348, %v2347, 0
        %v2350 = vshrl.u32 %v2349, 5
        %v2351 = vand.u32 %v2349, 31
        %v2352 = vsub.s32 32, %v2351
        %v2353 = vshrl.u32 683565275, %v2352
        %v2354 = vshll.u32 683565275, %v2351
        %v2355 = vshrl.u32 2475754826, %v2352
        %v2356 = vor.u32 %v2354, %v2355
        %v2357 = vshll.u32 2475754826, %v2351
        %v2358 = vshrl.u32 2131351028, %v2352
        %v2359 = vor.u32 %v2357, %v2358
        %v2360 = vshll.u32 2131351028, %v2351
        %v2361 = vshrl.u32 2102212464, %v2352
        %v2362 = vor.u32 %v2360, %v2361
        %v2363 = vshll.u32 2102212464, %v2351
        %v2364 = vshrl.u32 920167782, %v2352
        %v2365 = vor.u32 %v2363, %v2364
        %v2366 = vshll.u32 920167782, %v2351
        %v2367 = vshrl.u32 1326507024, %v2352
        %v2368 = vor.u32 %v2366, %v2367
        %vm2369 = vcmp.lt.s32.totalorder %v2350, 1
        %vm2370 = vcmp.lt.s32.totalorder %v2350, 2
        %vm2371 = vcmp.lt.s32.totalorder %v2350, 3
        %vm2372 = vcmp.lt.s32.totalorder %v2350, 4
        %v2373 = vsel %vm2369, %v2353, %v2356
        %v2374 = vsel %vm2372, %v2362, 2102212464
        %v2375 = vsel %vm2371, %v2359, %v2374
        %v2376 = vsel %vm2370, %v2373, %v2375
        %v2377 = vsel %vm2369, %v2356, %v2359
        %v2378 = vsel %vm2372, %v2365, 920167782
        %v2379 = vsel %vm2371, %v2362, %v2378
        %v2380 = vsel %vm2370, %v2377, %v2379
        %v2381 = vsel %vm2369, %v2359, %v2362
        %v2382 = vsel %vm2372, %v2368, 1326507024
        %v2383 = vsel %vm2371, %v2365, %v2382
        %v2384 = vsel %vm2370, %v2381, %v2383
        %v2385 = vshll.u32 %v2345, 8
        %v2386 = vmul.u32.u64.compose %v2385, %v2384
        %v2387 = vextract.low.u32 %v2386
        %v2388 = vextract.high.u32 %v2386
        %v2389 = vmul.u32.u64.compose %v2385, %v2380
        %v2390 = vextract.low.u32 %v2389
        %v2391 = vextract.high.u32 %v2389
        %v2392 = vmul.u32 %v2385, %v2376
        %v2393 = vadd.s32 %v2388, %v2390
        %vm2394 = vc.u32 %v2388, %v2390
        %v2395 = vadd.s32 %v2391, 1
        %v2396 = vsel %vm2394, %v2395, %v2391
        %v2397 = vadd.s32 %v2392, %v2396
        %v2398 = vadd.s32 %v2397, 536870912
        %v2399 = vshrl.u32 %v2398, 30
        %v2400 = vshll.u32 %v2399, 30
        %v2401 = vsub.s32 %v2397, %v2400
        %vm2402 = vcmp.lt.s32.totalorder %v2401, 0
        %v2403 = vsub.s32 0, %v2401
        %v2404 = vsel %vm2402, %v2403, %v2401
        %v2405 = vclz %v2404
        %v2406 = vsub.s32 %v2405, 2
        %vm2407 = vcmp.gt.s32.totalorder 0, %v2406
        %v2408 = vsel %vm2407, 0, %v2406
        %v2409 = vsub.s32 32, %v2408
        %v2410 = vshll.u32 %v2401, %v2408
        %v2411 = vshrl.u32 %v2393, %v2409
        %v2412 = vor.u32 %v2410, %v2411
        %v2413 = vsub.s32 4294967266, %v2408
        %v2414 = vadd.s32 %v2413, 127
        %v2415 = vshll.u32 %v2414, 23
        %v2416 = vor.u32 4788187, %v2415
        %v2417 = vand.u32 2147483647, %v2416
        %v2419 = vcvt.s32.f32 %v2412
        %v2420 = vmul.f32 %v2419, %v2417
        %v2421 = vxor.u32 %v2420, 2147483648
        %v2422 = vsel %vm2339, %v2421, %v2420
        %v2423 = vsub.s32 4, %v2399
        %v2424 = vsel %vm2339, %v2423, %v2399
        %v2425 = vsel %vm2338, %v1457, %v2422
        %v2426 = vsel %vm2338, 0, %v2424
        %v2427 = vcosq.f32.pop %v2425
        %v2428 = vsinq.f32.pop %v2425
        %vm2429 = vweird.f32 %v1457
        %v2430 = vadd.s32 %v2426, 3
        %v2431 = vand.u32 %v2430, 3
        %vm2432 = vcmp.lt.s32.totalorder %v2431, 2
        %vm2433 = vcmp.eq.s32.totalorder %v2431, 0
        %v2434 = vxor.u32 %v2428, 2147483648
        %v2435 = vsel %vm2433, %v2427, %v2434
        %vm2436 = vcmp.eq.s32.totalorder %v2431, 2
        %v2437 = vxor.u32 %v2427, 2147483648
        %v2438 = vsel %vm2436, %v2437, %v2428
        %v2439 = vsel %vm2432, %v2435, %v2438
        %v2440 = vsel %vm2429, nan, %v2439
        %v2441 = vand.u32 2147483647, %v1463
        %vm2442 = vcmp.le.f32.partialorder %v2441, 0.7853982
        %vm2443 = vcmp.lt.s32.totalorder %v1463, 0
        %v2444 = vand.u32 %v1463, 2139095040
        %v2445 = vshrl.u32 %v2444, 23
        %v2446 = vsub.s32 %v2445, 127
        %v2447 = vand.u32 2147483647, %v1463
        %v2448 = vand.u32 %v2447, 8388607
        %v2449 = vor.u32 %v2448, 8388608
        %v2450 = vsub.s32 0, %v2449
        %v2451 = vadd.s32 %v2446, 1
        %vm2452 = vcmp.gt.s32.totalorder %v2451, 0
        %v2453 = vsel %vm2452, %v2451, 0
        %v2454 = vshrl.u32 %v2453, 5
        %v2455 = vand.u32 %v2453, 31
        %v2456 = vsub.s32 32, %v2455
        %v2457 = vshrl.u32 683565275, %v2456
        %v2458 = vshll.u32 683565275, %v2455
        %v2459 = vshrl.u32 2475754826, %v2456
        %v2460 = vor.u32 %v2458, %v2459
        %v2461 = vshll.u32 2475754826, %v2455
        %v2462 = vshrl.u32 2131351028, %v2456
        %v2463 = vor.u32 %v2461, %v2462
        %v2464 = vshll.u32 2131351028, %v2455
        %v2465 = vshrl.u32 2102212464, %v2456
        %v2466 = vor.u32 %v2464, %v2465
        %v2467 = vshll.u32 2102212464, %v2455
        %v2468 = vshrl.u32 920167782, %v2456
        %v2469 = vor.u32 %v2467, %v2468
        %v2470 = vshll.u32 920167782, %v2455
        %v2471 = vshrl.u32 1326507024, %v2456
        %v2472 = vor.u32 %v2470, %v2471
        %vm2473 = vcmp.lt.s32.totalorder %v2454, 1
        %vm2474 = vcmp.lt.s32.totalorder %v2454, 2
        %vm2475 = vcmp.lt.s32.totalorder %v2454, 3
        %vm2476 = vcmp.lt.s32.totalorder %v2454, 4
        %v2477 = vsel %vm2473, %v2457, %v2460
        %v2478 = vsel %vm2476, %v2466, 2102212464
        %v2479 = vsel %vm2475, %v2463, %v2478
        %v2480 = vsel %vm2474, %v2477, %v2479
        %v2481 = vsel %vm2473, %v2460, %v2463
        %v2482 = vsel %vm2476, %v2469, 920167782
        %v2483 = vsel %vm2475, %v2466, %v2482
        %v2484 = vsel %vm2474, %v2481, %v2483
        %v2485 = vsel %vm2473, %v2463, %v2466
        %v2486 = vsel %vm2476, %v2472, 1326507024
        %v2487 = vsel %vm2475, %v2469, %v2486
        %v2488 = vsel %vm2474, %v2485, %v2487
        %v2489 = vshll.u32 %v2449, 8
        %v2490 = vmul.u32.u64.compose %v2489, %v2488
        %v2491 = vextract.low.u32 %v2490
        %v2492 = vextract.high.u32 %v2490
        %v2493 = vmul.u32.u64.compose %v2489, %v2484
        %v2494 = vextract.low.u32 %v2493
        %v2495 = vextract.high.u32 %v2493
        %v2496 = vmul.u32 %v2489, %v2480
        %v2497 = vadd.s32 %v2492, %v2494
        %vm2498 = vc.u32 %v2492, %v2494
        %v2499 = vadd.s32 %v2495, 1
        %v2500 = vsel %vm2498, %v2499, %v2495
        %v2501 = vadd.s32 %v2496, %v2500
        %v2502 = vadd.s32 %v2501, 536870912
        %v2503 = vshrl.u32 %v2502, 30
        %v2504 = vshll.u32 %v2503, 30
        %v2505 = vsub.s32 %v2501, %v2504
        %vm2506 = vcmp.lt.s32.totalorder %v2505, 0
        %v2507 = vsub.s32 0, %v2505
        %v2508 = vsel %vm2506, %v2507, %v2505
        %v2509 = vclz %v2508
        %v2510 = vsub.s32 %v2509, 2
        %vm2511 = vcmp.gt.s32.totalorder 0, %v2510
        %v2512 = vsel %vm2511, 0, %v2510
        %v2513 = vsub.s32 32, %v2512
        %v2514 = vshll.u32 %v2505, %v2512
        %v2515 = vshrl.u32 %v2497, %v2513
        %v2516 = vor.u32 %v2514, %v2515
        %v2517 = vsub.s32 4294967266, %v2512
        %v2518 = vadd.s32 %v2517, 127
        %v2519 = vshll.u32 %v2518, 23
        %v2520 = vor.u32 4788187, %v2519
        %v2521 = vand.u32 2147483647, %v2520
        %v2523 = vcvt.s32.f32 %v2516
        %v2524 = vmul.f32 %v2523, %v2521
        %v2525 = vxor.u32 %v2524, 2147483648
        %v2526 = vsel %vm2443, %v2525, %v2524
        %v2527 = vsub.s32 4, %v2503
        %v2528 = vsel %vm2443, %v2527, %v2503
        %v2529 = vsel %vm2442, %v1463, %v2526
        %v2530 = vsel %vm2442, 0, %v2528
        %v2531 = vcosq.f32.pop %v2529
        %v2532 = vsinq.f32.pop %v2529
        %vm2533 = vweird.f32 %v1463
        %v2534 = vadd.s32 %v2530, 3
        %v2535 = vand.u32 %v2534, 3
        %vm2536 = vcmp.lt.s32.totalorder %v2535, 2
        %vm2537 = vcmp.eq.s32.totalorder %v2535, 0
        %v2538 = vxor.u32 %v2532, 2147483648
        %v2539 = vsel %vm2537, %v2531, %v2538
        %vm2540 = vcmp.eq.s32.totalorder %v2535, 2
        %v2541 = vxor.u32 %v2531, 2147483648
        %v2542 = vsel %vm2540, %v2541, %v2532
        %v2543 = vsel %vm2536, %v2539, %v2542
        %v2544 = vsel %vm2533, nan, %v2543
        %v2545 = vand.u32 2147483647, %v1469
        %vm2546 = vcmp.le.f32.partialorder %v2545, 0.7853982
        %vm2547 = vcmp.lt.s32.totalorder %v1469, 0
        %v2548 = vand.u32 %v1469, 2139095040
        %v2549 = vshrl.u32 %v2548, 23
        %v2550 = vsub.s32 %v2549, 127
        %v2551 = vand.u32 2147483647, %v1469
        %v2552 = vand.u32 %v2551, 8388607
        %v2553 = vor.u32 %v2552, 8388608
        %v2554 = vsub.s32 0, %v2553
        %v2555 = vadd.s32 %v2550, 1
        %vm2556 = vcmp.gt.s32.totalorder %v2555, 0
        %v2557 = vsel %vm2556, %v2555, 0
        %v2558 = vshrl.u32 %v2557, 5
        %v2559 = vand.u32 %v2557, 31
        %v2560 = vsub.s32 32, %v2559
        %v2561 = vshrl.u32 683565275, %v2560
        %v2562 = vshll.u32 683565275, %v2559
        %v2563 = vshrl.u32 2475754826, %v2560
        %v2564 = vor.u32 %v2562, %v2563
        %v2565 = vshll.u32 2475754826, %v2559
        %v2566 = vshrl.u32 2131351028, %v2560
        %v2567 = vor.u32 %v2565, %v2566
        %v2568 = vshll.u32 2131351028, %v2559
        %v2569 = vshrl.u32 2102212464, %v2560
        %v2570 = vor.u32 %v2568, %v2569
        %v2571 = vshll.u32 2102212464, %v2559
        %v2572 = vshrl.u32 920167782, %v2560
        %v2573 = vor.u32 %v2571, %v2572
        %v2574 = vshll.u32 920167782, %v2559
        %v2575 = vshrl.u32 1326507024, %v2560
        %v2576 = vor.u32 %v2574, %v2575
        %vm2577 = vcmp.lt.s32.totalorder %v2558, 1
        %vm2578 = vcmp.lt.s32.totalorder %v2558, 2
        %vm2579 = vcmp.lt.s32.totalorder %v2558, 3
        %vm2580 = vcmp.lt.s32.totalorder %v2558, 4
        %v2581 = vsel %vm2577, %v2561, %v2564
        %v2582 = vsel %vm2580, %v2570, 2102212464
        %v2583 = vsel %vm2579, %v2567, %v2582
        %v2584 = vsel %vm2578, %v2581, %v2583
        %v2585 = vsel %vm2577, %v2564, %v2567
        %v2586 = vsel %vm2580, %v2573, 920167782
        %v2587 = vsel %vm2579, %v2570, %v2586
        %v2588 = vsel %vm2578, %v2585, %v2587
        %v2589 = vsel %vm2577, %v2567, %v2570
        %v2590 = vsel %vm2580, %v2576, 1326507024
        %v2591 = vsel %vm2579, %v2573, %v2590
        %v2592 = vsel %vm2578, %v2589, %v2591
        %v2593 = vshll.u32 %v2553, 8
        %v2594 = vmul.u32.u64.compose %v2593, %v2592
        %v2595 = vextract.low.u32 %v2594
        %v2596 = vextract.high.u32 %v2594
        %v2597 = vmul.u32.u64.compose %v2593, %v2588
        %v2598 = vextract.low.u32 %v2597
        %v2599 = vextract.high.u32 %v2597
        %v2600 = vmul.u32 %v2593, %v2584
        %v2601 = vadd.s32 %v2596, %v2598
        %vm2602 = vc.u32 %v2596, %v2598
        %v2603 = vadd.s32 %v2599, 1
        %v2604 = vsel %vm2602, %v2603, %v2599
        %v2605 = vadd.s32 %v2600, %v2604
        %v2606 = vadd.s32 %v2605, 536870912
        %v2607 = vshrl.u32 %v2606, 30
        %v2608 = vshll.u32 %v2607, 30
        %v2609 = vsub.s32 %v2605, %v2608
        %vm2610 = vcmp.lt.s32.totalorder %v2609, 0
        %v2611 = vsub.s32 0, %v2609
        %v2612 = vsel %vm2610, %v2611, %v2609
        %v2613 = vclz %v2612
        %v2614 = vsub.s32 %v2613, 2
        %vm2615 = vcmp.gt.s32.totalorder 0, %v2614
        %v2616 = vsel %vm2615, 0, %v2614
        %v2617 = vsub.s32 32, %v2616
        %v2618 = vshll.u32 %v2609, %v2616
        %v2619 = vshrl.u32 %v2601, %v2617
        %v2620 = vor.u32 %v2618, %v2619
        %v2621 = vsub.s32 4294967266, %v2616
        %v2622 = vadd.s32 %v2621, 127
        %v2623 = vshll.u32 %v2622, 23
        %v2624 = vor.u32 4788187, %v2623
        %v2625 = vand.u32 2147483647, %v2624
        %v2627 = vcvt.s32.f32 %v2620
        %v2628 = vmul.f32 %v2627, %v2625
        %v2629 = vxor.u32 %v2628, 2147483648
        %v2630 = vsel %vm2547, %v2629, %v2628
        %v2631 = vsub.s32 4, %v2607
        %v2632 = vsel %vm2547, %v2631, %v2607
        %v2633 = vsel %vm2546, %v1469, %v2630
        %v2634 = vsel %vm2546, 0, %v2632
        %v2635 = vcosq.f32.pop %v2633
        %v2636 = vsinq.f32.pop %v2633
        %vm2637 = vweird.f32 %v1469
        %v2638 = vadd.s32 %v2634, 3
        %v2639 = vand.u32 %v2638, 3
        %vm2640 = vcmp.lt.s32.totalorder %v2639, 2
        %vm2641 = vcmp.eq.s32.totalorder %v2639, 0
        %v2642 = vxor.u32 %v2636, 2147483648
        %v2643 = vsel %vm2641, %v2635, %v2642
        %vm2644 = vcmp.eq.s32.totalorder %v2639, 2
        %v2645 = vxor.u32 %v2635, 2147483648
        %v2646 = vsel %vm2644, %v2645, %v2636
        %v2647 = vsel %vm2640, %v2643, %v2646
        %v2648 = vsel %vm2637, nan, %v2647
        %v2649 = vand.u32 2147483647, %v1475
        %vm2650 = vcmp.le.f32.partialorder %v2649, 0.7853982
        %vm2651 = vcmp.lt.s32.totalorder %v1475, 0
        %v2652 = vand.u32 %v1475, 2139095040
        %v2653 = vshrl.u32 %v2652, 23
        %v2654 = vsub.s32 %v2653, 127
        %v2655 = vand.u32 2147483647, %v1475
        %v2656 = vand.u32 %v2655, 8388607
        %v2657 = vor.u32 %v2656, 8388608
        %v2658 = vsub.s32 0, %v2657
        %v2659 = vadd.s32 %v2654, 1
        %vm2660 = vcmp.gt.s32.totalorder %v2659, 0
        %v2661 = vsel %vm2660, %v2659, 0
        %v2662 = vshrl.u32 %v2661, 5
        %v2663 = vand.u32 %v2661, 31
        %v2664 = vsub.s32 32, %v2663
        %v2665 = vshrl.u32 683565275, %v2664
        %v2666 = vshll.u32 683565275, %v2663
        %v2667 = vshrl.u32 2475754826, %v2664
        %v2668 = vor.u32 %v2666, %v2667
        %v2669 = vshll.u32 2475754826, %v2663
        %v2670 = vshrl.u32 2131351028, %v2664
        %v2671 = vor.u32 %v2669, %v2670
        %v2672 = vshll.u32 2131351028, %v2663
        %v2673 = vshrl.u32 2102212464, %v2664
        %v2674 = vor.u32 %v2672, %v2673
        %v2675 = vshll.u32 2102212464, %v2663
        %v2676 = vshrl.u32 920167782, %v2664
        %v2677 = vor.u32 %v2675, %v2676
        %v2678 = vshll.u32 920167782, %v2663
        %v2679 = vshrl.u32 1326507024, %v2664
        %v2680 = vor.u32 %v2678, %v2679
        %vm2681 = vcmp.lt.s32.totalorder %v2662, 1
        %vm2682 = vcmp.lt.s32.totalorder %v2662, 2
        %vm2683 = vcmp.lt.s32.totalorder %v2662, 3
        %vm2684 = vcmp.lt.s32.totalorder %v2662, 4
        %v2685 = vsel %vm2681, %v2665, %v2668
        %v2686 = vsel %vm2684, %v2674, 2102212464
        %v2687 = vsel %vm2683, %v2671, %v2686
        %v2688 = vsel %vm2682, %v2685, %v2687
        %v2689 = vsel %vm2681, %v2668, %v2671
        %v2690 = vsel %vm2684, %v2677, 920167782
        %v2691 = vsel %vm2683, %v2674, %v2690
        %v2692 = vsel %vm2682, %v2689, %v2691
        %v2693 = vsel %vm2681, %v2671, %v2674
        %v2694 = vsel %vm2684, %v2680, 1326507024
        %v2695 = vsel %vm2683, %v2677, %v2694
        %v2696 = vsel %vm2682, %v2693, %v2695
        %v2697 = vshll.u32 %v2657, 8
        %v2698 = vmul.u32.u64.compose %v2697, %v2696
        %v2699 = vextract.low.u32 %v2698
        %v2700 = vextract.high.u32 %v2698
        %v2701 = vmul.u32.u64.compose %v2697, %v2692
        %v2702 = vextract.low.u32 %v2701
        %v2703 = vextract.high.u32 %v2701
        %v2704 = vmul.u32 %v2697, %v2688
        %v2705 = vadd.s32 %v2700, %v2702
        %vm2706 = vc.u32 %v2700, %v2702
        %v2707 = vadd.s32 %v2703, 1
        %v2708 = vsel %vm2706, %v2707, %v2703
        %v2709 = vadd.s32 %v2704, %v2708
        %v2710 = vadd.s32 %v2709, 536870912
        %v2711 = vshrl.u32 %v2710, 30
        %v2712 = vshll.u32 %v2711, 30
        %v2713 = vsub.s32 %v2709, %v2712
        %vm2714 = vcmp.lt.s32.totalorder %v2713, 0
        %v2715 = vsub.s32 0, %v2713
        %v2716 = vsel %vm2714, %v2715, %v2713
        %v2717 = vclz %v2716
        %v2718 = vsub.s32 %v2717, 2
        %vm2719 = vcmp.gt.s32.totalorder 0, %v2718
        %v2720 = vsel %vm2719, 0, %v2718
        %v2721 = vsub.s32 32, %v2720
        %v2722 = vshll.u32 %v2713, %v2720
        %v2723 = vshrl.u32 %v2705, %v2721
        %v2724 = vor.u32 %v2722, %v2723
        %v2725 = vsub.s32 4294967266, %v2720
        %v2726 = vadd.s32 %v2725, 127
        %v2727 = vshll.u32 %v2726, 23
        %v2728 = vor.u32 4788187, %v2727
        %v2729 = vand.u32 2147483647, %v2728
        %v2731 = vcvt.s32.f32 %v2724
        %v2732 = vmul.f32 %v2731, %v2729
        %v2733 = vxor.u32 %v2732, 2147483648
        %v2734 = vsel %vm2651, %v2733, %v2732
        %v2735 = vsub.s32 4, %v2711
        %v2736 = vsel %vm2651, %v2735, %v2711
        %v2737 = vsel %vm2650, %v1475, %v2734
        %v2738 = vsel %vm2650, 0, %v2736
        %v2739 = vcosq.f32.pop %v2737
        %v2740 = vsinq.f32.pop %v2737
        %vm2741 = vweird.f32 %v1475
        %v2742 = vadd.s32 %v2738, 3
        %v2743 = vand.u32 %v2742, 3
        %vm2744 = vcmp.lt.s32.totalorder %v2743, 2
        %vm2745 = vcmp.eq.s32.totalorder %v2743, 0
        %v2746 = vxor.u32 %v2740, 2147483648
        %v2747 = vsel %vm2745, %v2739, %v2746
        %vm2748 = vcmp.eq.s32.totalorder %v2743, 2
        %v2749 = vxor.u32 %v2739, 2147483648
        %v2750 = vsel %vm2748, %v2749, %v2740
        %v2751 = vsel %vm2744, %v2747, %v2750
        %v2752 = vsel %vm2741, nan, %v2751
        %v2753 = vand.u32 2147483647, %v1481
        %vm2754 = vcmp.le.f32.partialorder %v2753, 0.7853982
        %vm2755 = vcmp.lt.s32.totalorder %v1481, 0
        %v2756 = vand.u32 %v1481, 2139095040
        %v2757 = vshrl.u32 %v2756, 23
        %v2758 = vsub.s32 %v2757, 127
        %v2759 = vand.u32 2147483647, %v1481
        %v2760 = vand.u32 %v2759, 8388607
        %v2761 = vor.u32 %v2760, 8388608
        %v2762 = vsub.s32 0, %v2761
        %v2763 = vadd.s32 %v2758, 1
        %vm2764 = vcmp.gt.s32.totalorder %v2763, 0
        %v2765 = vsel %vm2764, %v2763, 0
        %v2766 = vshrl.u32 %v2765, 5
        %v2767 = vand.u32 %v2765, 31
        %v2768 = vsub.s32 32, %v2767
        %v2769 = vshrl.u32 683565275, %v2768
        %v2770 = vshll.u32 683565275, %v2767
        %v2771 = vshrl.u32 2475754826, %v2768
        %v2772 = vor.u32 %v2770, %v2771
        %v2773 = vshll.u32 2475754826, %v2767
        %v2774 = vshrl.u32 2131351028, %v2768
        %v2775 = vor.u32 %v2773, %v2774
        %v2776 = vshll.u32 2131351028, %v2767
        %v2777 = vshrl.u32 2102212464, %v2768
        %v2778 = vor.u32 %v2776, %v2777
        %v2779 = vshll.u32 2102212464, %v2767
        %v2780 = vshrl.u32 920167782, %v2768
        %v2781 = vor.u32 %v2779, %v2780
        %v2782 = vshll.u32 920167782, %v2767
        %v2783 = vshrl.u32 1326507024, %v2768
        %v2784 = vor.u32 %v2782, %v2783
        %vm2785 = vcmp.lt.s32.totalorder %v2766, 1
        %vm2786 = vcmp.lt.s32.totalorder %v2766, 2
        %vm2787 = vcmp.lt.s32.totalorder %v2766, 3
        %vm2788 = vcmp.lt.s32.totalorder %v2766, 4
        %v2789 = vsel %vm2785, %v2769, %v2772
        %v2790 = vsel %vm2788, %v2778, 2102212464
        %v2791 = vsel %vm2787, %v2775, %v2790
        %v2792 = vsel %vm2786, %v2789, %v2791
        %v2793 = vsel %vm2785, %v2772, %v2775
        %v2794 = vsel %vm2788, %v2781, 920167782
        %v2795 = vsel %vm2787, %v2778, %v2794
        %v2796 = vsel %vm2786, %v2793, %v2795
        %v2797 = vsel %vm2785, %v2775, %v2778
        %v2798 = vsel %vm2788, %v2784, 1326507024
        %v2799 = vsel %vm2787, %v2781, %v2798
        %v2800 = vsel %vm2786, %v2797, %v2799
        %v2801 = vshll.u32 %v2761, 8
        %v2802 = vmul.u32.u64.compose %v2801, %v2800
        %v2803 = vextract.low.u32 %v2802
        %v2804 = vextract.high.u32 %v2802
        %v2805 = vmul.u32.u64.compose %v2801, %v2796
        %v2806 = vextract.low.u32 %v2805
        %v2807 = vextract.high.u32 %v2805
        %v2808 = vmul.u32 %v2801, %v2792
        %v2809 = vadd.s32 %v2804, %v2806
        %vm2810 = vc.u32 %v2804, %v2806
        %v2811 = vadd.s32 %v2807, 1
        %v2812 = vsel %vm2810, %v2811, %v2807
        %v2813 = vadd.s32 %v2808, %v2812
        %v2814 = vadd.s32 %v2813, 536870912
        %v2815 = vshrl.u32 %v2814, 30
        %v2816 = vshll.u32 %v2815, 30
        %v2817 = vsub.s32 %v2813, %v2816
        %vm2818 = vcmp.lt.s32.totalorder %v2817, 0
        %v2819 = vsub.s32 0, %v2817
        %v2820 = vsel %vm2818, %v2819, %v2817
        %v2821 = vclz %v2820
        %v2822 = vsub.s32 %v2821, 2
        %vm2823 = vcmp.gt.s32.totalorder 0, %v2822
        %v2824 = vsel %vm2823, 0, %v2822
        %v2825 = vsub.s32 32, %v2824
        %v2826 = vshll.u32 %v2817, %v2824
        %v2827 = vshrl.u32 %v2809, %v2825
        %v2828 = vor.u32 %v2826, %v2827
        %v2829 = vsub.s32 4294967266, %v2824
        %v2830 = vadd.s32 %v2829, 127
        %v2831 = vshll.u32 %v2830, 23
        %v2832 = vor.u32 4788187, %v2831
        %v2833 = vand.u32 2147483647, %v2832
        %v2835 = vcvt.s32.f32 %v2828
        %v2836 = vmul.f32 %v2835, %v2833
        %v2837 = vxor.u32 %v2836, 2147483648
        %v2838 = vsel %vm2755, %v2837, %v2836
        %v2839 = vsub.s32 4, %v2815
        %v2840 = vsel %vm2755, %v2839, %v2815
        %v2841 = vsel %vm2754, %v1481, %v2838
        %v2842 = vsel %vm2754, 0, %v2840
        %v2843 = vcosq.f32.pop %v2841
        %v2844 = vsinq.f32.pop %v2841
        %vm2845 = vweird.f32 %v1481
        %v2846 = vadd.s32 %v2842, 3
        %v2847 = vand.u32 %v2846, 3
        %vm2848 = vcmp.lt.s32.totalorder %v2847, 2
        %vm2849 = vcmp.eq.s32.totalorder %v2847, 0
        %v2850 = vxor.u32 %v2844, 2147483648
        %v2851 = vsel %vm2849, %v2843, %v2850
        %vm2852 = vcmp.eq.s32.totalorder %v2847, 2
        %v2853 = vxor.u32 %v2843, 2147483648
        %v2854 = vsel %vm2852, %v2853, %v2844
        %v2855 = vsel %vm2848, %v2851, %v2854
        %v2856 = vsel %vm2845, nan, %v2855
        %v2857 = vand.u32 2147483647, %v1487
        %vm2858 = vcmp.le.f32.partialorder %v2857, 0.7853982
        %vm2859 = vcmp.lt.s32.totalorder %v1487, 0
        %v2860 = vand.u32 %v1487, 2139095040
        %v2861 = vshrl.u32 %v2860, 23
        %v2862 = vsub.s32 %v2861, 127
        %v2863 = vand.u32 2147483647, %v1487
        %v2864 = vand.u32 %v2863, 8388607
        %v2865 = vor.u32 %v2864, 8388608
        %v2866 = vsub.s32 0, %v2865
        %v2867 = vadd.s32 %v2862, 1
        %vm2868 = vcmp.gt.s32.totalorder %v2867, 0
        %v2869 = vsel %vm2868, %v2867, 0
        %v2870 = vshrl.u32 %v2869, 5
        %v2871 = vand.u32 %v2869, 31
        %v2872 = vsub.s32 32, %v2871
        %v2873 = vshrl.u32 683565275, %v2872
        %v2874 = vshll.u32 683565275, %v2871
        %v2875 = vshrl.u32 2475754826, %v2872
        %v2876 = vor.u32 %v2874, %v2875
        %v2877 = vshll.u32 2475754826, %v2871
        %v2878 = vshrl.u32 2131351028, %v2872
        %v2879 = vor.u32 %v2877, %v2878
        %v2880 = vshll.u32 2131351028, %v2871
        %v2881 = vshrl.u32 2102212464, %v2872
        %v2882 = vor.u32 %v2880, %v2881
        %v2883 = vshll.u32 2102212464, %v2871
        %v2884 = vshrl.u32 920167782, %v2872
        %v2885 = vor.u32 %v2883, %v2884
        %v2886 = vshll.u32 920167782, %v2871
        %v2887 = vshrl.u32 1326507024, %v2872
        %v2888 = vor.u32 %v2886, %v2887
        %vm2889 = vcmp.lt.s32.totalorder %v2870, 1
        %vm2890 = vcmp.lt.s32.totalorder %v2870, 2
        %vm2891 = vcmp.lt.s32.totalorder %v2870, 3
        %vm2892 = vcmp.lt.s32.totalorder %v2870, 4
        %v2893 = vsel %vm2889, %v2873, %v2876
        %v2894 = vsel %vm2892, %v2882, 2102212464
        %v2895 = vsel %vm2891, %v2879, %v2894
        %v2896 = vsel %vm2890, %v2893, %v2895
        %v2897 = vsel %vm2889, %v2876, %v2879
        %v2898 = vsel %vm2892, %v2885, 920167782
        %v2899 = vsel %vm2891, %v2882, %v2898
        %v2900 = vsel %vm2890, %v2897, %v2899
        %v2901 = vsel %vm2889, %v2879, %v2882
        %v2902 = vsel %vm2892, %v2888, 1326507024
        %v2903 = vsel %vm2891, %v2885, %v2902
        %v2904 = vsel %vm2890, %v2901, %v2903
        %v2905 = vshll.u32 %v2865, 8
        %v2906 = vmul.u32.u64.compose %v2905, %v2904
        %v2907 = vextract.low.u32 %v2906
        %v2908 = vextract.high.u32 %v2906
        %v2909 = vmul.u32.u64.compose %v2905, %v2900
        %v2910 = vextract.low.u32 %v2909
        %v2911 = vextract.high.u32 %v2909
        %v2912 = vmul.u32 %v2905, %v2896
        %v2913 = vadd.s32 %v2908, %v2910
        %vm2914 = vc.u32 %v2908, %v2910
        %v2915 = vadd.s32 %v2911, 1
        %v2916 = vsel %vm2914, %v2915, %v2911
        %v2917 = vadd.s32 %v2912, %v2916
        %v2918 = vadd.s32 %v2917, 536870912
        %v2919 = vshrl.u32 %v2918, 30
        %v2920 = vshll.u32 %v2919, 30
        %v2921 = vsub.s32 %v2917, %v2920
        %vm2922 = vcmp.lt.s32.totalorder %v2921, 0
        %v2923 = vsub.s32 0, %v2921
        %v2924 = vsel %vm2922, %v2923, %v2921
        %v2925 = vclz %v2924
        %v2926 = vsub.s32 %v2925, 2
        %vm2927 = vcmp.gt.s32.totalorder 0, %v2926
        %v2928 = vsel %vm2927, 0, %v2926
        %v2929 = vsub.s32 32, %v2928
        %v2930 = vshll.u32 %v2921, %v2928
        %v2931 = vshrl.u32 %v2913, %v2929
        %v2932 = vor.u32 %v2930, %v2931
        %v2933 = vsub.s32 4294967266, %v2928
        %v2934 = vadd.s32 %v2933, 127
        %v2935 = vshll.u32 %v2934, 23
        %v2936 = vor.u32 4788187, %v2935
        %v2937 = vand.u32 2147483647, %v2936
        %v2939 = vcvt.s32.f32 %v2932
        %v2940 = vmul.f32 %v2939, %v2937
        %v2941 = vxor.u32 %v2940, 2147483648
        %v2942 = vsel %vm2859, %v2941, %v2940
        %v2943 = vsub.s32 4, %v2919
        %v2944 = vsel %vm2859, %v2943, %v2919
        %v2945 = vsel %vm2858, %v1487, %v2942
        %v2946 = vsel %vm2858, 0, %v2944
        %v2947 = vcosq.f32.pop %v2945
        %v2948 = vsinq.f32.pop %v2945
        %vm2949 = vweird.f32 %v1487
        %v2950 = vadd.s32 %v2946, 3
        %v2951 = vand.u32 %v2950, 3
        %vm2952 = vcmp.lt.s32.totalorder %v2951, 2
        %vm2953 = vcmp.eq.s32.totalorder %v2951, 0
        %v2954 = vxor.u32 %v2948, 2147483648
        %v2955 = vsel %vm2953, %v2947, %v2954
        %vm2956 = vcmp.eq.s32.totalorder %v2951, 2
        %v2957 = vxor.u32 %v2947, 2147483648
        %v2958 = vsel %vm2956, %v2957, %v2948
        %v2959 = vsel %vm2952, %v2955, %v2958
        %v2960 = vsel %vm2949, nan, %v2959
        %v2961 = vand.u32 2147483647, %v1493
        %vm2962 = vcmp.le.f32.partialorder %v2961, 0.7853982
        %vm2963 = vcmp.lt.s32.totalorder %v1493, 0
        %v2964 = vand.u32 %v1493, 2139095040
        %v2965 = vshrl.u32 %v2964, 23
        %v2966 = vsub.s32 %v2965, 127
        %v2967 = vand.u32 2147483647, %v1493
        %v2968 = vand.u32 %v2967, 8388607
        %v2969 = vor.u32 %v2968, 8388608
        %v2970 = vsub.s32 0, %v2969
        %v2971 = vadd.s32 %v2966, 1
        %vm2972 = vcmp.gt.s32.totalorder %v2971, 0
        %v2973 = vsel %vm2972, %v2971, 0
        %v2974 = vshrl.u32 %v2973, 5
        %v2975 = vand.u32 %v2973, 31
        %v2976 = vsub.s32 32, %v2975
        %v2977 = vshrl.u32 683565275, %v2976
        %v2978 = vshll.u32 683565275, %v2975
        %v2979 = vshrl.u32 2475754826, %v2976
        %v2980 = vor.u32 %v2978, %v2979
        %v2981 = vshll.u32 2475754826, %v2975
        %v2982 = vshrl.u32 2131351028, %v2976
        %v2983 = vor.u32 %v2981, %v2982
        %v2984 = vshll.u32 2131351028, %v2975
        %v2985 = vshrl.u32 2102212464, %v2976
        %v2986 = vor.u32 %v2984, %v2985
        %v2987 = vshll.u32 2102212464, %v2975
        %v2988 = vshrl.u32 920167782, %v2976
        %v2989 = vor.u32 %v2987, %v2988
        %v2990 = vshll.u32 920167782, %v2975
        %v2991 = vshrl.u32 1326507024, %v2976
        %v2992 = vor.u32 %v2990, %v2991
        %vm2993 = vcmp.lt.s32.totalorder %v2974, 1
        %vm2994 = vcmp.lt.s32.totalorder %v2974, 2
        %vm2995 = vcmp.lt.s32.totalorder %v2974, 3
        %vm2996 = vcmp.lt.s32.totalorder %v2974, 4
        %v2997 = vsel %vm2993, %v2977, %v2980
        %v2998 = vsel %vm2996, %v2986, 2102212464
        %v2999 = vsel %vm2995, %v2983, %v2998
        %v3000 = vsel %vm2994, %v2997, %v2999
        %v3001 = vsel %vm2993, %v2980, %v2983
        %v3002 = vsel %vm2996, %v2989, 920167782
        %v3003 = vsel %vm2995, %v2986, %v3002
        %v3004 = vsel %vm2994, %v3001, %v3003
        %v3005 = vsel %vm2993, %v2983, %v2986
        %v3006 = vsel %vm2996, %v2992, 1326507024
        %v3007 = vsel %vm2995, %v2989, %v3006
        %v3008 = vsel %vm2994, %v3005, %v3007
        %v3009 = vshll.u32 %v2969, 8
        %v3010 = vmul.u32.u64.compose %v3009, %v3008
        %v3011 = vextract.low.u32 %v3010
        %v3012 = vextract.high.u32 %v3010
        %v3013 = vmul.u32.u64.compose %v3009, %v3004
        %v3014 = vextract.low.u32 %v3013
        %v3015 = vextract.high.u32 %v3013
        %v3016 = vmul.u32 %v3009, %v3000
        %v3017 = vadd.s32 %v3012, %v3014
        %vm3018 = vc.u32 %v3012, %v3014
        %v3019 = vadd.s32 %v3015, 1
        %v3020 = vsel %vm3018, %v3019, %v3015
        %v3021 = vadd.s32 %v3016, %v3020
        %v3022 = vadd.s32 %v3021, 536870912
        %v3023 = vshrl.u32 %v3022, 30
        %v3024 = vshll.u32 %v3023, 30
        %v3025 = vsub.s32 %v3021, %v3024
        %vm3026 = vcmp.lt.s32.totalorder %v3025, 0
        %v3027 = vsub.s32 0, %v3025
        %v3028 = vsel %vm3026, %v3027, %v3025
        %v3029 = vclz %v3028
        %v3030 = vsub.s32 %v3029, 2
        %vm3031 = vcmp.gt.s32.totalorder 0, %v3030
        %v3032 = vsel %vm3031, 0, %v3030
        %v3033 = vsub.s32 32, %v3032
        %v3034 = vshll.u32 %v3025, %v3032
        %v3035 = vshrl.u32 %v3017, %v3033
        %v3036 = vor.u32 %v3034, %v3035
        %v3037 = vsub.s32 4294967266, %v3032
        %v3038 = vadd.s32 %v3037, 127
        %v3039 = vshll.u32 %v3038, 23
        %v3040 = vor.u32 4788187, %v3039
        %v3041 = vand.u32 2147483647, %v3040
        %v3043 = vcvt.s32.f32 %v3036
        %v3044 = vmul.f32 %v3043, %v3041
        %v3045 = vxor.u32 %v3044, 2147483648
        %v3046 = vsel %vm2963, %v3045, %v3044
        %v3047 = vsub.s32 4, %v3023
        %v3048 = vsel %vm2963, %v3047, %v3023
        %v3049 = vsel %vm2962, %v1493, %v3046
        %v3050 = vsel %vm2962, 0, %v3048
        %v3051 = vcosq.f32.pop %v3049
        %v3052 = vsinq.f32.pop %v3049
        %vm3053 = vweird.f32 %v1493
        %v3054 = vadd.s32 %v3050, 3
        %v3055 = vand.u32 %v3054, 3
        %vm3056 = vcmp.lt.s32.totalorder %v3055, 2
        %vm3057 = vcmp.eq.s32.totalorder %v3055, 0
        %v3058 = vxor.u32 %v3052, 2147483648
        %v3059 = vsel %vm3057, %v3051, %v3058
        %vm3060 = vcmp.eq.s32.totalorder %v3055, 2
        %v3061 = vxor.u32 %v3051, 2147483648
        %v3062 = vsel %vm3060, %v3061, %v3052
        %v3063 = vsel %vm3056, %v3059, %v3062
        %v3064 = vsel %vm3053, nan, %v3063
        %v3065 = vand.u32 2147483647, %v1499
        %vm3066 = vcmp.le.f32.partialorder %v3065, 0.7853982
        %vm3067 = vcmp.lt.s32.totalorder %v1499, 0
        %v3068 = vand.u32 %v1499, 2139095040
        %v3069 = vshrl.u32 %v3068, 23
        %v3070 = vsub.s32 %v3069, 127
        %v3071 = vand.u32 2147483647, %v1499
        %v3072 = vand.u32 %v3071, 8388607
        %v3073 = vor.u32 %v3072, 8388608
        %v3074 = vsub.s32 0, %v3073
        %v3075 = vadd.s32 %v3070, 1
        %vm3076 = vcmp.gt.s32.totalorder %v3075, 0
        %v3077 = vsel %vm3076, %v3075, 0
        %v3078 = vshrl.u32 %v3077, 5
        %v3079 = vand.u32 %v3077, 31
        %v3080 = vsub.s32 32, %v3079
        %v3081 = vshrl.u32 683565275, %v3080
        %v3082 = vshll.u32 683565275, %v3079
        %v3083 = vshrl.u32 2475754826, %v3080
        %v3084 = vor.u32 %v3082, %v3083
        %v3085 = vshll.u32 2475754826, %v3079
        %v3086 = vshrl.u32 2131351028, %v3080
        %v3087 = vor.u32 %v3085, %v3086
        %v3088 = vshll.u32 2131351028, %v3079
        %v3089 = vshrl.u32 2102212464, %v3080
        %v3090 = vor.u32 %v3088, %v3089
        %v3091 = vshll.u32 2102212464, %v3079
        %v3092 = vshrl.u32 920167782, %v3080
        %v3093 = vor.u32 %v3091, %v3092
        %v3094 = vshll.u32 920167782, %v3079
        %v3095 = vshrl.u32 1326507024, %v3080
        %v3096 = vor.u32 %v3094, %v3095
        %vm3097 = vcmp.lt.s32.totalorder %v3078, 1
        %vm3098 = vcmp.lt.s32.totalorder %v3078, 2
        %vm3099 = vcmp.lt.s32.totalorder %v3078, 3
        %vm3100 = vcmp.lt.s32.totalorder %v3078, 4
        %v3101 = vsel %vm3097, %v3081, %v3084
        %v3102 = vsel %vm3100, %v3090, 2102212464
        %v3103 = vsel %vm3099, %v3087, %v3102
        %v3104 = vsel %vm3098, %v3101, %v3103
        %v3105 = vsel %vm3097, %v3084, %v3087
        %v3106 = vsel %vm3100, %v3093, 920167782
        %v3107 = vsel %vm3099, %v3090, %v3106
        %v3108 = vsel %vm3098, %v3105, %v3107
        %v3109 = vsel %vm3097, %v3087, %v3090
        %v3110 = vsel %vm3100, %v3096, 1326507024
        %v3111 = vsel %vm3099, %v3093, %v3110
        %v3112 = vsel %vm3098, %v3109, %v3111
        %v3113 = vshll.u32 %v3073, 8
        %v3114 = vmul.u32.u64.compose %v3113, %v3112
        %v3115 = vextract.low.u32 %v3114
        %v3116 = vextract.high.u32 %v3114
        %v3117 = vmul.u32.u64.compose %v3113, %v3108
        %v3118 = vextract.low.u32 %v3117
        %v3119 = vextract.high.u32 %v3117
        %v3120 = vmul.u32 %v3113, %v3104
        %v3121 = vadd.s32 %v3116, %v3118
        %vm3122 = vc.u32 %v3116, %v3118
        %v3123 = vadd.s32 %v3119, 1
        %v3124 = vsel %vm3122, %v3123, %v3119
        %v3125 = vadd.s32 %v3120, %v3124
        %v3126 = vadd.s32 %v3125, 536870912
        %v3127 = vshrl.u32 %v3126, 30
        %v3128 = vshll.u32 %v3127, 30
        %v3129 = vsub.s32 %v3125, %v3128
        %vm3130 = vcmp.lt.s32.totalorder %v3129, 0
        %v3131 = vsub.s32 0, %v3129
        %v3132 = vsel %vm3130, %v3131, %v3129
        %v3133 = vclz %v3132
        %v3134 = vsub.s32 %v3133, 2
        %vm3135 = vcmp.gt.s32.totalorder 0, %v3134
        %v3136 = vsel %vm3135, 0, %v3134
        %v3137 = vsub.s32 32, %v3136
        %v3138 = vshll.u32 %v3129, %v3136
        %v3139 = vshrl.u32 %v3121, %v3137
        %v3140 = vor.u32 %v3138, %v3139
        %v3141 = vsub.s32 4294967266, %v3136
        %v3142 = vadd.s32 %v3141, 127
        %v3143 = vshll.u32 %v3142, 23
        %v3144 = vor.u32 4788187, %v3143
        %v3145 = vand.u32 2147483647, %v3144
        %v3147 = vcvt.s32.f32 %v3140
        %v3148 = vmul.f32 %v3147, %v3145
        %v3149 = vxor.u32 %v3148, 2147483648
        %v3150 = vsel %vm3067, %v3149, %v3148
        %v3151 = vsub.s32 4, %v3127
        %v3152 = vsel %vm3067, %v3151, %v3127
        %v3153 = vsel %vm3066, %v1499, %v3150
        %v3154 = vsel %vm3066, 0, %v3152
        %v3155 = vcosq.f32.pop %v3153
        %v3156 = vsinq.f32.pop %v3153
        %vm3157 = vweird.f32 %v1499
        %v3158 = vadd.s32 %v3154, 3
        %v3159 = vand.u32 %v3158, 3
        %vm3160 = vcmp.lt.s32.totalorder %v3159, 2
        %vm3161 = vcmp.eq.s32.totalorder %v3159, 0
        %v3162 = vxor.u32 %v3156, 2147483648
        %v3163 = vsel %vm3161, %v3155, %v3162
        %vm3164 = vcmp.eq.s32.totalorder %v3159, 2
        %v3165 = vxor.u32 %v3155, 2147483648
        %v3166 = vsel %vm3164, %v3165, %v3156
        %v3167 = vsel %vm3160, %v3163, %v3166
        %v3168 = vsel %vm3157, nan, %v3167
        %v3169 = vsel %vm1504, %v1409, %v1608
        %v3170 = vsel %vm1504, %v1415, %v1712
        %v3171 = vsel %vm1504, %v1421, %v1816
        %v3172 = vsel %vm1504, %v1427, %v1920
        %v3173 = vsel %vm1504, %v1433, %v2024
        %v3174 = vsel %vm1504, %v1439, %v2128
        %v3175 = vsel %vm1504, %v1445, %v2232
        %v3176 = vsel %vm1504, %v1451, %v2336
        %v3177 = vsel %vm1504, %v1457, %v2440
        %v3178 = vsel %vm1504, %v1463, %v2544
        %v3179 = vsel %vm1504, %v1469, %v2648
        %v3180 = vsel %vm1504, %v1475, %v2752
        %v3181 = vsel %vm1504, %v1481, %v2856
        %v3182 = vsel %vm1504, %v1487, %v2960
        %v3183 = vsel %vm1504, %v1493, %v3064
        %v3184 = vsel %vm1504, %v1499, %v3168
        %v3185 = vld [vmem:[%s3] sm:$0xff]
        %v3186 = vld [vmem:[%s3 + $0x8] sm:$0xff]
        %v3187 = vld [vmem:[%s3 + $0x10] sm:$0xff]
        %v3188 = vld [vmem:[%s3 + $0x18] sm:$0xff]
        %v3189 = vld [vmem:[%s3 + $0x20] sm:$0xff]
        %v3190 = vld [vmem:[%s3 + $0x28] sm:$0xff]
        %v3191 = vld [vmem:[%s3 + $0x30] sm:$0xff]
        %v3192 = vld [vmem:[%s3 + $0x38] sm:$0x7f]
        %v3193 = vld [vmem:[%s4] sm:$0x1]
        %v3195 = vlaneseq
        %v3196 = vshrl.u32 %v3195, 7
        %v3197 = vsub.s32 0, %v3196
        %v3198 = vrot.slane %v3193, %v3197
        %vm3200 = vcmask 515072
        %v3202 = vsel %vm3200, %v3169, 0
        %v3205 = vsel %vm3200, %v3170, 0
        %v3208 = vsel %vm3200, %v3171, 0
        %v3211 = vsel %vm3200, %v3172, 0
        %v3214 = vsel %vm3200, %v3173, 0
        %v3217 = vsel %vm3200, %v3174, 0
        %v3220 = vsel %vm3200, %v3175, 0
        %v3223 = vsel %vm3200, %v3176, 0
        %v3226 = vsel %vm3200, %v3177, 0
        %v3229 = vsel %vm3200, %v3178, 0
        %v3232 = vsel %vm3200, %v3179, 0
        %v3235 = vsel %vm3200, %v3180, 0
        %v3238 = vsel %vm3200, %v3181, 0
        %v3241 = vsel %vm3200, %v3182, 0
        %v3244 = vsel %vm3200, %v3183, 0
        %v3247 = vsel %vm3200, %v3184, 0
        %vm3249 = vcmask 1046528
        %v3251 = vsel %vm3249, %v3192, 0
        %3253 = vmatprep.subr.mxu0 0.0
        %3254 = vmatpush1.msra.mxu0 0.0
        %3255 = vmatprep.subr.mxu0 0.0
        %3256 = vmatpush1.msra.mxu0 0.0
        %3257 = vmatprep.subr.mxu0 0.0
        %3258 = vmatpush1.msra.mxu0 0.0
        %3259 = vmatprep.subr.mxu0 0.0
        %3260 = vmatpush1.msra.mxu0 0.0
        %3261 = vmatprep.subr.mxu0 0.0
        %3262 = vmatpush1.msra.mxu0 0.0
        %3263 = vmatprep.subr.mxu0 0.0
        %3264 = vmatpush1.msra.mxu0 0.0
        %3265 = vmatprep.subr.mxu0 0.0
        %3266 = vmatpush1.msra.mxu0 0.0
        %3267 = vmatprep.subr.mxu0 0.0
        %3268 = vmatpush1.msra.mxu0 0.0
        %3269 = vmatprep.subr.mxu0 0.0
        %3270 = vmatpush1.msra.mxu0 %v3251
        %3271 = vmatprep.subr.mxu0 0.0
        %3272 = vmatpush1.msra.mxu0 %v3191
        %3273 = vmatprep.subr.mxu0 0.0
        %3274 = vmatpush1.msra.mxu0 %v3190
        %3275 = vmatprep.subr.mxu0 0.0
        %3276 = vmatpush1.msra.mxu0 %v3189
        %3277 = vmatprep.subr.mxu0 0.0
        %3278 = vmatpush1.msra.mxu0 %v3188
        %3279 = vmatprep.subr.mxu0 0.0
        %3280 = vmatpush1.msra.mxu0 %v3187
        %3281 = vmatprep.subr.mxu0 0.0
        %3282 = vmatpush1.msra.mxu0 %v3186
        %3283 = vmatprep.subr.mxu0 0.0
        %3284 = vmatpush1.msra.mxu0 %v3185
        %3285 = vmatprep.subr.mxu0 0.0
        %3286 = vmatpush2.msra.mxu0 0.0
        %3287 = vmatprep.subr.mxu0 0.0
        %3288 = vmatpush2.msra.mxu0 0.0
        %3289 = vmatprep.subr.mxu0 0.0
        %3290 = vmatpush2.msra.mxu0 0.0
        %3291 = vmatprep.subr.mxu0 0.0
        %3292 = vmatpush2.msra.mxu0 0.0
        %3293 = vmatprep.subr.mxu0 0.0
        %3294 = vmatpush2.msra.mxu0 0.0
        %3295 = vmatprep.subr.mxu0 0.0
        %3296 = vmatpush2.msra.mxu0 0.0
        %3297 = vmatprep.subr.mxu0 0.0
        %3298 = vmatpush2.msra.mxu0 0.0
        %3299 = vmatprep.subr.mxu0 0.0
        %3300 = vmatpush2.msra.mxu0 0.0
        %3301 = vmatprep.subr.mxu0 0.0
        %3302 = vmatpush2.msra.mxu0 0.0
        %3303 = vmatprep.subr.mxu0 0.0
        %3304 = vmatpush2.msra.mxu0 0.0
        %3305 = vmatprep.subr.mxu0 0.0
        %3306 = vmatpush2.msra.mxu0 0.0
        %3307 = vmatprep.subr.mxu0 0.0
        %3308 = vmatpush2.msra.mxu0 0.0
        %3309 = vmatprep.subr.mxu0 0.0
        %3310 = vmatpush2.msra.mxu0 0.0
        %3311 = vmatprep.subr.mxu0 0.0
        %3312 = vmatpush2.msra.mxu0 0.0
        %3313 = vmatprep.subr.mxu0 0.0
        %3314 = vmatpush2.msra.mxu0 0.0
        %3315 = vmatprep.subr.mxu0 0.0
        %3316 = vmatpush2.msra.mxu0 0.0
        %3317 = vmatprep.mubr.f32.mxu0 0.0
        %3318 = vmatmul.mubr.f32.gmra.mxu0 %v3202
        %v3319 = vpop.f32.mrf.mxu0
        %v3320 = vadd.f32 %v3198, %v3319
        %v3321 = vpop.f32.mrf.mxu0
        %3322 = vmatprep.mubr.f32.mxu0 0.0
        %3323 = vmatmul.mubr.f32.gmra.mxu0 %v3205
        %v3324 = vpop.f32.mrf.mxu0
        %v3325 = vadd.f32 %v3198, %v3324
        %v3326 = vpop.f32.mrf.mxu0
        %3327 = vmatprep.mubr.f32.mxu0 0.0
        %3328 = vmatmul.mubr.f32.gmra.mxu0 %v3208
        %v3329 = vpop.f32.mrf.mxu0
        %v3330 = vadd.f32 %v3198, %v3329
        %v3331 = vpop.f32.mrf.mxu0
        %3332 = vmatprep.mubr.f32.mxu0 0.0
        %3333 = vmatmul.mubr.f32.gmra.mxu0 %v3211
        %v3334 = vpop.f32.mrf.mxu0
        %v3335 = vadd.f32 %v3198, %v3334
        %v3336 = vpop.f32.mrf.mxu0
        %3337 = vmatprep.mubr.f32.mxu0 0.0
        %3338 = vmatmul.mubr.f32.gmra.mxu0 %v3214
        %v3339 = vpop.f32.mrf.mxu0
        %v3340 = vadd.f32 %v3198, %v3339
        %v3341 = vpop.f32.mrf.mxu0
        %3342 = vmatprep.mubr.f32.mxu0 0.0
        %3343 = vmatmul.mubr.f32.gmra.mxu0 %v3217
        %v3344 = vpop.f32.mrf.mxu0
        %v3345 = vadd.f32 %v3198, %v3344
        %v3346 = vpop.f32.mrf.mxu0
        %3347 = vmatprep.mubr.f32.mxu0 0.0
        %3348 = vmatmul.mubr.f32.gmra.mxu0 %v3220
        %v3349 = vpop.f32.mrf.mxu0
        %v3350 = vadd.f32 %v3198, %v3349
        %v3351 = vpop.f32.mrf.mxu0
        %3352 = vmatprep.mubr.f32.mxu0 0.0
        %3353 = vmatmul.mubr.f32.gmra.mxu0 %v3223
        %v3354 = vpop.f32.mrf.mxu0
        %v3355 = vadd.f32 %v3198, %v3354
        %v3356 = vpop.f32.mrf.mxu0
        %3357 = vmatprep.mubr.f32.mxu0 0.0
        %3358 = vmatmul.mubr.f32.gmra.mxu0 %v3226
        %v3359 = vpop.f32.mrf.mxu0
        %v3360 = vadd.f32 %v3198, %v3359
        %v3361 = vpop.f32.mrf.mxu0
        %3362 = vmatprep.mubr.f32.mxu0 0.0
        %3363 = vmatmul.mubr.f32.gmra.mxu0 %v3229
        %v3364 = vpop.f32.mrf.mxu0
        %v3365 = vadd.f32 %v3198, %v3364
        %v3366 = vpop.f32.mrf.mxu0
        %3367 = vmatprep.mubr.f32.mxu0 0.0
        %3368 = vmatmul.mubr.f32.gmra.mxu0 %v3232
        %v3369 = vpop.f32.mrf.mxu0
        %v3370 = vadd.f32 %v3198, %v3369
        %v3371 = vpop.f32.mrf.mxu0
        %3372 = vmatprep.mubr.f32.mxu0 0.0
        %3373 = vmatmul.mubr.f32.gmra.mxu0 %v3235
        %v3374 = vpop.f32.mrf.mxu0
        %v3375 = vadd.f32 %v3198, %v3374
        %v3376 = vpop.f32.mrf.mxu0
        %3377 = vmatprep.mubr.f32.mxu0 0.0
        %3378 = vmatmul.mubr.f32.gmra.mxu0 %v3238
        %v3379 = vpop.f32.mrf.mxu0
        %v3380 = vadd.f32 %v3198, %v3379
        %v3381 = vpop.f32.mrf.mxu0
        %3382 = vmatprep.mubr.f32.mxu0 0.0
        %3383 = vmatmul.mubr.f32.gmra.mxu0 %v3241
        %v3384 = vpop.f32.mrf.mxu0
        %v3385 = vadd.f32 %v3198, %v3384
        %v3386 = vpop.f32.mrf.mxu0
        %3387 = vmatprep.mubr.f32.mxu0 0.0
        %3388 = vmatmul.mubr.f32.gmra.mxu0 %v3244
        %v3389 = vpop.f32.mrf.mxu0
        %v3390 = vadd.f32 %v3198, %v3389
        %v3391 = vpop.f32.mrf.mxu0
        %3392 = vmatprep.mubr.f32.mxu0 0.0
        %3393 = vmatmul.mubr.f32.gmra.mxu0 %v3247
        %v3394 = vpop.f32.mrf.mxu0
        %v3395 = vadd.f32 %v3198, %v3394
        %v3396 = vpop.f32.mrf.mxu0
        %3397 = vdwg.mxu0
        %v3398 = vmax.f32 %v3320, 0.0
        %v3399 = vmax.f32 %v3325, 0.0
        %v3400 = vmax.f32 %v3330, 0.0
        %v3401 = vmax.f32 %v3335, 0.0
        %v3402 = vmax.f32 %v3340, 0.0
        %v3403 = vmax.f32 %v3345, 0.0
        %v3404 = vmax.f32 %v3350, 0.0
        %v3405 = vmax.f32 %v3355, 0.0
        %v3406 = vmax.f32 %v3360, 0.0
        %v3407 = vmax.f32 %v3365, 0.0
        %v3408 = vmax.f32 %v3370, 0.0
        %v3409 = vmax.f32 %v3375, 0.0
        %v3410 = vmax.f32 %v3380, 0.0
        %v3411 = vmax.f32 %v3385, 0.0
        %v3412 = vmax.f32 %v3390, 0.0
        %v3413 = vmax.f32 %v3395, 0.0
        %v3414 = vld [vmem:[%s5] sm:$0xff]
        %v3415 = vld [vmem:[%s5 + $0x8] sm:$0xff]
        %v3416 = vld [vmem:[%s5 + $0x10] sm:$0xff]
        %v3417 = vld [vmem:[%s5 + $0x18] sm:$0xff]
        %v3418 = vld [vmem:[%s5 + $0x20] sm:$0xff]
        %v3419 = vld [vmem:[%s5 + $0x28] sm:$0xff]
        %v3420 = vld [vmem:[%s5 + $0x30] sm:$0xff]
        %v3421 = vld [vmem:[%s5 + $0x38] sm:$0xff]
        %v3422 = vld [vmem:[%s6] sm:$0x1]
        %v3424 = vlaneseq
        %v3425 = vshrl.u32 %v3424, 7
        %v3426 = vsub.s32 0, %v3425
        %v3427 = vrot.slane %v3422, %v3426
        %vm3429 = vcmask 523264
        %v3431 = vsel %vm3429, %v3398, 0
        %v3434 = vsel %vm3429, %v3399, 0
        %v3437 = vsel %vm3429, %v3400, 0
        %v3440 = vsel %vm3429, %v3401, 0
        %v3443 = vsel %vm3429, %v3402, 0
        %v3446 = vsel %vm3429, %v3403, 0
        %v3449 = vsel %vm3429, %v3404, 0
        %v3452 = vsel %vm3429, %v3405, 0
        %v3455 = vsel %vm3429, %v3406, 0
        %v3458 = vsel %vm3429, %v3407, 0
        %v3461 = vsel %vm3429, %v3408, 0
        %v3464 = vsel %vm3429, %v3409, 0
        %v3467 = vsel %vm3429, %v3410, 0
        %v3470 = vsel %vm3429, %v3411, 0
        %v3473 = vsel %vm3429, %v3412, 0
        %v3476 = vsel %vm3429, %v3413, 0
        %3478 = vmatprep.subr.mxu0 0.0
        %3479 = vmatpush1.msra.mxu0 0.0
        %3480 = vmatprep.subr.mxu0 0.0
        %3481 = vmatpush1.msra.mxu0 0.0
        %3482 = vmatprep.subr.mxu0 0.0
        %3483 = vmatpush1.msra.mxu0 0.0
        %3484 = vmatprep.subr.mxu0 0.0
        %3485 = vmatpush1.msra.mxu0 0.0
        %3486 = vmatprep.subr.mxu0 0.0
        %3487 = vmatpush1.msra.mxu0 0.0
        %3488 = vmatprep.subr.mxu0 0.0
        %3489 = vmatpush1.msra.mxu0 0.0
        %3490 = vmatprep.subr.mxu0 0.0
        %3491 = vmatpush1.msra.mxu0 0.0
        %3492 = vmatprep.subr.mxu0 0.0
        %3493 = vmatpush1.msra.mxu0 0.0
        %3494 = vmatprep.subr.mxu0 0.0
        %3495 = vmatpush1.msra.mxu0 %v3421
        %3496 = vmatprep.subr.mxu0 0.0
        %3497 = vmatpush1.msra.mxu0 %v3420
        %3498 = vmatprep.subr.mxu0 0.0
        %3499 = vmatpush1.msra.mxu0 %v3419
        %3500 = vmatprep.subr.mxu0 0.0
        %3501 = vmatpush1.msra.mxu0 %v3418
        %3502 = vmatprep.subr.mxu0 0.0
        %3503 = vmatpush1.msra.mxu0 %v3417
        %3504 = vmatprep.subr.mxu0 0.0
        %3505 = vmatpush1.msra.mxu0 %v3416
        %3506 = vmatprep.subr.mxu0 0.0
        %3507 = vmatpush1.msra.mxu0 %v3415
        %3508 = vmatprep.subr.mxu0 0.0
        %3509 = vmatpush1.msra.mxu0 %v3414
        %3510 = vmatprep.subr.mxu0 0.0
        %3511 = vmatpush2.msra.mxu0 0.0
        %3512 = vmatprep.subr.mxu0 0.0
        %3513 = vmatpush2.msra.mxu0 0.0
        %3514 = vmatprep.subr.mxu0 0.0
        %3515 = vmatpush2.msra.mxu0 0.0
        %3516 = vmatprep.subr.mxu0 0.0
        %3517 = vmatpush2.msra.mxu0 0.0
        %3518 = vmatprep.subr.mxu0 0.0
        %3519 = vmatpush2.msra.mxu0 0.0
        %3520 = vmatprep.subr.mxu0 0.0
        %3521 = vmatpush2.msra.mxu0 0.0
        %3522 = vmatprep.subr.mxu0 0.0
        %3523 = vmatpush2.msra.mxu0 0.0
        %3524 = vmatprep.subr.mxu0 0.0
        %3525 = vmatpush2.msra.mxu0 0.0
        %3526 = vmatprep.subr.mxu0 0.0
        %3527 = vmatpush2.msra.mxu0 0.0
        %3528 = vmatprep.subr.mxu0 0.0
        %3529 = vmatpush2.msra.mxu0 0.0
        %3530 = vmatprep.subr.mxu0 0.0
        %3531 = vmatpush2.msra.mxu0 0.0
        %3532 = vmatprep.subr.mxu0 0.0
        %3533 = vmatpush2.msra.mxu0 0.0
        %3534 = vmatprep.subr.mxu0 0.0
        %3535 = vmatpush2.msra.mxu0 0.0
        %3536 = vmatprep.subr.mxu0 0.0
        %3537 = vmatpush2.msra.mxu0 0.0
        %3538 = vmatprep.subr.mxu0 0.0
        %3539 = vmatpush2.msra.mxu0 0.0
        %3540 = vmatprep.subr.mxu0 0.0
        %3541 = vmatpush2.msra.mxu0 0.0
        %3542 = vmatprep.mubr.f32.mxu0 0.0
        %3543 = vmatmul.mubr.f32.gmra.mxu0 %v3431
        %v3544 = vpop.f32.mrf.mxu0
        %v3545 = vadd.f32 %v3427, %v3544
        %v3546 = vpop.f32.mrf.mxu0
        %3547 = vmatprep.mubr.f32.mxu0 0.0
        %3548 = vmatmul.mubr.f32.gmra.mxu0 %v3434
        %v3549 = vpop.f32.mrf.mxu0
        %v3550 = vadd.f32 %v3427, %v3549
        %v3551 = vpop.f32.mrf.mxu0
        %3552 = vmatprep.mubr.f32.mxu0 0.0
        %3553 = vmatmul.mubr.f32.gmra.mxu0 %v3437
        %v3554 = vpop.f32.mrf.mxu0
        %v3555 = vadd.f32 %v3427, %v3554
        %v3556 = vpop.f32.mrf.mxu0
        %3557 = vmatprep.mubr.f32.mxu0 0.0
        %3558 = vmatmul.mubr.f32.gmra.mxu0 %v3440
        %v3559 = vpop.f32.mrf.mxu0
        %v3560 = vadd.f32 %v3427, %v3559
        %v3561 = vpop.f32.mrf.mxu0
        %3562 = vmatprep.mubr.f32.mxu0 0.0
        %3563 = vmatmul.mubr.f32.gmra.mxu0 %v3443
        %v3564 = vpop.f32.mrf.mxu0
        %v3565 = vadd.f32 %v3427, %v3564
        %v3566 = vpop.f32.mrf.mxu0
        %3567 = vmatprep.mubr.f32.mxu0 0.0
        %3568 = vmatmul.mubr.f32.gmra.mxu0 %v3446
        %v3569 = vpop.f32.mrf.mxu0
        %v3570 = vadd.f32 %v3427, %v3569
        %v3571 = vpop.f32.mrf.mxu0
        %3572 = vmatprep.mubr.f32.mxu0 0.0
        %3573 = vmatmul.mubr.f32.gmra.mxu0 %v3449
        %v3574 = vpop.f32.mrf.mxu0
        %v3575 = vadd.f32 %v3427, %v3574
        %v3576 = vpop.f32.mrf.mxu0
        %3577 = vmatprep.mubr.f32.mxu0 0.0
        %3578 = vmatmul.mubr.f32.gmra.mxu0 %v3452
        %v3579 = vpop.f32.mrf.mxu0
        %v3580 = vadd.f32 %v3427, %v3579
        %v3581 = vpop.f32.mrf.mxu0
        %3582 = vmatprep.mubr.f32.mxu0 0.0
        %3583 = vmatmul.mubr.f32.gmra.mxu0 %v3455
        %v3584 = vpop.f32.mrf.mxu0
        %v3585 = vadd.f32 %v3427, %v3584
        %v3586 = vpop.f32.mrf.mxu0
        %3587 = vmatprep.mubr.f32.mxu0 0.0
        %3588 = vmatmul.mubr.f32.gmra.mxu0 %v3458
        %v3589 = vpop.f32.mrf.mxu0
        %v3590 = vadd.f32 %v3427, %v3589
        %v3591 = vpop.f32.mrf.mxu0
        %3592 = vmatprep.mubr.f32.mxu0 0.0
        %3593 = vmatmul.mubr.f32.gmra.mxu0 %v3461
        %v3594 = vpop.f32.mrf.mxu0
        %v3595 = vadd.f32 %v3427, %v3594
        %v3596 = vpop.f32.mrf.mxu0
        %3597 = vmatprep.mubr.f32.mxu0 0.0
        %3598 = vmatmul.mubr.f32.gmra.mxu0 %v3464
        %v3599 = vpop.f32.mrf.mxu0
        %v3600 = vadd.f32 %v3427, %v3599
        %v3601 = vpop.f32.mrf.mxu0
        %3602 = vmatprep.mubr.f32.mxu0 0.0
        %3603 = vmatmul.mubr.f32.gmra.mxu0 %v3467
        %v3604 = vpop.f32.mrf.mxu0
        %v3605 = vadd.f32 %v3427, %v3604
        %v3606 = vpop.f32.mrf.mxu0
        %3607 = vmatprep.mubr.f32.mxu0 0.0
        %3608 = vmatmul.mubr.f32.gmra.mxu0 %v3470
        %v3609 = vpop.f32.mrf.mxu0
        %v3610 = vadd.f32 %v3427, %v3609
        %v3611 = vpop.f32.mrf.mxu0
        %3612 = vmatprep.mubr.f32.mxu0 0.0
        %3613 = vmatmul.mubr.f32.gmra.mxu0 %v3473
        %v3614 = vpop.f32.mrf.mxu0
        %v3615 = vadd.f32 %v3427, %v3614
        %v3616 = vpop.f32.mrf.mxu0
        %3617 = vmatprep.mubr.f32.mxu0 0.0
        %3618 = vmatmul.mubr.f32.gmra.mxu0 %v3476
        %v3619 = vpop.f32.mrf.mxu0
        %v3620 = vadd.f32 %v3427, %v3619
        %v3621 = vpop.f32.mrf.mxu0
        %3622 = vdwg.mxu0
        %v3623 = vmax.f32 %v3545, 0.0
        %v3624 = vmax.f32 %v3550, 0.0
        %v3625 = vmax.f32 %v3555, 0.0
        %v3626 = vmax.f32 %v3560, 0.0
        %v3627 = vmax.f32 %v3565, 0.0
        %v3628 = vmax.f32 %v3570, 0.0
        %v3629 = vmax.f32 %v3575, 0.0
        %v3630 = vmax.f32 %v3580, 0.0
        %v3631 = vmax.f32 %v3585, 0.0
        %v3632 = vmax.f32 %v3590, 0.0
        %v3633 = vmax.f32 %v3595, 0.0
        %v3634 = vmax.f32 %v3600, 0.0
        %v3635 = vmax.f32 %v3605, 0.0
        %v3636 = vmax.f32 %v3610, 0.0
        %v3637 = vmax.f32 %v3615, 0.0
        %v3638 = vmax.f32 %v3620, 0.0
        %v3639 = vld [vmem:[%s7] sm:$0xff]
        %v3640 = vld [vmem:[%s7 + $0x8] sm:$0xff]
        %v3641 = vld [vmem:[%s7 + $0x10] sm:$0xff]
        %v3642 = vld [vmem:[%s7 + $0x18] sm:$0xff]
        %v3643 = vld [vmem:[%s7 + $0x20] sm:$0xff]
        %v3644 = vld [vmem:[%s7 + $0x28] sm:$0xff]
        %v3645 = vld [vmem:[%s7 + $0x30] sm:$0xff]
        %v3646 = vld [vmem:[%s7 + $0x38] sm:$0xff]
        %v3647 = vld [vmem:[%s8] sm:$0x1]
        %v3649 = vlaneseq
        %v3650 = vshrl.u32 %v3649, 7
        %v3651 = vsub.s32 0, %v3650
        %v3652 = vrot.slane %v3647, %v3651
        %v3655 = vsel %vm3429, %v3623, 0
        %v3658 = vsel %vm3429, %v3624, 0
        %v3661 = vsel %vm3429, %v3625, 0
        %v3664 = vsel %vm3429, %v3626, 0
        %v3667 = vsel %vm3429, %v3627, 0
        %v3670 = vsel %vm3429, %v3628, 0
        %v3673 = vsel %vm3429, %v3629, 0
        %v3676 = vsel %vm3429, %v3630, 0
        %v3679 = vsel %vm3429, %v3631, 0
        %v3682 = vsel %vm3429, %v3632, 0
        %v3685 = vsel %vm3429, %v3633, 0
        %v3688 = vsel %vm3429, %v3634, 0
        %v3691 = vsel %vm3429, %v3635, 0
        %v3694 = vsel %vm3429, %v3636, 0
        %v3697 = vsel %vm3429, %v3637, 0
        %v3700 = vsel %vm3429, %v3638, 0
        %3702 = vmatprep.subr.mxu0 0.0
        %3703 = vmatpush1.msra.mxu0 0.0
        %3704 = vmatprep.subr.mxu0 0.0
        %3705 = vmatpush1.msra.mxu0 0.0
        %3706 = vmatprep.subr.mxu0 0.0
        %3707 = vmatpush1.msra.mxu0 0.0
        %3708 = vmatprep.subr.mxu0 0.0
        %3709 = vmatpush1.msra.mxu0 0.0
        %3710 = vmatprep.subr.mxu0 0.0
        %3711 = vmatpush1.msra.mxu0 0.0
        %3712 = vmatprep.subr.mxu0 0.0
        %3713 = vmatpush1.msra.mxu0 0.0
        %3714 = vmatprep.subr.mxu0 0.0
        %3715 = vmatpush1.msra.mxu0 0.0
        %3716 = vmatprep.subr.mxu0 0.0
        %3717 = vmatpush1.msra.mxu0 0.0
        %3718 = vmatprep.subr.mxu0 0.0
        %3719 = vmatpush1.msra.mxu0 %v3646
        %3720 = vmatprep.subr.mxu0 0.0
        %3721 = vmatpush1.msra.mxu0 %v3645
        %3722 = vmatprep.subr.mxu0 0.0
        %3723 = vmatpush1.msra.mxu0 %v3644
        %3724 = vmatprep.subr.mxu0 0.0
        %3725 = vmatpush1.msra.mxu0 %v3643
        %3726 = vmatprep.subr.mxu0 0.0
        %3727 = vmatpush1.msra.mxu0 %v3642
        %3728 = vmatprep.subr.mxu0 0.0
        %3729 = vmatpush1.msra.mxu0 %v3641
        %3730 = vmatprep.subr.mxu0 0.0
        %3731 = vmatpush1.msra.mxu0 %v3640
        %3732 = vmatprep.subr.mxu0 0.0
        %3733 = vmatpush1.msra.mxu0 %v3639
        %3734 = vmatprep.subr.mxu0 0.0
        %3735 = vmatpush2.msra.mxu0 0.0
        %3736 = vmatprep.subr.mxu0 0.0
        %3737 = vmatpush2.msra.mxu0 0.0
        %3738 = vmatprep.subr.mxu0 0.0
        %3739 = vmatpush2.msra.mxu0 0.0
        %3740 = vmatprep.subr.mxu0 0.0
        %3741 = vmatpush2.msra.mxu0 0.0
        %3742 = vmatprep.subr.mxu0 0.0
        %3743 = vmatpush2.msra.mxu0 0.0
        %3744 = vmatprep.subr.mxu0 0.0
        %3745 = vmatpush2.msra.mxu0 0.0
        %3746 = vmatprep.subr.mxu0 0.0
        %3747 = vmatpush2.msra.mxu0 0.0
        %3748 = vmatprep.subr.mxu0 0.0
        %3749 = vmatpush2.msra.mxu0 0.0
        %3750 = vmatprep.subr.mxu0 0.0
        %3751 = vmatpush2.msra.mxu0 0.0
        %3752 = vmatprep.subr.mxu0 0.0
        %3753 = vmatpush2.msra.mxu0 0.0
        %3754 = vmatprep.subr.mxu0 0.0
        %3755 = vmatpush2.msra.mxu0 0.0
        %3756 = vmatprep.subr.mxu0 0.0
        %3757 = vmatpush2.msra.mxu0 0.0
        %3758 = vmatprep.subr.mxu0 0.0
        %3759 = vmatpush2.msra.mxu0 0.0
        %3760 = vmatprep.subr.mxu0 0.0
        %3761 = vmatpush2.msra.mxu0 0.0
        %3762 = vmatprep.subr.mxu0 0.0
        %3763 = vmatpush2.msra.mxu0 0.0
        %3764 = vmatprep.subr.mxu0 0.0
        %3765 = vmatpush2.msra.mxu0 0.0
        %3766 = vmatprep.mubr.f32.mxu0 0.0
        %3767 = vmatmul.mubr.f32.gmra.mxu0 %v3655
        %v3768 = vpop.f32.mrf.mxu0
        %v3769 = vadd.f32 %v3652, %v3768
        %v3770 = vpop.f32.mrf.mxu0
        %3771 = vmatprep.mubr.f32.mxu0 0.0
        %3772 = vmatmul.mubr.f32.gmra.mxu0 %v3658
        %v3773 = vpop.f32.mrf.mxu0
        %v3774 = vadd.f32 %v3652, %v3773
        %v3775 = vpop.f32.mrf.mxu0
        %3776 = vmatprep.mubr.f32.mxu0 0.0
        %3777 = vmatmul.mubr.f32.gmra.mxu0 %v3661
        %v3778 = vpop.f32.mrf.mxu0
        %v3779 = vadd.f32 %v3652, %v3778
        %v3780 = vpop.f32.mrf.mxu0
        %3781 = vmatprep.mubr.f32.mxu0 0.0
        %3782 = vmatmul.mubr.f32.gmra.mxu0 %v3664
        %v3783 = vpop.f32.mrf.mxu0
        %v3784 = vadd.f32 %v3652, %v3783
        %v3785 = vpop.f32.mrf.mxu0
        %3786 = vmatprep.mubr.f32.mxu0 0.0
        %3787 = vmatmul.mubr.f32.gmra.mxu0 %v3667
        %v3788 = vpop.f32.mrf.mxu0
        %v3789 = vadd.f32 %v3652, %v3788
        %v3790 = vpop.f32.mrf.mxu0
        %3791 = vmatprep.mubr.f32.mxu0 0.0
        %3792 = vmatmul.mubr.f32.gmra.mxu0 %v3670
        %v3793 = vpop.f32.mrf.mxu0
        %v3794 = vadd.f32 %v3652, %v3793
        %v3795 = vpop.f32.mrf.mxu0
        %3796 = vmatprep.mubr.f32.mxu0 0.0
        %3797 = vmatmul.mubr.f32.gmra.mxu0 %v3673
        %v3798 = vpop.f32.mrf.mxu0
        %v3799 = vadd.f32 %v3652, %v3798
        %v3800 = vpop.f32.mrf.mxu0
        %3801 = vmatprep.mubr.f32.mxu0 0.0
        %3802 = vmatmul.mubr.f32.gmra.mxu0 %v3676
        %v3803 = vpop.f32.mrf.mxu0
        %v3804 = vadd.f32 %v3652, %v3803
        %v3805 = vpop.f32.mrf.mxu0
        %3806 = vmatprep.mubr.f32.mxu0 0.0
        %3807 = vmatmul.mubr.f32.gmra.mxu0 %v3679
        %v3808 = vpop.f32.mrf.mxu0
        %v3809 = vadd.f32 %v3652, %v3808
        %v3810 = vpop.f32.mrf.mxu0
        %3811 = vmatprep.mubr.f32.mxu0 0.0
        %3812 = vmatmul.mubr.f32.gmra.mxu0 %v3682
        %v3813 = vpop.f32.mrf.mxu0
        %v3814 = vadd.f32 %v3652, %v3813
        %v3815 = vpop.f32.mrf.mxu0
        %3816 = vmatprep.mubr.f32.mxu0 0.0
        %3817 = vmatmul.mubr.f32.gmra.mxu0 %v3685
        %v3818 = vpop.f32.mrf.mxu0
        %v3819 = vadd.f32 %v3652, %v3818
        %v3820 = vpop.f32.mrf.mxu0
        %3821 = vmatprep.mubr.f32.mxu0 0.0
        %3822 = vmatmul.mubr.f32.gmra.mxu0 %v3688
        %v3823 = vpop.f32.mrf.mxu0
        %v3824 = vadd.f32 %v3652, %v3823
        %v3825 = vpop.f32.mrf.mxu0
        %3826 = vmatprep.mubr.f32.mxu0 0.0
        %3827 = vmatmul.mubr.f32.gmra.mxu0 %v3691
        %v3828 = vpop.f32.mrf.mxu0
        %v3829 = vadd.f32 %v3652, %v3828
        %v3830 = vpop.f32.mrf.mxu0
        %3831 = vmatprep.mubr.f32.mxu0 0.0
        %3832 = vmatmul.mubr.f32.gmra.mxu0 %v3694
        %v3833 = vpop.f32.mrf.mxu0
        %v3834 = vadd.f32 %v3652, %v3833
        %v3835 = vpop.f32.mrf.mxu0
        %3836 = vmatprep.mubr.f32.mxu0 0.0
        %3837 = vmatmul.mubr.f32.gmra.mxu0 %v3697
        %v3838 = vpop.f32.mrf.mxu0
        %v3839 = vadd.f32 %v3652, %v3838
        %v3840 = vpop.f32.mrf.mxu0
        %3841 = vmatprep.mubr.f32.mxu0 0.0
        %3842 = vmatmul.mubr.f32.gmra.mxu0 %v3700
        %v3843 = vpop.f32.mrf.mxu0
        %v3844 = vadd.f32 %v3652, %v3843
        %v3845 = vpop.f32.mrf.mxu0
        %3846 = vdwg.mxu0
        %v3847 = vmax.f32 %v3769, 0.0
        %v3848 = vmax.f32 %v3774, 0.0
        %v3849 = vmax.f32 %v3779, 0.0
        %v3850 = vmax.f32 %v3784, 0.0
        %v3851 = vmax.f32 %v3789, 0.0
        %v3852 = vmax.f32 %v3794, 0.0
        %v3853 = vmax.f32 %v3799, 0.0
        %v3854 = vmax.f32 %v3804, 0.0
        %v3855 = vmax.f32 %v3809, 0.0
        %v3856 = vmax.f32 %v3814, 0.0
        %v3857 = vmax.f32 %v3819, 0.0
        %v3858 = vmax.f32 %v3824, 0.0
        %v3859 = vmax.f32 %v3829, 0.0
        %v3860 = vmax.f32 %v3834, 0.0
        %v3861 = vmax.f32 %v3839, 0.0
        %v3862 = vmax.f32 %v3844, 0.0
        %3863 = vst [vmem:[%s326] sm:$0xff] %v3847
        %3864 = vst [vmem:[%s326 + $0x8] sm:$0xff] %v3848
        %3865 = vst [vmem:[%s326 + $0x10] sm:$0xff] %v3849
        %3866 = vst [vmem:[%s326 + $0x18] sm:$0xff] %v3850
        %3867 = vst [vmem:[%s326 + $0x20] sm:$0xff] %v3851
        %3868 = vst [vmem:[%s326 + $0x28] sm:$0xff] %v3852
        %3869 = vst [vmem:[%s326 + $0x30] sm:$0xff] %v3853
        %3870 = vst [vmem:[%s326 + $0x38] sm:$0xff] %v3854
        %3871 = vst [vmem:[%s326 + $0x40] sm:$0xff] %v3855
        %3872 = vst [vmem:[%s326 + $0x48] sm:$0xff] %v3856
        %3873 = vst [vmem:[%s326 + $0x50] sm:$0xff] %v3857
        %3874 = vst [vmem:[%s326 + $0x58] sm:$0xff] %v3858
        %3875 = vst [vmem:[%s326 + $0x60] sm:$0xff] %v3859
        %3876 = vst [vmem:[%s326 + $0x68] sm:$0xff] %v3860
        %3877 = vst [vmem:[%s326 + $0x70] sm:$0xff] %v3861
        %3878 = vst [vmem:[%s326 + $0x78] sm:$0xff] %v3862
        %s3879 = sand.u32 %s225, 1
        %s3880 = scalar_lea.sflag [#allocation3], %s3879
        %s3881 = sand.u32 %s225, 1
        %s3882 = smul.addr %s3881, 128
        %s3883 = scalar_lea.vmem [#allocation2], %s3882
        // Predicated region
        $region57: #{tpu_custom_call.1} parent=55 // pred_check
          %p3884 = pneg %p235
        $region58: #{tpu_custom_call.1} parent=55 // pred_check_branch
          %3886 = sbr.rel (%p3884) target = $region60
        $region59: #{tpu_custom_call.1} parent=55 // pred_region
          %s3887 = smul.u32 16, %s23
          %s3889 = ssub.s32 2048, 2048
          %3890 = vsyncadd %s3880, %s3889
          %s3891 = smul.addr %s3887, 128
          %s3892 = scalar_lea.hbm %s9, %s3891
          %s3893 = sshll.u32 %s3883, 4
          %s3894 = int_to_ptr.vmem [resolvable:$true] %s3893
          %3899 = dma.vmem_to_hbm [thread:$0]  %s3894, 2048, %s3892, %s3880, 128, 128, 8
        $region60: #{tpu_custom_call.1} parent=55 // pred_fallthru
          _
      $region56: #{tpu_custom_call.1} parent=5 // pred_fallthru
        _
      %p3900 = scmp.le.s32.totalorder 2, %s18
      // Predicated region
      $region61: #{tpu_custom_call.1} parent=5 // pred_check
        %p3901 = pneg %p3900
      $region62: #{tpu_custom_call.1} parent=5 // pred_check_branch
        %3903 = sbr.rel (%p3901) target = $region64
      $region63: #{tpu_custom_call.1} parent=5 // pred_region
        %s3904 = ssub.s32 %s18, 2
        // Predicated region
        $region65: #{tpu_custom_call.1} parent=63 // pred_check
          %p3905 = pneg %p241
        $region66: #{tpu_custom_call.1} parent=63 // pred_check_branch
          %3907 = sbr.rel (%p3905) target = $region68
        $region67: #{tpu_custom_call.1} parent=63 // pred_region
          %s3908 = sand.u32 %s226, 1
          %s3909 = scalar_lea.sflag [#allocation3], %s3908
          %s3910 = sand.u32 %s226, 1
          %s3911 = smul.addr %s3910, 128
          %s3912 = scalar_lea.vmem [#allocation2], %s3911
          %3913 = dma.done %s3909, 2048
        $region68: #{tpu_custom_call.1} parent=63 // pred_fallthru
          _
      $region64: #{tpu_custom_call.1} parent=5 // pred_fallthru
        _
    $region6: #{tpu_custom_call.1} parent=1 // loop_footer
      %s22 = sadd.s32 1, %s18
    $region7: #{tpu_custom_call.1} parent=1 // loop_footer_branch
      %17 = sbr.rel target = $region3
    $region8: #{tpu_custom_call.1} parent=1 // loop_exit
      _
    %3914 = vsyncpa [#allocation3], 1
    %s3915 = scalar_lea.sflag [#allocation3], 1
    %3916 = vsyncpa %s3915, 1

</llo_original>
